<compile_context>
chip_gen: v6e
topology: v6e:2x2x1
jax: 0.10.0
libtpu: 0.0.40
codegen_flags: <defaults>
</compile_context>

<pallas_src>
import jax
import jax.numpy as jnp
from jax.experimental import pallas as pl
from jax.experimental.pallas import tpu as pltpu


def _cdiv(a, b):
    return -(-a // b)


def _round_up(a, b):
    return _cdiv(a, b) * b


def _pick_tile(L, halo, cin_p, cout_p, k3, vmem_cap=40 * 2 ** 20):
    """Largest lane-dense output tile that fits the VMEM budget while leaving
    >= 4 total grid steps (v7x megacore + pipeline overlap).  Never shrinks
    below 512 just to manufacture extra steps."""
    for tm in (2048, 1024, 512):
        n_blocks = 1 + _cdiv(halo, tm)           # current tile + halo tiles
        n_steps = _cdiv(L, tm)
        need = (2 * n_blocks * cin_p * tm * 2    # double-buffered x tiles (bf16)
                + 2 * cout_p * tm * 4            # double-buffered out tiles (f32)
                + 2 * k3 * cout_p * cin_p * 2)   # resident weights (bf16, 2 bufs)
        if need <= vmem_cap and n_steps >= 4:
            return tm
    return 512


def _make_kernel(n_blocks, tap_offsets, cin_p, cout_p, tm):
    def kernel(*refs):
        x_refs = refs[:n_blocks]                 # each (cin_p, tm) bf16
        w_ref = refs[n_blocks]                   # (k^3, cout_p, cin_p) bf16
        o_ref = refs[n_blocks + 1]               # (cout_p, tm) f32

        if n_blocks > 1:                         # current tile + halo tile(s)
            xc = jnp.concatenate([r[...] for r in x_refs], axis=-1)
        else:
            xc = x_refs[0][...]
        w_all = w_ref[...]

        acc = jnp.zeros((cout_p, tm), jnp.float32)
        # Each dilated tap is a constant lane shift of the flat padded input;
        # one small (cout_p, cin_p) x (cin_p, tm) MXU accumulation per tap.
        for t, off in enumerate(tap_offsets):
            xt = jax.lax.slice(xc, (0, off), (cin_p, off + tm))
            acc = acc + jnp.dot(w_all[t], xt,
                                preferred_element_type=jnp.float32)
        o_ref[...] = acc.astype(o_ref.dtype)
    return kernel


def cdilated3d(x, weight, *, stride=1, dilation=1):
    """x: (N, Cin, D, H, W) NCDHW; weight: (Cout, Cin, k, k, k).  Returns NCDHW.

    Same semantics as torch.nn.Conv3d(Cin, Cout, k, stride=stride,
    padding=(k-1)//2*dilation, dilation=dilation, bias=False), computed with
    bf16 inputs and f32 accumulation.
    """
    N, Cin, D, H, W = x.shape
    Cout, _, k, _, _ = weight.shape
    d, s = dilation, stride
    pad = (k - 1) // 2 * d
    Do = (D + 2 * pad - d * (k - 1) - 1) // s + 1
    Ho = (H + 2 * pad - d * (k - 1) - 1) // s + 1
    Wo = (W + 2 * pad - d * (k - 1) - 1) // s + 1
    Dp, Hp, Wp = D + 2 * pad, H + 2 * pad, W + 2 * pad
    k3 = k ** 3
    cin_p = max(8, _round_up(Cin, 8))            # full sublane rows
    cout_p = max(8, _round_up(Cout, 8))

    # ---- wrapper glue (one pass over the input, handled by XLA) -----------
    xp = jnp.pad(x, ((0, 0), (0, cin_p - Cin),
                     (pad, pad), (pad, pad), (pad, pad))).astype(jnp.bfloat16)
    # Channel-major, batch+spatial flattened onto one lane axis.
    xflat = jnp.transpose(xp, (1, 0, 2, 3, 4)).reshape(cin_p, N * Dp * Hp * Wp)

    # Tap (kd,kh,kw) of the stride-1 conv is a constant shift in flat space.
    tap_offsets = [(kd * d) * Hp * Wp + (kh * d) * Wp + (kw * d)
                   for kd in range(k) for kh in range(k) for kw in range(k)]
    halo = max(tap_offsets)

    # Weights: tap-major (k^3, Cout_p, Cin_p) bf16, padded channels are zero.
    w3 = jnp.transpose(weight, (2, 3, 4, 0, 1)).reshape(k3, Cout, Cin)
    w3 = jnp.pad(w3, ((0, 0), (0, cout_p - Cout), (0, cin_p - Cin)))
    w3 = w3.astype(jnp.bfloat16)

    L = N * Dp * Hp * Wp
    tm = _pick_tile(L, halo, cin_p, cout_p, k3)
    n_blocks = 1 + _cdiv(halo, tm)               # tiles needed to cover the halo
    n_steps = _cdiv(L, tm)
    L_pad = (n_steps + n_blocks - 1) * tm        # every halo block stays in bounds
    xflat = jnp.pad(xflat, ((0, 0), (0, L_pad - L)))

    # Exact VMEM accounting, capped well below v7x's 64 MiB per TensorCore.
    vmem_need = (2 * n_blocks * cin_p * tm * 2
                 + 2 * cout_p * tm * 4
                 + 2 * k3 * cout_p * cin_p * 2)
    vmem_limit = int(min(45 * 2 ** 20,
                         max(16 * 2 ** 20, (vmem_need * 5) // 4)))

    in_specs = [pl.BlockSpec((cin_p, tm), (lambda t, j=j: (0, t + j)))
                for j in range(n_blocks)]
    in_specs.append(pl.BlockSpec((k3, cout_p, cin_p), lambda t: (0, 0, 0)))

    kernel = _make_kernel(n_blocks, tap_offsets, cin_p, cout_p, tm)

    full = pl.pallas_call(
        kernel,
        out_shape=jax.ShapeDtypeStruct((cout_p, n_steps * tm), jnp.float32),
        grid=(n_steps,),
        in_specs=in_specs,
        out_specs=pl.BlockSpec((cout_p, tm), lambda t: (0, t)),
        compiler_params=pltpu.CompilerParams(
            dimension_semantics=("parallel",),
            vmem_limit_bytes=vmem_limit),
        cost_estimate=pl.CostEstimate(
            flops=2 * cout_p * cin_p * k3 * n_steps * tm,
            transcendentals=0,
            bytes_accessed=int(n_blocks * cin_p * L_pad * 2
                               + k3 * cout_p * cin_p * 2
                               + cout_p * n_steps * tm * 4)),
    )(*([xflat] * n_blocks), w3)

    # Drop padded channels/positions, restore NCDHW, apply the stride.
    out = full[:Cout, :L].reshape(Cout, N, Dp, Hp, Wp)
    out = jnp.transpose(out, (1, 0, 2, 3, 4))
    out = out[:, :,
              0:(Do - 1) * s + 1:s,
              0:(Ho - 1) * s + 1:s,
              0:(Wo - 1) * s + 1:s]
    return out


if __name__ == "__main__":
    # Module config: CDilated3d(nIn=4, nOut=8, kSize=3, d=2), small input.
    N, Cin, Cout, D, H, W = 2, 4, 8, 8, 8, 8
    kSize, dil, stride = 3, 2, 1
    pad = (kSize - 1) // 2 * dil

    key = jax.random.PRNGKey(0)
    kx, kw = jax.random.split(key)
    x = jax.random.normal(kx, (N, Cin, D, H, W), jnp.float32)
    fan_in = Cin * kSize ** 3
    weight = jax.random.normal(kw, (Cout, Cin, kSize, kSize, kSize),
                               jnp.float32) / jnp.sqrt(fan_in)

    out = cdilated3d(x, weight, stride=stride, dilation=dil)
    out = jax.block_until_ready(out)

    # Reference: XLA conv with the same bf16 inputs / f32 accumulation
    # (same semantics as torch.nn.Conv3d(..., bias=False, dilation=d)).
    ref = jax.lax.conv_general_dilated(
        x.astype(jnp.bfloat16), weight.astype(jnp.bfloat16),
        window_strides=(stride,) * 3, padding=[(pad, pad)] * 3,
        rhs_dilation=(dil,) * 3,
        dimension_numbers=("NCDHW", "OIDHW", "NCDHW"),
        preferred_element_type=jnp.float32)
    assert out.shape == ref.shape, (out.shape, ref.shape)
    assert jnp.allclose(out, ref, atol=1e-2, rtol=1e-2), (
        float(jnp.max(jnp.abs(out - ref))))

    print("KERNEL_OK")
</pallas_src>

<mosaic_0001>
module attributes {stable_mosaic.version = 11 : i64} {
  func.func @kernel(%arg0: i32, %arg1: memref<8x1024xbf16, #tpu.memory_space<vmem>>, %arg2: memref<8x1024xbf16, #tpu.memory_space<vmem>>, %arg3: memref<27x8x8xbf16, #tpu.memory_space<vmem>>, %arg4: memref<8x1024xf32, #tpu.memory_space<vmem>>) attributes {dimension_semantics = [#tpu.dimension_semantics<parallel>], iteration_bounds = array<i64: 4>, scalar_prefetch = 0 : i64, scratch_operands = 0 : i64, tpu.core_type = #tpu.core_type<tc>, window_params = [{transform_indices = @transform_0, window_bounds = array<i64: 8, 1024>}, {transform_indices = @transform_1, window_bounds = array<i64: 8, 1024>}, {pipeline_mode = #tpu.pipeline_mode<synchronous>, transform_indices = @transform_2, window_bounds = array<i64: 27, 8, 8>}, {transform_indices = @transform_3, window_bounds = array<i64: 8, 1024>}]} {
    %c0 = arith.constant 0 : index
    %c0_0 = arith.constant 0 : index
    %0 = vector.load %arg1[%c0, %c0_0] : memref<8x1024xbf16, #tpu.memory_space<vmem>>, vector<8x1024xbf16>
    %c0_1 = arith.constant 0 : index
    %c0_2 = arith.constant 0 : index
    %1 = vector.load %arg2[%c0_1, %c0_2] : memref<8x1024xbf16, #tpu.memory_space<vmem>>, vector<8x1024xbf16>
    %2 = tpu.concatenate %0, %1 in 1 : vector<8x1024xbf16>, vector<8x1024xbf16> -> vector<8x2048xbf16>
    %c0_3 = arith.constant 0 : index
    %c0_4 = arith.constant 0 : index
    %c0_5 = arith.constant 0 : index
    %3 = vector.load %arg3[%c0_3, %c0_4, %c0_5] : memref<27x8x8xbf16, #tpu.memory_space<vmem>>, vector<27x8x8xbf16>
    %cst = arith.constant 0.000000e+00 : f32
    %4 = vector.broadcast %cst : f32 to vector<8x1024xf32>
    %5 = vector.extract_strided_slice %2 {offsets = [0, 0], sizes = [8, 1024], strides = [1, 1]} : vector<8x2048xbf16> to vector<8x1024xbf16>
    %6 = vector.extract_strided_slice %3 {offsets = [0, 0, 0], sizes = [1, 8, 8], strides = [1, 1, 1]} : vector<27x8x8xbf16> to vector<1x8x8xbf16>
    %7 = vector.shape_cast %6 : vector<1x8x8xbf16> to vector<8x8xbf16>
    %cst_6 = arith.constant dense<0.000000e+00> : vector<8x1024xf32>
    %8 = tpu.matmul %7, %5, %cst_6 {dimension_numbers = #tpu.dot_dimension_numbers<[1], [0], [0], [1], [0, 0, 1, 1], [], []>} : vector<8x8xbf16>, vector<8x1024xbf16>, vector<8x1024xf32> -> vector<8x1024xf32>
    %9 = arith.addf %4, %8 : vector<8x1024xf32>
    %10 = vector.extract_strided_slice %2 {offsets = [0, 2], sizes = [8, 1024], strides = [1, 1]} : vector<8x2048xbf16> to vector<8x1024xbf16>
    %11 = vector.extract_strided_slice %3 {offsets = [1, 0, 0], sizes = [1, 8, 8], strides = [1, 1, 1]} : vector<27x8x8xbf16> to vector<1x8x8xbf16>
    %12 = vector.shape_cast %11 : vector<1x8x8xbf16> to vector<8x8xbf16>
    %cst_7 = arith.constant dense<0.000000e+00> : vector<8x1024xf32>
    %13 = tpu.matmul %12, %10, %cst_7 {dimension_numbers = #tpu.dot_dimension_numbers<[1], [0], [0], [1], [0, 0, 1, 1], [], []>} : vector<8x8xbf16>, vector<8x1024xbf16>, vector<8x1024xf32> -> vector<8x1024xf32>
    %14 = arith.addf %9, %13 : vector<8x1024xf32>
    %15 = vector.extract_strided_slice %2 {offsets = [0, 4], sizes = [8, 1024], strides = [1, 1]} : vector<8x2048xbf16> to vector<8x1024xbf16>
    %16 = vector.extract_strided_slice %3 {offsets = [2, 0, 0], sizes = [1, 8, 8], strides = [1, 1, 1]} : vector<27x8x8xbf16> to vector<1x8x8xbf16>
    %17 = vector.shape_cast %16 : vector<1x8x8xbf16> to vector<8x8xbf16>
    %cst_8 = arith.constant dense<0.000000e+00> : vector<8x1024xf32>
    %18 = tpu.matmul %17, %15, %cst_8 {dimension_numbers = #tpu.dot_dimension_numbers<[1], [0], [0], [1], [0, 0, 1, 1], [], []>} : vector<8x8xbf16>, vector<8x1024xbf16>, vector<8x1024xf32> -> vector<8x1024xf32>
    %19 = arith.addf %14, %18 : vector<8x1024xf32>
    %20 = vector.extract_strided_slice %2 {offsets = [0, 24], sizes = [8, 1024], strides = [1, 1]} : vector<8x2048xbf16> to vector<8x1024xbf16>
    %21 = vector.extract_strided_slice %3 {offsets = [3, 0, 0], sizes = [1, 8, 8], strides = [1, 1, 1]} : vector<27x8x8xbf16> to vector<1x8x8xbf16>
    %22 = vector.shape_cast %21 : vector<1x8x8xbf16> to vector<8x8xbf16>
    %cst_9 = arith.constant dense<0.000000e+00> : vector<8x1024xf32>
    %23 = tpu.matmul %22, %20, %cst_9 {dimension_numbers = #tpu.dot_dimension_numbers<[1], [0], [0], [1], [0, 0, 1, 1], [], []>} : vector<8x8xbf16>, vector<8x1024xbf16>, vector<8x1024xf32> -> vector<8x1024xf32>
    %24 = arith.addf %19, %23 : vector<8x1024xf32>
    %25 = vector.extract_strided_slice %2 {offsets = [0, 26], sizes = [8, 1024], strides = [1, 1]} : vector<8x2048xbf16> to vector<8x1024xbf16>
    %26 = vector.extract_strided_slice %3 {offsets = [4, 0, 0], sizes = [1, 8, 8], strides = [1, 1, 1]} : vector<27x8x8xbf16> to vector<1x8x8xbf16>
    %27 = vector.shape_cast %26 : vector<1x8x8xbf16> to vector<8x8xbf16>
    %cst_10 = arith.constant dense<0.000000e+00> : vector<8x1024xf32>
    %28 = tpu.matmul %27, %25, %cst_10 {dimension_numbers = #tpu.dot_dimension_numbers<[1], [0], [0], [1], [0, 0, 1, 1], [], []>} : vector<8x8xbf16>, vector<8x1024xbf16>, vector<8x1024xf32> -> vector<8x1024xf32>
    %29 = arith.addf %24, %28 : vector<8x1024xf32>
    %30 = vector.extract_strided_slice %2 {offsets = [0, 28], sizes = [8, 1024], strides = [1, 1]} : vector<8x2048xbf16> to vector<8x1024xbf16>
    %31 = vector.extract_strided_slice %3 {offsets = [5, 0, 0], sizes = [1, 8, 8], strides = [1, 1, 1]} : vector<27x8x8xbf16> to vector<1x8x8xbf16>
    %32 = vector.shape_cast %31 : vector<1x8x8xbf16> to vector<8x8xbf16>
    %cst_11 = arith.constant dense<0.000000e+00> : vector<8x1024xf32>
    %33 = tpu.matmul %32, %30, %cst_11 {dimension_numbers = #tpu.dot_dimension_numbers<[1], [0], [0], [1], [0, 0, 1, 1], [], []>} : vector<8x8xbf16>, vector<8x1024xbf16>, vector<8x1024xf32> -> vector<8x1024xf32>
    %34 = arith.addf %29, %33 : vector<8x1024xf32>
    %35 = vector.extract_strided_slice %2 {offsets = [0, 48], sizes = [8, 1024], strides = [1, 1]} : vector<8x2048xbf16> to vector<8x1024xbf16>
    %36 = vector.extract_strided_slice %3 {offsets = [6, 0, 0], sizes = [1, 8, 8], strides = [1, 1, 1]} : vector<27x8x8xbf16> to vector<1x8x8xbf16>
    %37 = vector.shape_cast %36 : vector<1x8x8xbf16> to vector<8x8xbf16>
    %cst_12 = arith.constant dense<0.000000e+00> : vector<8x1024xf32>
    %38 = tpu.matmul %37, %35, %cst_12 {dimension_numbers = #tpu.dot_dimension_numbers<[1], [0], [0], [1], [0, 0, 1, 1], [], []>} : vector<8x8xbf16>, vector<8x1024xbf16>, vector<8x1024xf32> -> vector<8x1024xf32>
    %39 = arith.addf %34, %38 : vector<8x1024xf32>
    %40 = vector.extract_strided_slice %2 {offsets = [0, 50], sizes = [8, 1024], strides = [1, 1]} : vector<8x2048xbf16> to vector<8x1024xbf16>
    %41 = vector.extract_strided_slice %3 {offsets = [7, 0, 0], sizes = [1, 8, 8], strides = [1, 1, 1]} : vector<27x8x8xbf16> to vector<1x8x8xbf16>
    %42 = vector.shape_cast %41 : vector<1x8x8xbf16> to vector<8x8xbf16>
    %cst_13 = arith.constant dense<0.000000e+00> : vector<8x1024xf32>
    %43 = tpu.matmul %42, %40, %cst_13 {dimension_numbers = #tpu.dot_dimension_numbers<[1], [0], [0], [1], [0, 0, 1, 1], [], []>} : vector<8x8xbf16>, vector<8x1024xbf16>, vector<8x1024xf32> -> vector<8x1024xf32>
    %44 = arith.addf %39, %43 : vector<8x1024xf32>
    %45 = vector.extract_strided_slice %2 {offsets = [0, 52], sizes = [8, 1024], strides = [1, 1]} : vector<8x2048xbf16> to vector<8x1024xbf16>
    %46 = vector.extract_strided_slice %3 {offsets = [8, 0, 0], sizes = [1, 8, 8], strides = [1, 1, 1]} : vector<27x8x8xbf16> to vector<1x8x8xbf16>
    %47 = vector.shape_cast %46 : vector<1x8x8xbf16> to vector<8x8xbf16>
    %cst_14 = arith.constant dense<0.000000e+00> : vector<8x1024xf32>
    %48 = tpu.matmul %47, %45, %cst_14 {dimension_numbers = #tpu.dot_dimension_numbers<[1], [0], [0], [1], [0, 0, 1, 1], [], []>} : vector<8x8xbf16>, vector<8x1024xbf16>, vector<8x1024xf32> -> vector<8x1024xf32>
    %49 = arith.addf %44, %48 : vector<8x1024xf32>
    %50 = vector.extract_strided_slice %2 {offsets = [0, 288], sizes = [8, 1024], strides = [1, 1]} : vector<8x2048xbf16> to vector<8x1024xbf16>
    %51 = vector.extract_strided_slice %3 {offsets = [9, 0, 0], sizes = [1, 8, 8], strides = [1, 1, 1]} : vector<27x8x8xbf16> to vector<1x8x8xbf16>
    %52 = vector.shape_cast %51 : vector<1x8x8xbf16> to vector<8x8xbf16>
    %cst_15 = arith.constant dense<0.000000e+00> : vector<8x1024xf32>
    %53 = tpu.matmul %52, %50, %cst_15 {dimension_numbers = #tpu.dot_dimension_numbers<[1], [0], [0], [1], [0, 0, 1, 1], [], []>} : vector<8x8xbf16>, vector<8x1024xbf16>, vector<8x1024xf32> -> vector<8x1024xf32>
    %54 = arith.addf %49, %53 : vector<8x1024xf32>
    %55 = vector.extract_strided_slice %2 {offsets = [0, 290], sizes = [8, 1024], strides = [1, 1]} : vector<8x2048xbf16> to vector<8x1024xbf16>
    %56 = vector.extract_strided_slice %3 {offsets = [10, 0, 0], sizes = [1, 8, 8], strides = [1, 1, 1]} : vector<27x8x8xbf16> to vector<1x8x8xbf16>
    %57 = vector.shape_cast %56 : vector<1x8x8xbf16> to vector<8x8xbf16>
    %cst_16 = arith.constant dense<0.000000e+00> : vector<8x1024xf32>
    %58 = tpu.matmul %57, %55, %cst_16 {dimension_numbers = #tpu.dot_dimension_numbers<[1], [0], [0], [1], [0, 0, 1, 1], [], []>} : vector<8x8xbf16>, vector<8x1024xbf16>, vector<8x1024xf32> -> vector<8x1024xf32>
    %59 = arith.addf %54, %58 : vector<8x1024xf32>
    %60 = vector.extract_strided_slice %2 {offsets = [0, 292], sizes = [8, 1024], strides = [1, 1]} : vector<8x2048xbf16> to vector<8x1024xbf16>
    %61 = vector.extract_strided_slice %3 {offsets = [11, 0, 0], sizes = [1, 8, 8], strides = [1, 1, 1]} : vector<27x8x8xbf16> to vector<1x8x8xbf16>
    %62 = vector.shape_cast %61 : vector<1x8x8xbf16> to vector<8x8xbf16>
    %cst_17 = arith.constant dense<0.000000e+00> : vector<8x1024xf32>
    %63 = tpu.matmul %62, %60, %cst_17 {dimension_numbers = #tpu.dot_dimension_numbers<[1], [0], [0], [1], [0, 0, 1, 1], [], []>} : vector<8x8xbf16>, vector<8x1024xbf16>, vector<8x1024xf32> -> vector<8x1024xf32>
    %64 = arith.addf %59, %63 : vector<8x1024xf32>
    %65 = vector.extract_strided_slice %2 {offsets = [0, 312], sizes = [8, 1024], strides = [1, 1]} : vector<8x2048xbf16> to vector<8x1024xbf16>
    %66 = vector.extract_strided_slice %3 {offsets = [12, 0, 0], sizes = [1, 8, 8], strides = [1, 1, 1]} : vector<27x8x8xbf16> to vector<1x8x8xbf16>
    %67 = vector.shape_cast %66 : vector<1x8x8xbf16> to vector<8x8xbf16>
    %cst_18 = arith.constant dense<0.000000e+00> : vector<8x1024xf32>
    %68 = tpu.matmul %67, %65, %cst_18 {dimension_numbers = #tpu.dot_dimension_numbers<[1], [0], [0], [1], [0, 0, 1, 1], [], []>} : vector<8x8xbf16>, vector<8x1024xbf16>, vector<8x1024xf32> -> vector<8x1024xf32>
    %69 = arith.addf %64, %68 : vector<8x1024xf32>
    %70 = vector.extract_strided_slice %2 {offsets = [0, 314], sizes = [8, 1024], strides = [1, 1]} : vector<8x2048xbf16> to vector<8x1024xbf16>
    %71 = vector.extract_strided_slice %3 {offsets = [13, 0, 0], sizes = [1, 8, 8], strides = [1, 1, 1]} : vector<27x8x8xbf16> to vector<1x8x8xbf16>
    %72 = vector.shape_cast %71 : vector<1x8x8xbf16> to vector<8x8xbf16>
    %cst_19 = arith.constant dense<0.000000e+00> : vector<8x1024xf32>
    %73 = tpu.matmul %72, %70, %cst_19 {dimension_numbers = #tpu.dot_dimension_numbers<[1], [0], [0], [1], [0, 0, 1, 1], [], []>} : vector<8x8xbf16>, vector<8x1024xbf16>, vector<8x1024xf32> -> vector<8x1024xf32>
    %74 = arith.addf %69, %73 : vector<8x1024xf32>
    %75 = vector.extract_strided_slice %2 {offsets = [0, 316], sizes = [8, 1024], strides = [1, 1]} : vector<8x2048xbf16> to vector<8x1024xbf16>
    %76 = vector.extract_strided_slice %3 {offsets = [14, 0, 0], sizes = [1, 8, 8], strides = [1, 1, 1]} : vector<27x8x8xbf16> to vector<1x8x8xbf16>
    %77 = vector.shape_cast %76 : vector<1x8x8xbf16> to vector<8x8xbf16>
    %cst_20 = arith.constant dense<0.000000e+00> : vector<8x1024xf32>
    %78 = tpu.matmul %77, %75, %cst_20 {dimension_numbers = #tpu.dot_dimension_numbers<[1], [0], [0], [1], [0, 0, 1, 1], [], []>} : vector<8x8xbf16>, vector<8x1024xbf16>, vector<8x1024xf32> -> vector<8x1024xf32>
    %79 = arith.addf %74, %78 : vector<8x1024xf32>
    %80 = vector.extract_strided_slice %2 {offsets = [0, 336], sizes = [8, 1024], strides = [1, 1]} : vector<8x2048xbf16> to vector<8x1024xbf16>
    %81 = vector.extract_strided_slice %3 {offsets = [15, 0, 0], sizes = [1, 8, 8], strides = [1, 1, 1]} : vector<27x8x8xbf16> to vector<1x8x8xbf16>
    %82 = vector.shape_cast %81 : vector<1x8x8xbf16> to vector<8x8xbf16>
    %cst_21 = arith.constant dense<0.000000e+00> : vector<8x1024xf32>
    %83 = tpu.matmul %82, %80, %cst_21 {dimension_numbers = #tpu.dot_dimension_numbers<[1], [0], [0], [1], [0, 0, 1, 1], [], []>} : vector<8x8xbf16>, vector<8x1024xbf16>, vector<8x1024xf32> -> vector<8x1024xf32>
    %84 = arith.addf %79, %83 : vector<8x1024xf32>
    %85 = vector.extract_strided_slice %2 {offsets = [0, 338], sizes = [8, 1024], strides = [1, 1]} : vector<8x2048xbf16> to vector<8x1024xbf16>
    %86 = vector.extract_strided_slice %3 {offsets = [16, 0, 0], sizes = [1, 8, 8], strides = [1, 1, 1]} : vector<27x8x8xbf16> to vector<1x8x8xbf16>
    %87 = vector.shape_cast %86 : vector<1x8x8xbf16> to vector<8x8xbf16>
    %cst_22 = arith.constant dense<0.000000e+00> : vector<8x1024xf32>
    %88 = tpu.matmul %87, %85, %cst_22 {dimension_numbers = #tpu.dot_dimension_numbers<[1], [0], [0], [1], [0, 0, 1, 1], [], []>} : vector<8x8xbf16>, vector<8x1024xbf16>, vector<8x1024xf32> -> vector<8x1024xf32>
    %89 = arith.addf %84, %88 : vector<8x1024xf32>
    %90 = vector.extract_strided_slice %2 {offsets = [0, 340], sizes = [8, 1024], strides = [1, 1]} : vector<8x2048xbf16> to vector<8x1024xbf16>
    %91 = vector.extract_strided_slice %3 {offsets = [17, 0, 0], sizes = [1, 8, 8], strides = [1, 1, 1]} : vector<27x8x8xbf16> to vector<1x8x8xbf16>
    %92 = vector.shape_cast %91 : vector<1x8x8xbf16> to vector<8x8xbf16>
    %cst_23 = arith.constant dense<0.000000e+00> : vector<8x1024xf32>
    %93 = tpu.matmul %92, %90, %cst_23 {dimension_numbers = #tpu.dot_dimension_numbers<[1], [0], [0], [1], [0, 0, 1, 1], [], []>} : vector<8x8xbf16>, vector<8x1024xbf16>, vector<8x1024xf32> -> vector<8x1024xf32>
    %94 = arith.addf %89, %93 : vector<8x1024xf32>
    %95 = vector.extract_strided_slice %2 {offsets = [0, 576], sizes = [8, 1024], strides = [1, 1]} : vector<8x2048xbf16> to vector<8x1024xbf16>
    %96 = vector.extract_strided_slice %3 {offsets = [18, 0, 0], sizes = [1, 8, 8], strides = [1, 1, 1]} : vector<27x8x8xbf16> to vector<1x8x8xbf16>
    %97 = vector.shape_cast %96 : vector<1x8x8xbf16> to vector<8x8xbf16>
    %cst_24 = arith.constant dense<0.000000e+00> : vector<8x1024xf32>
    %98 = tpu.matmul %97, %95, %cst_24 {dimension_numbers = #tpu.dot_dimension_numbers<[1], [0], [0], [1], [0, 0, 1, 1], [], []>} : vector<8x8xbf16>, vector<8x1024xbf16>, vector<8x1024xf32> -> vector<8x1024xf32>
    %99 = arith.addf %94, %98 : vector<8x1024xf32>
    %100 = vector.extract_strided_slice %2 {offsets = [0, 578], sizes = [8, 1024], strides = [1, 1]} : vector<8x2048xbf16> to vector<8x1024xbf16>
    %101 = vector.extract_strided_slice %3 {offsets = [19, 0, 0], sizes = [1, 8, 8], strides = [1, 1, 1]} : vector<27x8x8xbf16> to vector<1x8x8xbf16>
    %102 = vector.shape_cast %101 : vector<1x8x8xbf16> to vector<8x8xbf16>
    %cst_25 = arith.constant dense<0.000000e+00> : vector<8x1024xf32>
    %103 = tpu.matmul %102, %100, %cst_25 {dimension_numbers = #tpu.dot_dimension_numbers<[1], [0], [0], [1], [0, 0, 1, 1], [], []>} : vector<8x8xbf16>, vector<8x1024xbf16>, vector<8x1024xf32> -> vector<8x1024xf32>
    %104 = arith.addf %99, %103 : vector<8x1024xf32>
    %105 = vector.extract_strided_slice %2 {offsets = [0, 580], sizes = [8, 1024], strides = [1, 1]} : vector<8x2048xbf16> to vector<8x1024xbf16>
    %106 = vector.extract_strided_slice %3 {offsets = [20, 0, 0], sizes = [1, 8, 8], strides = [1, 1, 1]} : vector<27x8x8xbf16> to vector<1x8x8xbf16>
    %107 = vector.shape_cast %106 : vector<1x8x8xbf16> to vector<8x8xbf16>
    %cst_26 = arith.constant dense<0.000000e+00> : vector<8x1024xf32>
    %108 = tpu.matmul %107, %105, %cst_26 {dimension_numbers = #tpu.dot_dimension_numbers<[1], [0], [0], [1], [0, 0, 1, 1], [], []>} : vector<8x8xbf16>, vector<8x1024xbf16>, vector<8x1024xf32> -> vector<8x1024xf32>
    %109 = arith.addf %104, %108 : vector<8x1024xf32>
    %110 = vector.extract_strided_slice %2 {offsets = [0, 600], sizes = [8, 1024], strides = [1, 1]} : vector<8x2048xbf16> to vector<8x1024xbf16>
    %111 = vector.extract_strided_slice %3 {offsets = [21, 0, 0], sizes = [1, 8, 8], strides = [1, 1, 1]} : vector<27x8x8xbf16> to vector<1x8x8xbf16>
    %112 = vector.shape_cast %111 : vector<1x8x8xbf16> to vector<8x8xbf16>
    %cst_27 = arith.constant dense<0.000000e+00> : vector<8x1024xf32>
    %113 = tpu.matmul %112, %110, %cst_27 {dimension_numbers = #tpu.dot_dimension_numbers<[1], [0], [0], [1], [0, 0, 1, 1], [], []>} : vector<8x8xbf16>, vector<8x1024xbf16>, vector<8x1024xf32> -> vector<8x1024xf32>
    %114 = arith.addf %109, %113 : vector<8x1024xf32>
    %115 = vector.extract_strided_slice %2 {offsets = [0, 602], sizes = [8, 1024], strides = [1, 1]} : vector<8x2048xbf16> to vector<8x1024xbf16>
    %116 = vector.extract_strided_slice %3 {offsets = [22, 0, 0], sizes = [1, 8, 8], strides = [1, 1, 1]} : vector<27x8x8xbf16> to vector<1x8x8xbf16>
    %117 = vector.shape_cast %116 : vector<1x8x8xbf16> to vector<8x8xbf16>
    %cst_28 = arith.constant dense<0.000000e+00> : vector<8x1024xf32>
    %118 = tpu.matmul %117, %115, %cst_28 {dimension_numbers = #tpu.dot_dimension_numbers<[1], [0], [0], [1], [0, 0, 1, 1], [], []>} : vector<8x8xbf16>, vector<8x1024xbf16>, vector<8x1024xf32> -> vector<8x1024xf32>
    %119 = arith.addf %114, %118 : vector<8x1024xf32>
    %120 = vector.extract_strided_slice %2 {offsets = [0, 604], sizes = [8, 1024], strides = [1, 1]} : vector<8x2048xbf16> to vector<8x1024xbf16>
    %121 = vector.extract_strided_slice %3 {offsets = [23, 0, 0], sizes = [1, 8, 8], strides = [1, 1, 1]} : vector<27x8x8xbf16> to vector<1x8x8xbf16>
    %122 = vector.shape_cast %121 : vector<1x8x8xbf16> to vector<8x8xbf16>
    %cst_29 = arith.constant dense<0.000000e+00> : vector<8x1024xf32>
    %123 = tpu.matmul %122, %120, %cst_29 {dimension_numbers = #tpu.dot_dimension_numbers<[1], [0], [0], [1], [0, 0, 1, 1], [], []>} : vector<8x8xbf16>, vector<8x1024xbf16>, vector<8x1024xf32> -> vector<8x1024xf32>
    %124 = arith.addf %119, %123 : vector<8x1024xf32>
    %125 = vector.extract_strided_slice %2 {offsets = [0, 624], sizes = [8, 1024], strides = [1, 1]} : vector<8x2048xbf16> to vector<8x1024xbf16>
    %126 = vector.extract_strided_slice %3 {offsets = [24, 0, 0], sizes = [1, 8, 8], strides = [1, 1, 1]} : vector<27x8x8xbf16> to vector<1x8x8xbf16>
    %127 = vector.shape_cast %126 : vector<1x8x8xbf16> to vector<8x8xbf16>
    %cst_30 = arith.constant dense<0.000000e+00> : vector<8x1024xf32>
    %128 = tpu.matmul %127, %125, %cst_30 {dimension_numbers = #tpu.dot_dimension_numbers<[1], [0], [0], [1], [0, 0, 1, 1], [], []>} : vector<8x8xbf16>, vector<8x1024xbf16>, vector<8x1024xf32> -> vector<8x1024xf32>
    %129 = arith.addf %124, %128 : vector<8x1024xf32>
    %130 = vector.extract_strided_slice %2 {offsets = [0, 626], sizes = [8, 1024], strides = [1, 1]} : vector<8x2048xbf16> to vector<8x1024xbf16>
    %131 = vector.extract_strided_slice %3 {offsets = [25, 0, 0], sizes = [1, 8, 8], strides = [1, 1, 1]} : vector<27x8x8xbf16> to vector<1x8x8xbf16>
    %132 = vector.shape_cast %131 : vector<1x8x8xbf16> to vector<8x8xbf16>
    %cst_31 = arith.constant dense<0.000000e+00> : vector<8x1024xf32>
    %133 = tpu.matmul %132, %130, %cst_31 {dimension_numbers = #tpu.dot_dimension_numbers<[1], [0], [0], [1], [0, 0, 1, 1], [], []>} : vector<8x8xbf16>, vector<8x1024xbf16>, vector<8x1024xf32> -> vector<8x1024xf32>
    %134 = arith.addf %129, %133 : vector<8x1024xf32>
    %135 = vector.extract_strided_slice %2 {offsets = [0, 628], sizes = [8, 1024], strides = [1, 1]} : vector<8x2048xbf16> to vector<8x1024xbf16>
    %136 = vector.extract_strided_slice %3 {offsets = [26, 0, 0], sizes = [1, 8, 8], strides = [1, 1, 1]} : vector<27x8x8xbf16> to vector<1x8x8xbf16>
    %137 = vector.shape_cast %136 : vector<1x8x8xbf16> to vector<8x8xbf16>
    %cst_32 = arith.constant dense<0.000000e+00> : vector<8x1024xf32>
    %138 = tpu.matmul %137, %135, %cst_32 {dimension_numbers = #tpu.dot_dimension_numbers<[1], [0], [0], [1], [0, 0, 1, 1], [], []>} : vector<8x8xbf16>, vector<8x1024xbf16>, vector<8x1024xf32> -> vector<8x1024xf32>
    %139 = arith.addf %134, %138 : vector<8x1024xf32>
    %c0_33 = arith.constant 0 : index
    %c0_34 = arith.constant 0 : index
    %140 = vector.load %arg4[%c0_33, %c0_34] : memref<8x1024xf32, #tpu.memory_space<vmem>>, vector<8x1024xf32>
    tpu.vector_store %arg4[%c0_33, %c0_34], %139 {strides = array<i32>} : memref<8x1024xf32, #tpu.memory_space<vmem>>, vector<8x1024xf32>,
    return
  }
  func.func @transform_0(%arg0: i32) -> (i32, i32) {
    %c0_i32 = arith.constant 0 : i32
    %0 = arith.addi %arg0, %c0_i32 : i32
    %c0_i32_0 = arith.constant 0 : i32
    %c0_i32_1 = arith.constant 0 : i32
    return %c0_i32_0, %0 : i32, i32
  }
  func.func @transform_1(%arg0: i32) -> (i32, i32) {
    %c1_i32 = arith.constant 1 : i32
    %0 = arith.addi %arg0, %c1_i32 : i32
    %c0_i32 = arith.constant 0 : i32
    %c0_i32_0 = arith.constant 0 : i32
    return %c0_i32, %0 : i32, i32
  }
  func.func @transform_2(%arg0: i32) -> (i32, i32, i32) {
    %c0_i32 = arith.constant 0 : i32
    %c0_i32_0 = arith.constant 0 : i32
    %c0_i32_1 = arith.constant 0 : i32
    %c0_i32_2 = arith.constant 0 : i32
    return %c0_i32, %c0_i32_0, %c0_i32_1 : i32, i32, i32
  }
  func.func @transform_3(%arg0: i32) -> (i32, i32) {
    %c0_i32 = arith.constant 0 : i32
    %c0_i32_0 = arith.constant 0 : i32
    return %c0_i32, %arg0 : i32, i32
  }
}

</mosaic_0001>

<llo_original>
// kernel: tpu_custom_call.1
$region0: #{tpu_custom_call.1}
  #allocation0 [shape = 'u32[]', space=smem, size = 0x4, offset = 0x4, fixed_abs, tag = 'smem constant byte address 0x4 - core index']
  #allocation1 [shape = 'u32[144,128]{1,0:T(1,128)}', space=vmem, size = 0x12000, scoped, tag = 'internal scratch']
  %s0 = inlined_call_operand.hbm [shape: bf16[8,5120], index: 0, kind: input, shape index: {}]
  %s1 = inlined_call_operand.hbm [shape: bf16[8,5120], index: 1, kind: input, shape index: {}]
  %s2 = inlined_call_operand.vmem [shape: bf16[27,8,8], index: 2, kind: input, shape index: {}]
  %s3 = inlined_call_operand.hbm [shape: f32[8,4096], index: 3, kind: output, shape index: {}]
  %s4 = sld [smem:[#allocation0]]
  $region53: #{tpu_custom_call.1} parent=0
    _
  %s6 = ssub.s32 1, %s4
  %s7 = scalar_select 0, %s6, %s4
  $region1: #{tpu_custom_call.1} parent=0
    #allocation2 [shape = 'u8[32768]{0}', space=vmem, size = 0x8000, scoped, tag = 'input window, operand 0']
    #allocation3 [shape = 's32[2]{0}', space=sflag, size = 0x8, scoped, tag = 'scoped memory for tpu_custom_call.1']
    #allocation4 [shape = 's32[2]{0}', space=sflag, size = 0x8, scoped, tag = 'scoped memory for tpu_custom_call.1']
    #allocation5 [shape = 'u8[32768]{0}', space=vmem, size = 0x8000, scoped, tag = 'input window, operand 1']
    #allocation6 [shape = 's32[2]{0}', space=sflag, size = 0x8, scoped, tag = 'scoped memory for tpu_custom_call.1']
    #allocation7 [shape = 'u8[65536]{0}', space=vmem, size = 0x10000, scoped, tag = 'output window, operand 0']
    %8 = vsyncpa [#allocation3], 0
    %s9 = scalar_lea.sflag [#allocation3], 1
    %10 = vsyncpa %s9, 0
    %11 = vsyncpa [#allocation6], 0
    %s12 = scalar_lea.sflag [#allocation6], 1
    %13 = vsyncpa %s12, 0
    %14 = vsyncpa [#allocation4], 0
    %s15 = scalar_lea.sflag [#allocation4], 1
    %16 = vsyncpa %s15, 0
    loop: start=0, step=1, limit=6
    $region2: #{tpu_custom_call.1} parent=1 // loop_pre_header
      _
    $region3: #{tpu_custom_call.1} parent=1 // loop_header
      %s18 = sphi 0, %s22
      %p19 = scmp.ge.s32.totalorder %s18, 6
      %s28 = sphi 0, %s30
      %s31 = sphi 0, %s28
      %s32 = sphi 0, %s31
      %s48 = sphi 0, %s32
      %s56 = sphi 0, %s58
      %s59 = sphi 0, %s56
      %s60 = sphi 0, %s59
      %s76 = sphi 0, %s60
      %s80 = sphi 0, %s80
      %s82 = sphi 0, %s80
      %s83 = sphi 0, %s82
      %s97 = sphi 0, %s83
      %s103 = sphi 0, %s105
      %s106 = sphi 0, %s103
      %s107 = sphi 0, %s106
      %s123 = sphi 0, %s107
    $region4: #{tpu_custom_call.1} parent=1 // loop_header_branch
      %21 = sbr.rel (%p19) target = $region8
    $region5: #{tpu_custom_call.1} parent=1 // loop_body
      %s23 = ssub.s32 %s18, 1
      %s24 = ssub.s32 %s18, 2
      %s25 = sadd.s32 %s18, 1
      %s26 = ssub.s32 %s18, %s25
      %p27 = scmp.eq.s32.totalorder %s26, 0
      %s29 = sadd.s32 %s28, 1
      %s30 = scalar_select %p27, %s28, %s29
      %p33 = pneg %p27
      %p34 = scmp.eq.s32.totalorder %s18, 3
      %p35 = por %p33, %p34
      %p36 = scmp.ne.s32.totalorder %s28, %s31
      %p37 = scmp.eq.s32.totalorder %s18, 0
      %p38 = por %p36, %p37
      %p39 = scmp.ne.s32.totalorder %s28, %s31
      %p40 = scmp.eq.s32.totalorder %s23, 3
      %p41 = por %p39, %p40
      %p42 = scmp.ne.s32.totalorder %s31, %s32
      %p43 = scmp.eq.s32.totalorder %s23, 0
      %p44 = por %p42, %p43
      %p45 = scmp.ne.s32.totalorder %s31, %s32
      %p46 = scmp.eq.s32.totalorder %s24, 3
      %p47 = por %p45, %p46
      %p49 = scmp.ne.s32.totalorder %s32, %s48
      %p50 = scmp.eq.s32.totalorder %s24, 0
      %p51 = por %p49, %p50
      %s52 = sadd.s32 %s18, 1
      %s53 = sadd.s32 %s25, 1
      %s54 = ssub.s32 %s52, %s53
      %p55 = scmp.eq.s32.totalorder %s54, 0
      %s57 = sadd.s32 %s56, 1
      %s58 = scalar_select %p55, %s56, %s57
      %p61 = pneg %p55
      %p62 = scmp.eq.s32.totalorder %s18, 3
      %p63 = por %p61, %p62
      %p64 = scmp.ne.s32.totalorder %s56, %s59
      %p65 = scmp.eq.s32.totalorder %s18, 0
      %p66 = por %p64, %p65
      %p67 = scmp.ne.s32.totalorder %s56, %s59
      %p68 = scmp.eq.s32.totalorder %s23, 3
      %p69 = por %p67, %p68
      %p70 = scmp.ne.s32.totalorder %s59, %s60
      %p71 = scmp.eq.s32.totalorder %s23, 0
      %p72 = por %p70, %p71
      %p73 = scmp.ne.s32.totalorder %s59, %s60
      %p74 = scmp.eq.s32.totalorder %s24, 3
      %p75 = por %p73, %p74
      %p77 = scmp.ne.s32.totalorder %s60, %s76
      %p78 = scmp.eq.s32.totalorder %s24, 0
      %p79 = por %p77, %p78
      %s81 = sadd.s32 %s80, 1
      %p84 = scmp.eq.s32.totalorder %s18, 3
      %p85 = scmp.ne.s32.totalorder %s80, %s82
      %p86 = scmp.eq.s32.totalorder %s18, 0
      %p87 = por %p85, %p86
      %p88 = scmp.ne.s32.totalorder %s80, %s82
      %p89 = scmp.eq.s32.totalorder %s23, 3
      %p90 = por %p88, %p89
      %p91 = scmp.ne.s32.totalorder %s82, %s83
      %p92 = scmp.eq.s32.totalorder %s23, 0
      %p93 = por %p91, %p92
      %p94 = scmp.ne.s32.totalorder %s82, %s83
      %p95 = scmp.eq.s32.totalorder %s24, 3
      %p96 = por %p94, %p95
      %p98 = scmp.ne.s32.totalorder %s83, %s97
      %p99 = scmp.eq.s32.totalorder %s24, 0
      %p100 = por %p98, %p99
      %s101 = ssub.s32 %s18, %s25
      %p102 = scmp.eq.s32.totalorder %s101, 0
      %s104 = sadd.s32 %s103, 1
      %s105 = scalar_select %p102, %s103, %s104
      %p108 = pneg %p102
      %p109 = scmp.eq.s32.totalorder %s18, 3
      %p110 = por %p108, %p109
      %p111 = scmp.ne.s32.totalorder %s103, %s106
      %p112 = scmp.eq.s32.totalorder %s18, 0
      %p113 = por %p111, %p112
      %p114 = scmp.ne.s32.totalorder %s103, %s106
      %p115 = scmp.eq.s32.totalorder %s23, 3
      %p116 = por %p114, %p115
      %p117 = scmp.ne.s32.totalorder %s106, %s107
      %p118 = scmp.eq.s32.totalorder %s23, 0
      %p119 = por %p117, %p118
      %p120 = scmp.ne.s32.totalorder %s106, %s107
      %p121 = scmp.eq.s32.totalorder %s24, 3
      %p122 = por %p120, %p121
      %p124 = scmp.ne.s32.totalorder %s107, %s123
      %p125 = scmp.eq.s32.totalorder %s24, 0
      %p126 = por %p124, %p125
      %p127 = scmp.le.s32.totalorder 1, %s18
      %p128 = scmp.lt.s32.totalorder %s18, 5
      %p129 = pnand %p127, %p128
      %p130 = pneg %p129
      // Predicated region
      $region9: #{tpu_custom_call.1} parent=5 // pred_check
        _
      $region10: #{tpu_custom_call.1} parent=5 // pred_check_branch
        %132 = sbr.rel (%p129) target = $region12
      $region11: #{tpu_custom_call.1} parent=5 // pred_region
        %s133 = ssub.s32 %s18, 1
        // Predicated region
        $region13: #{tpu_custom_call.1} parent=11 // pred_check
          %p134 = pneg %p93
        $region14: #{tpu_custom_call.1} parent=11 // pred_check_branch
          %136 = sbr.rel (%p134) target = $region16
        $region15: #{tpu_custom_call.1} parent=11 // pred_region
          _
        $region16: #{tpu_custom_call.1} parent=11 // pred_fallthru
          _
      $region12: #{tpu_custom_call.1} parent=5 // pred_fallthru
        _
      %p137 = scmp.lt.s32.totalorder %s18, 4
      // Predicated region
      $region17: #{tpu_custom_call.1} parent=5 // pred_check
        %p138 = pneg %p137
      $region18: #{tpu_custom_call.1} parent=5 // pred_check_branch
        %140 = sbr.rel (%p138) target = $region20
      $region19: #{tpu_custom_call.1} parent=5 // pred_region
        // Predicated region
        $region21: #{tpu_custom_call.1} parent=19 // pred_check
          %p141 = pneg %p38
        $region22: #{tpu_custom_call.1} parent=19 // pred_check_branch
          %143 = sbr.rel (%p141) target = $region24
        $region23: #{tpu_custom_call.1} parent=19 // pred_region
          %s144 = sand.u32 %s28, 1
          %s145 = scalar_lea.sflag [#allocation3], %s144
          %s146 = sand.u32 %s28, 1
          %s147 = smul.addr %s146, 32
          %s148 = scalar_lea.vmem [#allocation2], %s147
          %s149 = smul.u32 8, %s18
          %s151 = ssub.s32 512, 512
          %152 = vsyncadd %s145, %s151
          %s153 = smul.addr %s149, 64
          %s154 = scalar_lea.hbm %s0, %s153
          %s156 = sshll.u32 %s148, 4
          %s157 = int_to_ptr.vmem [resolvable:$true] %s156
          %159 = dma.hbm_to_vmem [thread:$0]  %s154, 512, %s157, %s145
        $region24: #{tpu_custom_call.1} parent=19 // pred_fallthru
          _
        // Predicated region
        $region25: #{tpu_custom_call.1} parent=19 // pred_check
          %p160 = pneg %p66
        $region26: #{tpu_custom_call.1} parent=19 // pred_check_branch
          %162 = sbr.rel (%p160) target = $region28
        $region27: #{tpu_custom_call.1} parent=19 // pred_region
          %s163 = sand.u32 %s56, 1
          %s164 = scalar_lea.sflag [#allocation6], %s163
          %s165 = sand.u32 %s56, 1
          %s166 = smul.addr %s165, 32
          %s167 = scalar_lea.vmem [#allocation5], %s166
          %s168 = sadd.s32 %s18, 1
          %s169 = smul.u32 8, %s168
          %s171 = ssub.s32 512, 512
          %172 = vsyncadd %s164, %s171
          %s173 = smul.addr %s169, 64
          %s174 = scalar_lea.hbm %s1, %s173
          %s176 = sshll.u32 %s167, 4
          %s177 = int_to_ptr.vmem [resolvable:$true] %s176
          %179 = dma.hbm_to_vmem [thread:$0]  %s174, 512, %s177, %s164
        $region28: #{tpu_custom_call.1} parent=19 // pred_fallthru
          _
      $region20: #{tpu_custom_call.1} parent=5 // pred_fallthru
        _
      %p180 = scmp.le.s32.totalorder 1, %s18
      %p181 = scmp.lt.s32.totalorder %s18, 5
      %p182 = pnand %p180, %p181
      %p183 = pneg %p182
      // Predicated region
      $region29: #{tpu_custom_call.1} parent=5 // pred_check
        _
      $region30: #{tpu_custom_call.1} parent=5 // pred_check_branch
        %185 = sbr.rel (%p182) target = $region32
      $region31: #{tpu_custom_call.1} parent=5 // pred_region
        %s186 = ssub.s32 %s18, 1
        %s187 = sand.u32 %s31, 1
        %s188 = scalar_lea.sflag [#allocation3], %s187
        %s189 = sand.u32 %s31, 1
        %s190 = smul.addr %s189, 32
        %s191 = scalar_lea.vmem [#allocation2], %s190
        // Predicated region
        $region33: #{tpu_custom_call.1} parent=31 // pred_check
          %p192 = pneg %p44
        $region34: #{tpu_custom_call.1} parent=31 // pred_check_branch
          %194 = sbr.rel (%p192) target = $region36
        $region35: #{tpu_custom_call.1} parent=31 // pred_region
          %195 = dma.done %s188, 512
        $region36: #{tpu_custom_call.1} parent=31 // pred_fallthru
          _
        %s196 = sand.u32 %s59, 1
        %s197 = scalar_lea.sflag [#allocation6], %s196
        %s198 = sand.u32 %s59, 1
        %s199 = smul.addr %s198, 32
        %s200 = scalar_lea.vmem [#allocation5], %s199
        // Predicated region
        $region37: #{tpu_custom_call.1} parent=31 // pred_check
          %p201 = pneg %p72
        $region38: #{tpu_custom_call.1} parent=31 // pred_check_branch
          %203 = sbr.rel (%p201) target = $region40
        $region39: #{tpu_custom_call.1} parent=31 // pred_region
          %204 = dma.done %s197, 512
        $region40: #{tpu_custom_call.1} parent=31 // pred_fallthru
          _
        %s205 = sand.u32 %s31, 1
        %s206 = scalar_lea.sflag [#allocation3], %s205
        %s207 = sand.u32 %s31, 1
        %s208 = smul.addr %s207, 32
        %s209 = scalar_lea.vmem [#allocation2], %s208
        %p210 = pneg %p44
        %p211 = pneg %p41
        %s212 = sand.u32 %s59, 1
        %s213 = scalar_lea.sflag [#allocation6], %s212
        %s214 = sand.u32 %s59, 1
        %s215 = smul.addr %s214, 32
        %s216 = scalar_lea.vmem [#allocation5], %s215
        %p217 = pneg %p72
        %p218 = pneg %p69
        %p219 = pneg %p93
        %p220 = pneg %p90
        %p221 = pneg %p119
        %p222 = pneg %p116
        %s223 = sand.u32 %s106, 1
        %s224 = scalar_lea.sflag [#allocation4], %s223
        %s225 = sand.u32 %s106, 1
        %s226 = smul.addr %s225, 64
        %s227 = scalar_lea.vmem [#allocation7], %s226
        %s228 = smul.u32 8, %s23
        %s229 = sadd.s32 %s23, 1
        %s230 = smul.u32 8, %s229
        %s231 = smul.u32 8, %s23
        %v233 = vld [vmem:[%s191] sm:$0xff]
        %v234 = vld [vmem:[%s191 + $0x8] sm:$0xff]
        %v235 = vld [vmem:[%s191 + $0x10] sm:$0xff]
        %v236 = vld [vmem:[%s191 + $0x18] sm:$0xff]
        %v237 = vld [vmem:[%s200] sm:$0xff]
        %v238 = vld [vmem:[%s200 + $0x8] sm:$0xff]
        %v239 = vld [vmem:[%s200 + $0x10] sm:$0xff]
        %v244 = vunpack.c.l.b16 %v233
        %v245 = vunpack.c.h.b16 %v233
        %v246 = vunpack.c.l.b16 %v234
        %v247 = vunpack.c.h.b16 %v234
        %v248 = vunpack.c.l.b16 %v235
        %v249 = vunpack.c.h.b16 %v235
        %v250 = vunpack.c.l.b16 %v236
        %v251 = vunpack.c.h.b16 %v236
        %v252 = vpack.c.b16 %v244, %v244
        %v253 = vpack.c.b16 %v245, %v245
        %v254 = vpack.c.b16 %v246, %v246
        %v255 = vpack.c.b16 %v247, %v247
        %v256 = vpack.c.b16 %v248, %v248
        %v257 = vpack.c.b16 %v249, %v249
        %v258 = vpack.c.b16 %v250, %v250
        %v259 = vpack.c.b16 %v251, %v251
        %v263 = vunpack.c.l.b16 %v237
        %v264 = vunpack.c.h.b16 %v237
        %v265 = vunpack.c.l.b16 %v238
        %v266 = vunpack.c.h.b16 %v238
        %v267 = vunpack.c.l.b16 %v239
        %v268 = vpack.c.b16 %v263, %v263
        %v269 = vpack.c.b16 %v264, %v264
        %v270 = vpack.c.b16 %v265, %v265
        %v271 = vpack.c.b16 %v266, %v266
        %v272 = vpack.c.b16 %v267, %v267
        %v273 = vld [vmem:[%s2] sm:$0xf]
        %v274 = vld [vmem:[%s2 + $0x4] sm:$0xf]
        %v275 = vld [vmem:[%s2 + $0x8] sm:$0xf]
        %v276 = vld [vmem:[%s2 + $0xc] sm:$0xf]
        %v277 = vld [vmem:[%s2 + $0x10] sm:$0xf]
        %v278 = vld [vmem:[%s2 + $0x14] sm:$0xf]
        %v279 = vld [vmem:[%s2 + $0x18] sm:$0xf]
        %v280 = vld [vmem:[%s2 + $0x1c] sm:$0xf]
        %v281 = vld [vmem:[%s2 + $0x20] sm:$0xf]
        %v282 = vld [vmem:[%s2 + $0x24] sm:$0xf]
        %v283 = vld [vmem:[%s2 + $0x28] sm:$0xf]
        %v284 = vld [vmem:[%s2 + $0x2c] sm:$0xf]
        %v285 = vld [vmem:[%s2 + $0x30] sm:$0xf]
        %v286 = vld [vmem:[%s2 + $0x34] sm:$0xf]
        %v287 = vld [vmem:[%s2 + $0x38] sm:$0xf]
        %v288 = vld [vmem:[%s2 + $0x3c] sm:$0xf]
        %v289 = vld [vmem:[%s2 + $0x40] sm:$0xf]
        %v290 = vld [vmem:[%s2 + $0x44] sm:$0xf]
        %v291 = vld [vmem:[%s2 + $0x48] sm:$0xf]
        %v292 = vld [vmem:[%s2 + $0x4c] sm:$0xf]
        %v293 = vld [vmem:[%s2 + $0x50] sm:$0xf]
        %v294 = vld [vmem:[%s2 + $0x54] sm:$0xf]
        %v295 = vld [vmem:[%s2 + $0x58] sm:$0xf]
        %v296 = vld [vmem:[%s2 + $0x5c] sm:$0xf]
        %v297 = vld [vmem:[%s2 + $0x60] sm:$0xf]
        %v298 = vld [vmem:[%s2 + $0x64] sm:$0xf]
        %v299 = vld [vmem:[%s2 + $0x68] sm:$0xf]
        %300 = vrot.lane.b32.xlu0 %v252, 126
        %v301 = vpop.permute.xlu0 %300
        %302 = vrot.lane.b32.xlu0 %v253, 126
        %v303 = vpop.permute.xlu0 %302
        %304 = vrot.lane.b32.xlu0 %v254, 126
        %v305 = vpop.permute.xlu0 %304
        %306 = vrot.lane.b32.xlu0 %v255, 126
        %v307 = vpop.permute.xlu0 %306
        %308 = vrot.lane.b32.xlu0 %v256, 126
        %v309 = vpop.permute.xlu0 %308
        %310 = vrot.lane.b32.xlu0 %v257, 126
        %v311 = vpop.permute.xlu0 %310
        %312 = vrot.lane.b32.xlu0 %v258, 126
        %v313 = vpop.permute.xlu0 %312
        %314 = vrot.lane.b32.xlu0 %v259, 126
        %v315 = vpop.permute.xlu0 %314
        %316 = vrot.lane.b32.xlu0 %v268, 126
        %v317 = vpop.permute.xlu0 %316
        %vm318 = vcmask 1031168
        %v319 = vsel %vm318, %v301, %v303
        %v320 = vsel %vm318, %v303, %v305
        %v321 = vsel %vm318, %v305, %v307
        %v322 = vsel %vm318, %v307, %v309
        %v323 = vsel %vm318, %v309, %v311
        %v324 = vsel %vm318, %v311, %v313
        %v325 = vsel %vm318, %v313, %v315
        %v326 = vsel %vm318, %v315, %v317
        %vm327 = vcmask 64512
        %v329 = vsel %vm327, %v274, 0
        %vm331 = vcmask 1043456
        %v333 = vsel %vm331, %v319, 0
        %v336 = vsel %vm331, %v320, 0
        %v339 = vsel %vm331, %v321, 0
        %v342 = vsel %vm331, %v322, 0
        %v345 = vsel %vm331, %v323, 0
        %v348 = vsel %vm331, %v324, 0
        %v351 = vsel %vm331, %v325, 0
        %v354 = vsel %vm331, %v326, 0
        %356 = vmatprep.subr.bf16.mxu0 0
        %357 = vmatpush1.bf16.msra.mxu0 0
        %358 = vmatprep.subr.bf16.mxu0 0
        %359 = vmatpush1.bf16.msra.mxu0 0
        %360 = vmatprep.subr.bf16.mxu0 0
        %361 = vmatpush1.bf16.msra.mxu0 0
        %362 = vmatprep.subr.bf16.mxu0 0
        %363 = vmatpush1.bf16.msra.mxu0 0
        %364 = vmatprep.subr.bf16.mxu0 0
        %365 = vmatpush1.bf16.msra.mxu0 0
        %366 = vmatprep.subr.bf16.mxu0 0
        %367 = vmatpush1.bf16.msra.mxu0 0
        %368 = vmatprep.subr.bf16.mxu0 0
        %369 = vmatpush1.bf16.msra.mxu0 0
        %370 = vmatprep.subr.bf16.mxu0 %v336
        %371 = vmatpush1.bf16.msra.mxu0 %v333
        %372 = vmatprep.subr.bf16.mxu0 0
        %373 = vmatpush2.bf16.msra.mxu0 0
        %374 = vmatprep.subr.bf16.mxu0 0
        %375 = vmatpush2.bf16.msra.mxu0 0
        %376 = vmatprep.subr.bf16.mxu0 0
        %377 = vmatpush2.bf16.msra.mxu0 0
        %378 = vmatprep.subr.bf16.mxu0 0
        %379 = vmatpush2.bf16.msra.mxu0 0
        %380 = vmatprep.subr.bf16.mxu0 0
        %381 = vmatpush2.bf16.msra.mxu0 0
        %382 = vmatprep.subr.bf16.mxu0 0
        %383 = vmatpush2.bf16.msra.mxu0 0
        %384 = vmatprep.subr.bf16.mxu0 0
        %385 = vmatpush2.bf16.msra.mxu0 0
        %386 = vmatprep.subr.bf16.mxu0 0
        %387 = vmatpush2.bf16.msra.mxu0 0
        %388 = vmatprep.mubr.bf16.mxu0 0
        %389 = vmatmul.mubr.bf16.gmra.mxu0 %v329
        %v390 = vpop.f32.mrf.mxu0
        %v391 = vadd.f32 0.0, %v390
        %v392 = vpop.f32.mrf.mxu0
        %v393 = vadd.f32 0.0, %v392
        %v394 = vpop.f32.mrf.mxu0
        %v395 = vpop.f32.mrf.mxu0
        %396 = vdwg.mxu0
        %397 = vmatprep.subr.bf16.mxu0 0
        %398 = vmatpush1.bf16.msra.mxu0 0
        %399 = vmatprep.subr.bf16.mxu0 0
        %400 = vmatpush1.bf16.msra.mxu0 0
        %401 = vmatprep.subr.bf16.mxu0 0
        %402 = vmatpush1.bf16.msra.mxu0 0
        %403 = vmatprep.subr.bf16.mxu0 0
        %404 = vmatpush1.bf16.msra.mxu0 0
        %405 = vmatprep.subr.bf16.mxu0 0
        %406 = vmatpush1.bf16.msra.mxu0 0
        %407 = vmatprep.subr.bf16.mxu0 0
        %408 = vmatpush1.bf16.msra.mxu0 0
        %409 = vmatprep.subr.bf16.mxu0 0
        %410 = vmatpush1.bf16.msra.mxu0 0
        %411 = vmatprep.subr.bf16.mxu0 %v342
        %412 = vmatpush1.bf16.msra.mxu0 %v339
        %413 = vmatprep.subr.bf16.mxu0 0
        %414 = vmatpush2.bf16.msra.mxu0 0
        %415 = vmatprep.subr.bf16.mxu0 0
        %416 = vmatpush2.bf16.msra.mxu0 0
        %417 = vmatprep.subr.bf16.mxu0 0
        %418 = vmatpush2.bf16.msra.mxu0 0
        %419 = vmatprep.subr.bf16.mxu0 0
        %420 = vmatpush2.bf16.msra.mxu0 0
        %421 = vmatprep.subr.bf16.mxu0 0
        %422 = vmatpush2.bf16.msra.mxu0 0
        %423 = vmatprep.subr.bf16.mxu0 0
        %424 = vmatpush2.bf16.msra.mxu0 0
        %425 = vmatprep.subr.bf16.mxu0 0
        %426 = vmatpush2.bf16.msra.mxu0 0
        %427 = vmatprep.subr.bf16.mxu0 0
        %428 = vmatpush2.bf16.msra.mxu0 0
        %429 = vmatprep.mubr.bf16.mxu0 0
        %430 = vmatmul.mubr.bf16.gmra.mxu0 %v329
        %v431 = vpop.f32.mrf.mxu0
        %v432 = vadd.f32 0.0, %v431
        %v433 = vpop.f32.mrf.mxu0
        %v434 = vadd.f32 0.0, %v433
        %v435 = vpop.f32.mrf.mxu0
        %v436 = vpop.f32.mrf.mxu0
        %437 = vdwg.mxu0
        %438 = vmatprep.subr.bf16.mxu0 0
        %439 = vmatpush1.bf16.msra.mxu0 0
        %440 = vmatprep.subr.bf16.mxu0 0
        %441 = vmatpush1.bf16.msra.mxu0 0
        %442 = vmatprep.subr.bf16.mxu0 0
        %443 = vmatpush1.bf16.msra.mxu0 0
        %444 = vmatprep.subr.bf16.mxu0 0
        %445 = vmatpush1.bf16.msra.mxu0 0
        %446 = vmatprep.subr.bf16.mxu0 0
        %447 = vmatpush1.bf16.msra.mxu0 0
        %448 = vmatprep.subr.bf16.mxu0 0
        %449 = vmatpush1.bf16.msra.mxu0 0
        %450 = vmatprep.subr.bf16.mxu0 0
        %451 = vmatpush1.bf16.msra.mxu0 0
        %452 = vmatprep.subr.bf16.mxu0 %v348
        %453 = vmatpush1.bf16.msra.mxu0 %v345
        %454 = vmatprep.subr.bf16.mxu0 0
        %455 = vmatpush2.bf16.msra.mxu0 0
        %456 = vmatprep.subr.bf16.mxu0 0
        %457 = vmatpush2.bf16.msra.mxu0 0
        %458 = vmatprep.subr.bf16.mxu0 0
        %459 = vmatpush2.bf16.msra.mxu0 0
        %460 = vmatprep.subr.bf16.mxu0 0
        %461 = vmatpush2.bf16.msra.mxu0 0
        %462 = vmatprep.subr.bf16.mxu0 0
        %463 = vmatpush2.bf16.msra.mxu0 0
        %464 = vmatprep.subr.bf16.mxu0 0
        %465 = vmatpush2.bf16.msra.mxu0 0
        %466 = vmatprep.subr.bf16.mxu0 0
        %467 = vmatpush2.bf16.msra.mxu0 0
        %468 = vmatprep.subr.bf16.mxu0 0
        %469 = vmatpush2.bf16.msra.mxu0 0
        %470 = vmatprep.mubr.bf16.mxu0 0
        %471 = vmatmul.mubr.bf16.gmra.mxu0 %v329
        %v472 = vpop.f32.mrf.mxu0
        %v473 = vadd.f32 0.0, %v472
        %v474 = vpop.f32.mrf.mxu0
        %v475 = vadd.f32 0.0, %v474
        %v476 = vpop.f32.mrf.mxu0
        %v477 = vpop.f32.mrf.mxu0
        %478 = vdwg.mxu0
        %479 = vmatprep.subr.bf16.mxu0 0
        %480 = vmatpush1.bf16.msra.mxu0 0
        %481 = vmatprep.subr.bf16.mxu0 0
        %482 = vmatpush1.bf16.msra.mxu0 0
        %483 = vmatprep.subr.bf16.mxu0 0
        %484 = vmatpush1.bf16.msra.mxu0 0
        %485 = vmatprep.subr.bf16.mxu0 0
        %486 = vmatpush1.bf16.msra.mxu0 0
        %487 = vmatprep.subr.bf16.mxu0 0
        %488 = vmatpush1.bf16.msra.mxu0 0
        %489 = vmatprep.subr.bf16.mxu0 0
        %490 = vmatpush1.bf16.msra.mxu0 0
        %491 = vmatprep.subr.bf16.mxu0 0
        %492 = vmatpush1.bf16.msra.mxu0 0
        %493 = vmatprep.subr.bf16.mxu0 %v354
        %494 = vmatpush1.bf16.msra.mxu0 %v351
        %495 = vmatprep.subr.bf16.mxu0 0
        %496 = vmatpush2.bf16.msra.mxu0 0
        %497 = vmatprep.subr.bf16.mxu0 0
        %498 = vmatpush2.bf16.msra.mxu0 0
        %499 = vmatprep.subr.bf16.mxu0 0
        %500 = vmatpush2.bf16.msra.mxu0 0
        %501 = vmatprep.subr.bf16.mxu0 0
        %502 = vmatpush2.bf16.msra.mxu0 0
        %503 = vmatprep.subr.bf16.mxu0 0
        %504 = vmatpush2.bf16.msra.mxu0 0
        %505 = vmatprep.subr.bf16.mxu0 0
        %506 = vmatpush2.bf16.msra.mxu0 0
        %507 = vmatprep.subr.bf16.mxu0 0
        %508 = vmatpush2.bf16.msra.mxu0 0
        %509 = vmatprep.subr.bf16.mxu0 0
        %510 = vmatpush2.bf16.msra.mxu0 0
        %511 = vmatprep.mubr.bf16.mxu0 0
        %512 = vmatmul.mubr.bf16.gmra.mxu0 %v329
        %v513 = vpop.f32.mrf.mxu0
        %v514 = vadd.f32 0.0, %v513
        %v515 = vpop.f32.mrf.mxu0
        %v516 = vadd.f32 0.0, %v515
        %v517 = vpop.f32.mrf.mxu0
        %v518 = vpop.f32.mrf.mxu0
        %519 = vdwg.mxu0
        %v521 = vsel %vm327, %v273, 0
        %v524 = vsel %vm331, %v252, 0
        %v527 = vsel %vm331, %v253, 0
        %v530 = vsel %vm331, %v254, 0
        %v533 = vsel %vm331, %v255, 0
        %v536 = vsel %vm331, %v256, 0
        %v539 = vsel %vm331, %v257, 0
        %v542 = vsel %vm331, %v258, 0
        %v545 = vsel %vm331, %v259, 0
        %547 = vmatprep.subr.bf16.mxu0 0
        %548 = vmatpush1.bf16.msra.mxu0 0
        %549 = vmatprep.subr.bf16.mxu0 0
        %550 = vmatpush1.bf16.msra.mxu0 0
        %551 = vmatprep.subr.bf16.mxu0 0
        %552 = vmatpush1.bf16.msra.mxu0 0
        %553 = vmatprep.subr.bf16.mxu0 0
        %554 = vmatpush1.bf16.msra.mxu0 0
        %555 = vmatprep.subr.bf16.mxu0 0
        %556 = vmatpush1.bf16.msra.mxu0 0
        %557 = vmatprep.subr.bf16.mxu0 0
        %558 = vmatpush1.bf16.msra.mxu0 0
        %559 = vmatprep.subr.bf16.mxu0 0
        %560 = vmatpush1.bf16.msra.mxu0 0
        %561 = vmatprep.subr.bf16.mxu0 %v527
        %562 = vmatpush1.bf16.msra.mxu0 %v524
        %563 = vmatprep.subr.bf16.mxu0 0
        %564 = vmatpush2.bf16.msra.mxu0 0
        %565 = vmatprep.subr.bf16.mxu0 0
        %566 = vmatpush2.bf16.msra.mxu0 0
        %567 = vmatprep.subr.bf16.mxu0 0
        %568 = vmatpush2.bf16.msra.mxu0 0
        %569 = vmatprep.subr.bf16.mxu0 0
        %570 = vmatpush2.bf16.msra.mxu0 0
        %571 = vmatprep.subr.bf16.mxu0 0
        %572 = vmatpush2.bf16.msra.mxu0 0
        %573 = vmatprep.subr.bf16.mxu0 0
        %574 = vmatpush2.bf16.msra.mxu0 0
        %575 = vmatprep.subr.bf16.mxu0 0
        %576 = vmatpush2.bf16.msra.mxu0 0
        %577 = vmatprep.subr.bf16.mxu0 0
        %578 = vmatpush2.bf16.msra.mxu0 0
        %579 = vmatprep.mubr.bf16.mxu0 0
        %580 = vmatmul.mubr.bf16.gmra.mxu0 %v521
        %v581 = vpop.f32.mrf.mxu0
        %v582 = vadd.f32 %v391, %v581
        %v583 = vpop.f32.mrf.mxu0
        %v584 = vadd.f32 %v393, %v583
        %v585 = vpop.f32.mrf.mxu0
        %v586 = vpop.f32.mrf.mxu0
        %587 = vdwg.mxu0
        %588 = vmatprep.subr.bf16.mxu0 0
        %589 = vmatpush1.bf16.msra.mxu0 0
        %590 = vmatprep.subr.bf16.mxu0 0
        %591 = vmatpush1.bf16.msra.mxu0 0
        %592 = vmatprep.subr.bf16.mxu0 0
        %593 = vmatpush1.bf16.msra.mxu0 0
        %594 = vmatprep.subr.bf16.mxu0 0
        %595 = vmatpush1.bf16.msra.mxu0 0
        %596 = vmatprep.subr.bf16.mxu0 0
        %597 = vmatpush1.bf16.msra.mxu0 0
        %598 = vmatprep.subr.bf16.mxu0 0
        %599 = vmatpush1.bf16.msra.mxu0 0
        %600 = vmatprep.subr.bf16.mxu0 0
        %601 = vmatpush1.bf16.msra.mxu0 0
        %602 = vmatprep.subr.bf16.mxu0 %v533
        %603 = vmatpush1.bf16.msra.mxu0 %v530
        %604 = vmatprep.subr.bf16.mxu0 0
        %605 = vmatpush2.bf16.msra.mxu0 0
        %606 = vmatprep.subr.bf16.mxu0 0
        %607 = vmatpush2.bf16.msra.mxu0 0
        %608 = vmatprep.subr.bf16.mxu0 0
        %609 = vmatpush2.bf16.msra.mxu0 0
        %610 = vmatprep.subr.bf16.mxu0 0
        %611 = vmatpush2.bf16.msra.mxu0 0
        %612 = vmatprep.subr.bf16.mxu0 0
        %613 = vmatpush2.bf16.msra.mxu0 0
        %614 = vmatprep.subr.bf16.mxu0 0
        %615 = vmatpush2.bf16.msra.mxu0 0
        %616 = vmatprep.subr.bf16.mxu0 0
        %617 = vmatpush2.bf16.msra.mxu0 0
        %618 = vmatprep.subr.bf16.mxu0 0
        %619 = vmatpush2.bf16.msra.mxu0 0
        %620 = vmatprep.mubr.bf16.mxu0 0
        %621 = vmatmul.mubr.bf16.gmra.mxu0 %v521
        %v622 = vpop.f32.mrf.mxu0
        %v623 = vadd.f32 %v432, %v622
        %v624 = vpop.f32.mrf.mxu0
        %v625 = vadd.f32 %v434, %v624
        %v626 = vpop.f32.mrf.mxu0
        %v627 = vpop.f32.mrf.mxu0
        %628 = vdwg.mxu0
        %629 = vmatprep.subr.bf16.mxu0 0
        %630 = vmatpush1.bf16.msra.mxu0 0
        %631 = vmatprep.subr.bf16.mxu0 0
        %632 = vmatpush1.bf16.msra.mxu0 0
        %633 = vmatprep.subr.bf16.mxu0 0
        %634 = vmatpush1.bf16.msra.mxu0 0
        %635 = vmatprep.subr.bf16.mxu0 0
        %636 = vmatpush1.bf16.msra.mxu0 0
        %637 = vmatprep.subr.bf16.mxu0 0
        %638 = vmatpush1.bf16.msra.mxu0 0
        %639 = vmatprep.subr.bf16.mxu0 0
        %640 = vmatpush1.bf16.msra.mxu0 0
        %641 = vmatprep.subr.bf16.mxu0 0
        %642 = vmatpush1.bf16.msra.mxu0 0
        %643 = vmatprep.subr.bf16.mxu0 %v539
        %644 = vmatpush1.bf16.msra.mxu0 %v536
        %645 = vmatprep.subr.bf16.mxu0 0
        %646 = vmatpush2.bf16.msra.mxu0 0
        %647 = vmatprep.subr.bf16.mxu0 0
        %648 = vmatpush2.bf16.msra.mxu0 0
        %649 = vmatprep.subr.bf16.mxu0 0
        %650 = vmatpush2.bf16.msra.mxu0 0
        %651 = vmatprep.subr.bf16.mxu0 0
        %652 = vmatpush2.bf16.msra.mxu0 0
        %653 = vmatprep.subr.bf16.mxu0 0
        %654 = vmatpush2.bf16.msra.mxu0 0
        %655 = vmatprep.subr.bf16.mxu0 0
        %656 = vmatpush2.bf16.msra.mxu0 0
        %657 = vmatprep.subr.bf16.mxu0 0
        %658 = vmatpush2.bf16.msra.mxu0 0
        %659 = vmatprep.subr.bf16.mxu0 0
        %660 = vmatpush2.bf16.msra.mxu0 0
        %661 = vmatprep.mubr.bf16.mxu0 0
        %662 = vmatmul.mubr.bf16.gmra.mxu0 %v521
        %v663 = vpop.f32.mrf.mxu0
        %v664 = vadd.f32 %v473, %v663
        %v665 = vpop.f32.mrf.mxu0
        %v666 = vadd.f32 %v475, %v665
        %v667 = vpop.f32.mrf.mxu0
        %v668 = vpop.f32.mrf.mxu0
        %669 = vdwg.mxu0
        %670 = vmatprep.subr.bf16.mxu0 0
        %671 = vmatpush1.bf16.msra.mxu0 0
        %672 = vmatprep.subr.bf16.mxu0 0
        %673 = vmatpush1.bf16.msra.mxu0 0
        %674 = vmatprep.subr.bf16.mxu0 0
        %675 = vmatpush1.bf16.msra.mxu0 0
        %676 = vmatprep.subr.bf16.mxu0 0
        %677 = vmatpush1.bf16.msra.mxu0 0
        %678 = vmatprep.subr.bf16.mxu0 0
        %679 = vmatpush1.bf16.msra.mxu0 0
        %680 = vmatprep.subr.bf16.mxu0 0
        %681 = vmatpush1.bf16.msra.mxu0 0
        %682 = vmatprep.subr.bf16.mxu0 0
        %683 = vmatpush1.bf16.msra.mxu0 0
        %684 = vmatprep.subr.bf16.mxu0 %v545
        %685 = vmatpush1.bf16.msra.mxu0 %v542
        %686 = vmatprep.subr.bf16.mxu0 0
        %687 = vmatpush2.bf16.msra.mxu0 0
        %688 = vmatprep.subr.bf16.mxu0 0
        %689 = vmatpush2.bf16.msra.mxu0 0
        %690 = vmatprep.subr.bf16.mxu0 0
        %691 = vmatpush2.bf16.msra.mxu0 0
        %692 = vmatprep.subr.bf16.mxu0 0
        %693 = vmatpush2.bf16.msra.mxu0 0
        %694 = vmatprep.subr.bf16.mxu0 0
        %695 = vmatpush2.bf16.msra.mxu0 0
        %696 = vmatprep.subr.bf16.mxu0 0
        %697 = vmatpush2.bf16.msra.mxu0 0
        %698 = vmatprep.subr.bf16.mxu0 0
        %699 = vmatpush2.bf16.msra.mxu0 0
        %700 = vmatprep.subr.bf16.mxu0 0
        %701 = vmatpush2.bf16.msra.mxu0 0
        %702 = vmatprep.mubr.bf16.mxu0 0
        %703 = vmatmul.mubr.bf16.gmra.mxu0 %v521
        %v704 = vpop.f32.mrf.mxu0
        %v705 = vadd.f32 %v514, %v704
        %v706 = vpop.f32.mrf.mxu0
        %v707 = vadd.f32 %v516, %v706
        %v708 = vpop.f32.mrf.mxu0
        %v709 = vpop.f32.mrf.mxu0
        %710 = vdwg.mxu0
        %711 = vrot.lane.b32.xlu0 %v252, 124
        %v712 = vpop.permute.xlu0 %711
        %713 = vrot.lane.b32.xlu0 %v253, 124
        %v714 = vpop.permute.xlu0 %713
        %715 = vrot.lane.b32.xlu0 %v254, 124
        %v716 = vpop.permute.xlu0 %715
        %717 = vrot.lane.b32.xlu0 %v255, 124
        %v718 = vpop.permute.xlu0 %717
        %719 = vrot.lane.b32.xlu0 %v256, 124
        %v720 = vpop.permute.xlu0 %719
        %721 = vrot.lane.b32.xlu0 %v257, 124
        %v722 = vpop.permute.xlu0 %721
        %723 = vrot.lane.b32.xlu0 %v258, 124
        %v724 = vpop.permute.xlu0 %723
        %725 = vrot.lane.b32.xlu0 %v259, 124
        %v726 = vpop.permute.xlu0 %725
        %727 = vrot.lane.b32.xlu0 %v268, 124
        %v728 = vpop.permute.xlu0 %727
        %vm729 = vcmask 1014784
        %v730 = vsel %vm729, %v712, %v714
        %v731 = vsel %vm729, %v714, %v716
        %v732 = vsel %vm729, %v716, %v718
        %v733 = vsel %vm729, %v718, %v720
        %v734 = vsel %vm729, %v720, %v722
        %v735 = vsel %vm729, %v722, %v724
        %v736 = vsel %vm729, %v724, %v726
        %v737 = vsel %vm729, %v726, %v728
        %v739 = vsel %vm327, %v275, 0
        %v742 = vsel %vm331, %v730, 0
        %v745 = vsel %vm331, %v731, 0
        %v748 = vsel %vm331, %v732, 0
        %v751 = vsel %vm331, %v733, 0
        %v754 = vsel %vm331, %v734, 0
        %v757 = vsel %vm331, %v735, 0
        %v760 = vsel %vm331, %v736, 0
        %v763 = vsel %vm331, %v737, 0
        %765 = vmatprep.subr.bf16.mxu0 0
        %766 = vmatpush1.bf16.msra.mxu0 0
        %767 = vmatprep.subr.bf16.mxu0 0
        %768 = vmatpush1.bf16.msra.mxu0 0
        %769 = vmatprep.subr.bf16.mxu0 0
        %770 = vmatpush1.bf16.msra.mxu0 0
        %771 = vmatprep.subr.bf16.mxu0 0
        %772 = vmatpush1.bf16.msra.mxu0 0
        %773 = vmatprep.subr.bf16.mxu0 0
        %774 = vmatpush1.bf16.msra.mxu0 0
        %775 = vmatprep.subr.bf16.mxu0 0
        %776 = vmatpush1.bf16.msra.mxu0 0
        %777 = vmatprep.subr.bf16.mxu0 0
        %778 = vmatpush1.bf16.msra.mxu0 0
        %779 = vmatprep.subr.bf16.mxu0 %v745
        %780 = vmatpush1.bf16.msra.mxu0 %v742
        %781 = vmatprep.subr.bf16.mxu0 0
        %782 = vmatpush2.bf16.msra.mxu0 0
        %783 = vmatprep.subr.bf16.mxu0 0
        %784 = vmatpush2.bf16.msra.mxu0 0
        %785 = vmatprep.subr.bf16.mxu0 0
        %786 = vmatpush2.bf16.msra.mxu0 0
        %787 = vmatprep.subr.bf16.mxu0 0
        %788 = vmatpush2.bf16.msra.mxu0 0
        %789 = vmatprep.subr.bf16.mxu0 0
        %790 = vmatpush2.bf16.msra.mxu0 0
        %791 = vmatprep.subr.bf16.mxu0 0
        %792 = vmatpush2.bf16.msra.mxu0 0
        %793 = vmatprep.subr.bf16.mxu0 0
        %794 = vmatpush2.bf16.msra.mxu0 0
        %795 = vmatprep.subr.bf16.mxu0 0
        %796 = vmatpush2.bf16.msra.mxu0 0
        %797 = vmatprep.mubr.bf16.mxu0 0
        %798 = vmatmul.mubr.bf16.gmra.mxu0 %v739
        %v799 = vpop.f32.mrf.mxu0
        %v800 = vadd.f32 0.0, %v799
        %v801 = vpop.f32.mrf.mxu0
        %v802 = vadd.f32 0.0, %v801
        %v803 = vpop.f32.mrf.mxu0
        %v804 = vpop.f32.mrf.mxu0
        %805 = vdwg.mxu0
        %806 = vmatprep.subr.bf16.mxu0 0
        %807 = vmatpush1.bf16.msra.mxu0 0
        %808 = vmatprep.subr.bf16.mxu0 0
        %809 = vmatpush1.bf16.msra.mxu0 0
        %810 = vmatprep.subr.bf16.mxu0 0
        %811 = vmatpush1.bf16.msra.mxu0 0
        %812 = vmatprep.subr.bf16.mxu0 0
        %813 = vmatpush1.bf16.msra.mxu0 0
        %814 = vmatprep.subr.bf16.mxu0 0
        %815 = vmatpush1.bf16.msra.mxu0 0
        %816 = vmatprep.subr.bf16.mxu0 0
        %817 = vmatpush1.bf16.msra.mxu0 0
        %818 = vmatprep.subr.bf16.mxu0 0
        %819 = vmatpush1.bf16.msra.mxu0 0
        %820 = vmatprep.subr.bf16.mxu0 %v751
        %821 = vmatpush1.bf16.msra.mxu0 %v748
        %822 = vmatprep.subr.bf16.mxu0 0
        %823 = vmatpush2.bf16.msra.mxu0 0
        %824 = vmatprep.subr.bf16.mxu0 0
        %825 = vmatpush2.bf16.msra.mxu0 0
        %826 = vmatprep.subr.bf16.mxu0 0
        %827 = vmatpush2.bf16.msra.mxu0 0
        %828 = vmatprep.subr.bf16.mxu0 0
        %829 = vmatpush2.bf16.msra.mxu0 0
        %830 = vmatprep.subr.bf16.mxu0 0
        %831 = vmatpush2.bf16.msra.mxu0 0
        %832 = vmatprep.subr.bf16.mxu0 0
        %833 = vmatpush2.bf16.msra.mxu0 0
        %834 = vmatprep.subr.bf16.mxu0 0
        %835 = vmatpush2.bf16.msra.mxu0 0
        %836 = vmatprep.subr.bf16.mxu0 0
        %837 = vmatpush2.bf16.msra.mxu0 0
        %838 = vmatprep.mubr.bf16.mxu0 0
        %839 = vmatmul.mubr.bf16.gmra.mxu0 %v739
        %v840 = vpop.f32.mrf.mxu0
        %v841 = vadd.f32 0.0, %v840
        %v842 = vpop.f32.mrf.mxu0
        %v843 = vadd.f32 0.0, %v842
        %v844 = vpop.f32.mrf.mxu0
        %v845 = vpop.f32.mrf.mxu0
        %846 = vdwg.mxu0
        %847 = vmatprep.subr.bf16.mxu0 0
        %848 = vmatpush1.bf16.msra.mxu0 0
        %849 = vmatprep.subr.bf16.mxu0 0
        %850 = vmatpush1.bf16.msra.mxu0 0
        %851 = vmatprep.subr.bf16.mxu0 0
        %852 = vmatpush1.bf16.msra.mxu0 0
        %853 = vmatprep.subr.bf16.mxu0 0
        %854 = vmatpush1.bf16.msra.mxu0 0
        %855 = vmatprep.subr.bf16.mxu0 0
        %856 = vmatpush1.bf16.msra.mxu0 0
        %857 = vmatprep.subr.bf16.mxu0 0
        %858 = vmatpush1.bf16.msra.mxu0 0
        %859 = vmatprep.subr.bf16.mxu0 0
        %860 = vmatpush1.bf16.msra.mxu0 0
        %861 = vmatprep.subr.bf16.mxu0 %v757
        %862 = vmatpush1.bf16.msra.mxu0 %v754
        %863 = vmatprep.subr.bf16.mxu0 0
        %864 = vmatpush2.bf16.msra.mxu0 0
        %865 = vmatprep.subr.bf16.mxu0 0
        %866 = vmatpush2.bf16.msra.mxu0 0
        %867 = vmatprep.subr.bf16.mxu0 0
        %868 = vmatpush2.bf16.msra.mxu0 0
        %869 = vmatprep.subr.bf16.mxu0 0
        %870 = vmatpush2.bf16.msra.mxu0 0
        %871 = vmatprep.subr.bf16.mxu0 0
        %872 = vmatpush2.bf16.msra.mxu0 0
        %873 = vmatprep.subr.bf16.mxu0 0
        %874 = vmatpush2.bf16.msra.mxu0 0
        %875 = vmatprep.subr.bf16.mxu0 0
        %876 = vmatpush2.bf16.msra.mxu0 0
        %877 = vmatprep.subr.bf16.mxu0 0
        %878 = vmatpush2.bf16.msra.mxu0 0
        %879 = vmatprep.mubr.bf16.mxu0 0
        %880 = vmatmul.mubr.bf16.gmra.mxu0 %v739
        %v881 = vpop.f32.mrf.mxu0
        %v882 = vadd.f32 0.0, %v881
        %v883 = vpop.f32.mrf.mxu0
        %v884 = vadd.f32 0.0, %v883
        %v885 = vpop.f32.mrf.mxu0
        %v886 = vpop.f32.mrf.mxu0
        %887 = vdwg.mxu0
        %888 = vmatprep.subr.bf16.mxu0 0
        %889 = vmatpush1.bf16.msra.mxu0 0
        %890 = vmatprep.subr.bf16.mxu0 0
        %891 = vmatpush1.bf16.msra.mxu0 0
        %892 = vmatprep.subr.bf16.mxu0 0
        %893 = vmatpush1.bf16.msra.mxu0 0
        %894 = vmatprep.subr.bf16.mxu0 0
        %895 = vmatpush1.bf16.msra.mxu0 0
        %896 = vmatprep.subr.bf16.mxu0 0
        %897 = vmatpush1.bf16.msra.mxu0 0
        %898 = vmatprep.subr.bf16.mxu0 0
        %899 = vmatpush1.bf16.msra.mxu0 0
        %900 = vmatprep.subr.bf16.mxu0 0
        %901 = vmatpush1.bf16.msra.mxu0 0
        %902 = vmatprep.subr.bf16.mxu0 %v763
        %903 = vmatpush1.bf16.msra.mxu0 %v760
        %904 = vmatprep.subr.bf16.mxu0 0
        %905 = vmatpush2.bf16.msra.mxu0 0
        %906 = vmatprep.subr.bf16.mxu0 0
        %907 = vmatpush2.bf16.msra.mxu0 0
        %908 = vmatprep.subr.bf16.mxu0 0
        %909 = vmatpush2.bf16.msra.mxu0 0
        %910 = vmatprep.subr.bf16.mxu0 0
        %911 = vmatpush2.bf16.msra.mxu0 0
        %912 = vmatprep.subr.bf16.mxu0 0
        %913 = vmatpush2.bf16.msra.mxu0 0
        %914 = vmatprep.subr.bf16.mxu0 0
        %915 = vmatpush2.bf16.msra.mxu0 0
        %916 = vmatprep.subr.bf16.mxu0 0
        %917 = vmatpush2.bf16.msra.mxu0 0
        %918 = vmatprep.subr.bf16.mxu0 0
        %919 = vmatpush2.bf16.msra.mxu0 0
        %920 = vmatprep.mubr.bf16.mxu0 0
        %921 = vmatmul.mubr.bf16.gmra.mxu0 %v739
        %v922 = vpop.f32.mrf.mxu0
        %v923 = vadd.f32 0.0, %v922
        %v924 = vpop.f32.mrf.mxu0
        %v925 = vadd.f32 0.0, %v924
        %v926 = vpop.f32.mrf.mxu0
        %v927 = vpop.f32.mrf.mxu0
        %928 = vdwg.mxu0
        %v929 = vadd.f32 %v582, %v800
        %v930 = vadd.f32 %v584, %v802
        %v931 = vadd.f32 %v623, %v841
        %v932 = vadd.f32 %v625, %v843
        %v933 = vadd.f32 %v664, %v882
        %v934 = vadd.f32 %v666, %v884
        %v935 = vadd.f32 %v705, %v923
        %v936 = vadd.f32 %v707, %v925
        %937 = vrot.lane.b32.xlu0 %v252, 104
        %v938 = vpop.permute.xlu0 %937
        %939 = vrot.lane.b32.xlu0 %v253, 104
        %v940 = vpop.permute.xlu0 %939
        %941 = vrot.lane.b32.xlu0 %v254, 104
        %v942 = vpop.permute.xlu0 %941
        %943 = vrot.lane.b32.xlu0 %v255, 104
        %v944 = vpop.permute.xlu0 %943
        %945 = vrot.lane.b32.xlu0 %v256, 104
        %v946 = vpop.permute.xlu0 %945
        %947 = vrot.lane.b32.xlu0 %v257, 104
        %v948 = vpop.permute.xlu0 %947
        %949 = vrot.lane.b32.xlu0 %v258, 104
        %v950 = vpop.permute.xlu0 %949
        %951 = vrot.lane.b32.xlu0 %v259, 104
        %v952 = vpop.permute.xlu0 %951
        %953 = vrot.lane.b32.xlu0 %v268, 104
        %v954 = vpop.permute.xlu0 %953
        %vm955 = vcmask 850944
        %v956 = vsel %vm955, %v938, %v940
        %v957 = vsel %vm955, %v940, %v942
        %v958 = vsel %vm955, %v942, %v944
        %v959 = vsel %vm955, %v944, %v946
        %v960 = vsel %vm955, %v946, %v948
        %v961 = vsel %vm955, %v948, %v950
        %v962 = vsel %vm955, %v950, %v952
        %v963 = vsel %vm955, %v952, %v954
        %v965 = vsel %vm327, %v276, 0
        %v968 = vsel %vm331, %v956, 0
        %v971 = vsel %vm331, %v957, 0
        %v974 = vsel %vm331, %v958, 0
        %v977 = vsel %vm331, %v959, 0
        %v980 = vsel %vm331, %v960, 0
        %v983 = vsel %vm331, %v961, 0
        %v986 = vsel %vm331, %v962, 0
        %v989 = vsel %vm331, %v963, 0
        %991 = vmatprep.subr.bf16.mxu0 0
        %992 = vmatpush1.bf16.msra.mxu0 0
        %993 = vmatprep.subr.bf16.mxu0 0
        %994 = vmatpush1.bf16.msra.mxu0 0
        %995 = vmatprep.subr.bf16.mxu0 0
        %996 = vmatpush1.bf16.msra.mxu0 0
        %997 = vmatprep.subr.bf16.mxu0 0
        %998 = vmatpush1.bf16.msra.mxu0 0
        %999 = vmatprep.subr.bf16.mxu0 0
        %1000 = vmatpush1.bf16.msra.mxu0 0
        %1001 = vmatprep.subr.bf16.mxu0 0
        %1002 = vmatpush1.bf16.msra.mxu0 0
        %1003 = vmatprep.subr.bf16.mxu0 0
        %1004 = vmatpush1.bf16.msra.mxu0 0
        %1005 = vmatprep.subr.bf16.mxu0 %v971
        %1006 = vmatpush1.bf16.msra.mxu0 %v968
        %1007 = vmatprep.subr.bf16.mxu0 0
        %1008 = vmatpush2.bf16.msra.mxu0 0
        %1009 = vmatprep.subr.bf16.mxu0 0
        %1010 = vmatpush2.bf16.msra.mxu0 0
        %1011 = vmatprep.subr.bf16.mxu0 0
        %1012 = vmatpush2.bf16.msra.mxu0 0
        %1013 = vmatprep.subr.bf16.mxu0 0
        %1014 = vmatpush2.bf16.msra.mxu0 0
        %1015 = vmatprep.subr.bf16.mxu0 0
        %1016 = vmatpush2.bf16.msra.mxu0 0
        %1017 = vmatprep.subr.bf16.mxu0 0
        %1018 = vmatpush2.bf16.msra.mxu0 0
        %1019 = vmatprep.subr.bf16.mxu0 0
        %1020 = vmatpush2.bf16.msra.mxu0 0
        %1021 = vmatprep.subr.bf16.mxu0 0
        %1022 = vmatpush2.bf16.msra.mxu0 0
        %1023 = vmatprep.mubr.bf16.mxu0 0
        %1024 = vmatmul.mubr.bf16.gmra.mxu0 %v965
        %v1025 = vpop.f32.mrf.mxu0
        %v1026 = vadd.f32 0.0, %v1025
        %v1027 = vpop.f32.mrf.mxu0
        %v1028 = vadd.f32 0.0, %v1027
        %v1029 = vpop.f32.mrf.mxu0
        %v1030 = vpop.f32.mrf.mxu0
        %1031 = vdwg.mxu0
        %1032 = vmatprep.subr.bf16.mxu0 0
        %1033 = vmatpush1.bf16.msra.mxu0 0
        %1034 = vmatprep.subr.bf16.mxu0 0
        %1035 = vmatpush1.bf16.msra.mxu0 0
        %1036 = vmatprep.subr.bf16.mxu0 0
        %1037 = vmatpush1.bf16.msra.mxu0 0
        %1038 = vmatprep.subr.bf16.mxu0 0
        %1039 = vmatpush1.bf16.msra.mxu0 0
        %1040 = vmatprep.subr.bf16.mxu0 0
        %1041 = vmatpush1.bf16.msra.mxu0 0
        %1042 = vmatprep.subr.bf16.mxu0 0
        %1043 = vmatpush1.bf16.msra.mxu0 0
        %1044 = vmatprep.subr.bf16.mxu0 0
        %1045 = vmatpush1.bf16.msra.mxu0 0
        %1046 = vmatprep.subr.bf16.mxu0 %v977
        %1047 = vmatpush1.bf16.msra.mxu0 %v974
        %1048 = vmatprep.subr.bf16.mxu0 0
        %1049 = vmatpush2.bf16.msra.mxu0 0
        %1050 = vmatprep.subr.bf16.mxu0 0
        %1051 = vmatpush2.bf16.msra.mxu0 0
        %1052 = vmatprep.subr.bf16.mxu0 0
        %1053 = vmatpush2.bf16.msra.mxu0 0
        %1054 = vmatprep.subr.bf16.mxu0 0
        %1055 = vmatpush2.bf16.msra.mxu0 0
        %1056 = vmatprep.subr.bf16.mxu0 0
        %1057 = vmatpush2.bf16.msra.mxu0 0
        %1058 = vmatprep.subr.bf16.mxu0 0
        %1059 = vmatpush2.bf16.msra.mxu0 0
        %1060 = vmatprep.subr.bf16.mxu0 0
        %1061 = vmatpush2.bf16.msra.mxu0 0
        %1062 = vmatprep.subr.bf16.mxu0 0
        %1063 = vmatpush2.bf16.msra.mxu0 0
        %1064 = vmatprep.mubr.bf16.mxu0 0
        %1065 = vmatmul.mubr.bf16.gmra.mxu0 %v965
        %v1066 = vpop.f32.mrf.mxu0
        %v1067 = vadd.f32 0.0, %v1066
        %v1068 = vpop.f32.mrf.mxu0
        %v1069 = vadd.f32 0.0, %v1068
        %v1070 = vpop.f32.mrf.mxu0
        %v1071 = vpop.f32.mrf.mxu0
        %1072 = vdwg.mxu0
        %1073 = vmatprep.subr.bf16.mxu0 0
        %1074 = vmatpush1.bf16.msra.mxu0 0
        %1075 = vmatprep.subr.bf16.mxu0 0
        %1076 = vmatpush1.bf16.msra.mxu0 0
        %1077 = vmatprep.subr.bf16.mxu0 0
        %1078 = vmatpush1.bf16.msra.mxu0 0
        %1079 = vmatprep.subr.bf16.mxu0 0
        %1080 = vmatpush1.bf16.msra.mxu0 0
        %1081 = vmatprep.subr.bf16.mxu0 0
        %1082 = vmatpush1.bf16.msra.mxu0 0
        %1083 = vmatprep.subr.bf16.mxu0 0
        %1084 = vmatpush1.bf16.msra.mxu0 0
        %1085 = vmatprep.subr.bf16.mxu0 0
        %1086 = vmatpush1.bf16.msra.mxu0 0
        %1087 = vmatprep.subr.bf16.mxu0 %v983
        %1088 = vmatpush1.bf16.msra.mxu0 %v980
        %1089 = vmatprep.subr.bf16.mxu0 0
        %1090 = vmatpush2.bf16.msra.mxu0 0
        %1091 = vmatprep.subr.bf16.mxu0 0
        %1092 = vmatpush2.bf16.msra.mxu0 0
        %1093 = vmatprep.subr.bf16.mxu0 0
        %1094 = vmatpush2.bf16.msra.mxu0 0
        %1095 = vmatprep.subr.bf16.mxu0 0
        %1096 = vmatpush2.bf16.msra.mxu0 0
        %1097 = vmatprep.subr.bf16.mxu0 0
        %1098 = vmatpush2.bf16.msra.mxu0 0
        %1099 = vmatprep.subr.bf16.mxu0 0
        %1100 = vmatpush2.bf16.msra.mxu0 0
        %1101 = vmatprep.subr.bf16.mxu0 0
        %1102 = vmatpush2.bf16.msra.mxu0 0
        %1103 = vmatprep.subr.bf16.mxu0 0
        %1104 = vmatpush2.bf16.msra.mxu0 0
        %1105 = vmatprep.mubr.bf16.mxu0 0
        %1106 = vmatmul.mubr.bf16.gmra.mxu0 %v965
        %v1107 = vpop.f32.mrf.mxu0
        %v1108 = vadd.f32 0.0, %v1107
        %v1109 = vpop.f32.mrf.mxu0
        %v1110 = vadd.f32 0.0, %v1109
        %v1111 = vpop.f32.mrf.mxu0
        %v1112 = vpop.f32.mrf.mxu0
        %1113 = vdwg.mxu0
        %1114 = vmatprep.subr.bf16.mxu0 0
        %1115 = vmatpush1.bf16.msra.mxu0 0
        %1116 = vmatprep.subr.bf16.mxu0 0
        %1117 = vmatpush1.bf16.msra.mxu0 0
        %1118 = vmatprep.subr.bf16.mxu0 0
        %1119 = vmatpush1.bf16.msra.mxu0 0
        %1120 = vmatprep.subr.bf16.mxu0 0
        %1121 = vmatpush1.bf16.msra.mxu0 0
        %1122 = vmatprep.subr.bf16.mxu0 0
        %1123 = vmatpush1.bf16.msra.mxu0 0
        %1124 = vmatprep.subr.bf16.mxu0 0
        %1125 = vmatpush1.bf16.msra.mxu0 0
        %1126 = vmatprep.subr.bf16.mxu0 0
        %1127 = vmatpush1.bf16.msra.mxu0 0
        %1128 = vmatprep.subr.bf16.mxu0 %v989
        %1129 = vmatpush1.bf16.msra.mxu0 %v986
        %1130 = vmatprep.subr.bf16.mxu0 0
        %1131 = vmatpush2.bf16.msra.mxu0 0
        %1132 = vmatprep.subr.bf16.mxu0 0
        %1133 = vmatpush2.bf16.msra.mxu0 0
        %1134 = vmatprep.subr.bf16.mxu0 0
        %1135 = vmatpush2.bf16.msra.mxu0 0
        %1136 = vmatprep.subr.bf16.mxu0 0
        %1137 = vmatpush2.bf16.msra.mxu0 0
        %1138 = vmatprep.subr.bf16.mxu0 0
        %1139 = vmatpush2.bf16.msra.mxu0 0
        %1140 = vmatprep.subr.bf16.mxu0 0
        %1141 = vmatpush2.bf16.msra.mxu0 0
        %1142 = vmatprep.subr.bf16.mxu0 0
        %1143 = vmatpush2.bf16.msra.mxu0 0
        %1144 = vmatprep.subr.bf16.mxu0 0
        %1145 = vmatpush2.bf16.msra.mxu0 0
        %1146 = vmatprep.mubr.bf16.mxu0 0
        %1147 = vmatmul.mubr.bf16.gmra.mxu0 %v965
        %v1148 = vpop.f32.mrf.mxu0
        %v1149 = vadd.f32 0.0, %v1148
        %v1150 = vpop.f32.mrf.mxu0
        %v1151 = vadd.f32 0.0, %v1150
        %v1152 = vpop.f32.mrf.mxu0
        %v1153 = vpop.f32.mrf.mxu0
        %1154 = vdwg.mxu0
        %v1155 = vadd.f32 %v929, %v1026
        %v1156 = vadd.f32 %v930, %v1028
        %v1157 = vadd.f32 %v931, %v1067
        %v1158 = vadd.f32 %v932, %v1069
        %v1159 = vadd.f32 %v933, %v1108
        %v1160 = vadd.f32 %v934, %v1110
        %v1161 = vadd.f32 %v935, %v1149
        %v1162 = vadd.f32 %v936, %v1151
        %1163 = vrot.lane.b32.xlu0 %v252, 102
        %v1164 = vpop.permute.xlu0 %1163
        %1165 = vrot.lane.b32.xlu0 %v253, 102
        %v1166 = vpop.permute.xlu0 %1165
        %1167 = vrot.lane.b32.xlu0 %v254, 102
        %v1168 = vpop.permute.xlu0 %1167
        %1169 = vrot.lane.b32.xlu0 %v255, 102
        %v1170 = vpop.permute.xlu0 %1169
        %1171 = vrot.lane.b32.xlu0 %v256, 102
        %v1172 = vpop.permute.xlu0 %1171
        %1173 = vrot.lane.b32.xlu0 %v257, 102
        %v1174 = vpop.permute.xlu0 %1173
        %1175 = vrot.lane.b32.xlu0 %v258, 102
        %v1176 = vpop.permute.xlu0 %1175
        %1177 = vrot.lane.b32.xlu0 %v259, 102
        %v1178 = vpop.permute.xlu0 %1177
        %1179 = vrot.lane.b32.xlu0 %v268, 102
        %v1180 = vpop.permute.xlu0 %1179
        %vm1181 = vcmask 834560
        %v1182 = vsel %vm1181, %v1164, %v1166
        %v1183 = vsel %vm1181, %v1166, %v1168
        %v1184 = vsel %vm1181, %v1168, %v1170
        %v1185 = vsel %vm1181, %v1170, %v1172
        %v1186 = vsel %vm1181, %v1172, %v1174
        %v1187 = vsel %vm1181, %v1174, %v1176
        %v1188 = vsel %vm1181, %v1176, %v1178
        %v1189 = vsel %vm1181, %v1178, %v1180
        %v1191 = vsel %vm327, %v277, 0
        %v1194 = vsel %vm331, %v1182, 0
        %v1197 = vsel %vm331, %v1183, 0
        %v1200 = vsel %vm331, %v1184, 0
        %v1203 = vsel %vm331, %v1185, 0
        %v1206 = vsel %vm331, %v1186, 0
        %v1209 = vsel %vm331, %v1187, 0
        %v1212 = vsel %vm331, %v1188, 0
        %v1215 = vsel %vm331, %v1189, 0
        %1217 = vmatprep.subr.bf16.mxu0 0
        %1218 = vmatpush1.bf16.msra.mxu0 0
        %1219 = vmatprep.subr.bf16.mxu0 0
        %1220 = vmatpush1.bf16.msra.mxu0 0
        %1221 = vmatprep.subr.bf16.mxu0 0
        %1222 = vmatpush1.bf16.msra.mxu0 0
        %1223 = vmatprep.subr.bf16.mxu0 0
        %1224 = vmatpush1.bf16.msra.mxu0 0
        %1225 = vmatprep.subr.bf16.mxu0 0
        %1226 = vmatpush1.bf16.msra.mxu0 0
        %1227 = vmatprep.subr.bf16.mxu0 0
        %1228 = vmatpush1.bf16.msra.mxu0 0
        %1229 = vmatprep.subr.bf16.mxu0 0
        %1230 = vmatpush1.bf16.msra.mxu0 0
        %1231 = vmatprep.subr.bf16.mxu0 %v1197
        %1232 = vmatpush1.bf16.msra.mxu0 %v1194
        %1233 = vmatprep.subr.bf16.mxu0 0
        %1234 = vmatpush2.bf16.msra.mxu0 0
        %1235 = vmatprep.subr.bf16.mxu0 0
        %1236 = vmatpush2.bf16.msra.mxu0 0
        %1237 = vmatprep.subr.bf16.mxu0 0
        %1238 = vmatpush2.bf16.msra.mxu0 0
        %1239 = vmatprep.subr.bf16.mxu0 0
        %1240 = vmatpush2.bf16.msra.mxu0 0
        %1241 = vmatprep.subr.bf16.mxu0 0
        %1242 = vmatpush2.bf16.msra.mxu0 0
        %1243 = vmatprep.subr.bf16.mxu0 0
        %1244 = vmatpush2.bf16.msra.mxu0 0
        %1245 = vmatprep.subr.bf16.mxu0 0
        %1246 = vmatpush2.bf16.msra.mxu0 0
        %1247 = vmatprep.subr.bf16.mxu0 0
        %1248 = vmatpush2.bf16.msra.mxu0 0
        %1249 = vmatprep.mubr.bf16.mxu0 0
        %1250 = vmatmul.mubr.bf16.gmra.mxu0 %v1191
        %v1251 = vpop.f32.mrf.mxu0
        %v1252 = vadd.f32 0.0, %v1251
        %v1253 = vpop.f32.mrf.mxu0
        %v1254 = vadd.f32 0.0, %v1253
        %v1255 = vpop.f32.mrf.mxu0
        %v1256 = vpop.f32.mrf.mxu0
        %1257 = vdwg.mxu0
        %1258 = vmatprep.subr.bf16.mxu0 0
        %1259 = vmatpush1.bf16.msra.mxu0 0
        %1260 = vmatprep.subr.bf16.mxu0 0
        %1261 = vmatpush1.bf16.msra.mxu0 0
        %1262 = vmatprep.subr.bf16.mxu0 0
        %1263 = vmatpush1.bf16.msra.mxu0 0
        %1264 = vmatprep.subr.bf16.mxu0 0
        %1265 = vmatpush1.bf16.msra.mxu0 0
        %1266 = vmatprep.subr.bf16.mxu0 0
        %1267 = vmatpush1.bf16.msra.mxu0 0
        %1268 = vmatprep.subr.bf16.mxu0 0
        %1269 = vmatpush1.bf16.msra.mxu0 0
        %1270 = vmatprep.subr.bf16.mxu0 0
        %1271 = vmatpush1.bf16.msra.mxu0 0
        %1272 = vmatprep.subr.bf16.mxu0 %v1203
        %1273 = vmatpush1.bf16.msra.mxu0 %v1200
        %1274 = vmatprep.subr.bf16.mxu0 0
        %1275 = vmatpush2.bf16.msra.mxu0 0
        %1276 = vmatprep.subr.bf16.mxu0 0
        %1277 = vmatpush2.bf16.msra.mxu0 0
        %1278 = vmatprep.subr.bf16.mxu0 0
        %1279 = vmatpush2.bf16.msra.mxu0 0
        %1280 = vmatprep.subr.bf16.mxu0 0
        %1281 = vmatpush2.bf16.msra.mxu0 0
        %1282 = vmatprep.subr.bf16.mxu0 0
        %1283 = vmatpush2.bf16.msra.mxu0 0
        %1284 = vmatprep.subr.bf16.mxu0 0
        %1285 = vmatpush2.bf16.msra.mxu0 0
        %1286 = vmatprep.subr.bf16.mxu0 0
        %1287 = vmatpush2.bf16.msra.mxu0 0
        %1288 = vmatprep.subr.bf16.mxu0 0
        %1289 = vmatpush2.bf16.msra.mxu0 0
        %1290 = vmatprep.mubr.bf16.mxu0 0
        %1291 = vmatmul.mubr.bf16.gmra.mxu0 %v1191
        %v1292 = vpop.f32.mrf.mxu0
        %v1293 = vadd.f32 0.0, %v1292
        %v1294 = vpop.f32.mrf.mxu0
        %v1295 = vadd.f32 0.0, %v1294
        %v1296 = vpop.f32.mrf.mxu0
        %v1297 = vpop.f32.mrf.mxu0
        %1298 = vdwg.mxu0
        %1299 = vmatprep.subr.bf16.mxu0 0
        %1300 = vmatpush1.bf16.msra.mxu0 0
        %1301 = vmatprep.subr.bf16.mxu0 0
        %1302 = vmatpush1.bf16.msra.mxu0 0
        %1303 = vmatprep.subr.bf16.mxu0 0
        %1304 = vmatpush1.bf16.msra.mxu0 0
        %1305 = vmatprep.subr.bf16.mxu0 0
        %1306 = vmatpush1.bf16.msra.mxu0 0
        %1307 = vmatprep.subr.bf16.mxu0 0
        %1308 = vmatpush1.bf16.msra.mxu0 0
        %1309 = vmatprep.subr.bf16.mxu0 0
        %1310 = vmatpush1.bf16.msra.mxu0 0
        %1311 = vmatprep.subr.bf16.mxu0 0
        %1312 = vmatpush1.bf16.msra.mxu0 0
        %1313 = vmatprep.subr.bf16.mxu0 %v1209
        %1314 = vmatpush1.bf16.msra.mxu0 %v1206
        %1315 = vmatprep.subr.bf16.mxu0 0
        %1316 = vmatpush2.bf16.msra.mxu0 0
        %1317 = vmatprep.subr.bf16.mxu0 0
        %1318 = vmatpush2.bf16.msra.mxu0 0
        %1319 = vmatprep.subr.bf16.mxu0 0
        %1320 = vmatpush2.bf16.msra.mxu0 0
        %1321 = vmatprep.subr.bf16.mxu0 0
        %1322 = vmatpush2.bf16.msra.mxu0 0
        %1323 = vmatprep.subr.bf16.mxu0 0
        %1324 = vmatpush2.bf16.msra.mxu0 0
        %1325 = vmatprep.subr.bf16.mxu0 0
        %1326 = vmatpush2.bf16.msra.mxu0 0
        %1327 = vmatprep.subr.bf16.mxu0 0
        %1328 = vmatpush2.bf16.msra.mxu0 0
        %1329 = vmatprep.subr.bf16.mxu0 0
        %1330 = vmatpush2.bf16.msra.mxu0 0
        %1331 = vmatprep.mubr.bf16.mxu0 0
        %1332 = vmatmul.mubr.bf16.gmra.mxu0 %v1191
        %v1333 = vpop.f32.mrf.mxu0
        %v1334 = vadd.f32 0.0, %v1333
        %v1335 = vpop.f32.mrf.mxu0
        %v1336 = vadd.f32 0.0, %v1335
        %v1337 = vpop.f32.mrf.mxu0
        %v1338 = vpop.f32.mrf.mxu0
        %1339 = vdwg.mxu0
        %1340 = vmatprep.subr.bf16.mxu0 0
        %1341 = vmatpush1.bf16.msra.mxu0 0
        %1342 = vmatprep.subr.bf16.mxu0 0
        %1343 = vmatpush1.bf16.msra.mxu0 0
        %1344 = vmatprep.subr.bf16.mxu0 0
        %1345 = vmatpush1.bf16.msra.mxu0 0
        %1346 = vmatprep.subr.bf16.mxu0 0
        %1347 = vmatpush1.bf16.msra.mxu0 0
        %1348 = vmatprep.subr.bf16.mxu0 0
        %1349 = vmatpush1.bf16.msra.mxu0 0
        %1350 = vmatprep.subr.bf16.mxu0 0
        %1351 = vmatpush1.bf16.msra.mxu0 0
        %1352 = vmatprep.subr.bf16.mxu0 0
        %1353 = vmatpush1.bf16.msra.mxu0 0
        %1354 = vmatprep.subr.bf16.mxu0 %v1215
        %1355 = vmatpush1.bf16.msra.mxu0 %v1212
        %1356 = vmatprep.subr.bf16.mxu0 0
        %1357 = vmatpush2.bf16.msra.mxu0 0
        %1358 = vmatprep.subr.bf16.mxu0 0
        %1359 = vmatpush2.bf16.msra.mxu0 0
        %1360 = vmatprep.subr.bf16.mxu0 0
        %1361 = vmatpush2.bf16.msra.mxu0 0
        %1362 = vmatprep.subr.bf16.mxu0 0
        %1363 = vmatpush2.bf16.msra.mxu0 0
        %1364 = vmatprep.subr.bf16.mxu0 0
        %1365 = vmatpush2.bf16.msra.mxu0 0
        %1366 = vmatprep.subr.bf16.mxu0 0
        %1367 = vmatpush2.bf16.msra.mxu0 0
        %1368 = vmatprep.subr.bf16.mxu0 0
        %1369 = vmatpush2.bf16.msra.mxu0 0
        %1370 = vmatprep.subr.bf16.mxu0 0
        %1371 = vmatpush2.bf16.msra.mxu0 0
        %1372 = vmatprep.mubr.bf16.mxu0 0
        %1373 = vmatmul.mubr.bf16.gmra.mxu0 %v1191
        %v1374 = vpop.f32.mrf.mxu0
        %v1375 = vadd.f32 0.0, %v1374
        %v1376 = vpop.f32.mrf.mxu0
        %v1377 = vadd.f32 0.0, %v1376
        %v1378 = vpop.f32.mrf.mxu0
        %v1379 = vpop.f32.mrf.mxu0
        %1380 = vdwg.mxu0
        %v1381 = vadd.f32 %v1155, %v1252
        %v1382 = vadd.f32 %v1156, %v1254
        %v1383 = vadd.f32 %v1157, %v1293
        %v1384 = vadd.f32 %v1158, %v1295
        %v1385 = vadd.f32 %v1159, %v1334
        %v1386 = vadd.f32 %v1160, %v1336
        %v1387 = vadd.f32 %v1161, %v1375
        %v1388 = vadd.f32 %v1162, %v1377
        %1389 = vrot.lane.b32.xlu0 %v252, 100
        %v1390 = vpop.permute.xlu0 %1389
        %1391 = vrot.lane.b32.xlu0 %v253, 100
        %v1392 = vpop.permute.xlu0 %1391
        %1393 = vrot.lane.b32.xlu0 %v254, 100
        %v1394 = vpop.permute.xlu0 %1393
        %1395 = vrot.lane.b32.xlu0 %v255, 100
        %v1396 = vpop.permute.xlu0 %1395
        %1397 = vrot.lane.b32.xlu0 %v256, 100
        %v1398 = vpop.permute.xlu0 %1397
        %1399 = vrot.lane.b32.xlu0 %v257, 100
        %v1400 = vpop.permute.xlu0 %1399
        %1401 = vrot.lane.b32.xlu0 %v258, 100
        %v1402 = vpop.permute.xlu0 %1401
        %1403 = vrot.lane.b32.xlu0 %v259, 100
        %v1404 = vpop.permute.xlu0 %1403
        %1405 = vrot.lane.b32.xlu0 %v268, 100
        %v1406 = vpop.permute.xlu0 %1405
        %vm1407 = vcmask 818176
        %v1408 = vsel %vm1407, %v1390, %v1392
        %v1409 = vsel %vm1407, %v1392, %v1394
        %v1410 = vsel %vm1407, %v1394, %v1396
        %v1411 = vsel %vm1407, %v1396, %v1398
        %v1412 = vsel %vm1407, %v1398, %v1400
        %v1413 = vsel %vm1407, %v1400, %v1402
        %v1414 = vsel %vm1407, %v1402, %v1404
        %v1415 = vsel %vm1407, %v1404, %v1406
        %v1417 = vsel %vm327, %v278, 0
        %v1420 = vsel %vm331, %v1408, 0
        %v1423 = vsel %vm331, %v1409, 0
        %v1426 = vsel %vm331, %v1410, 0
        %v1429 = vsel %vm331, %v1411, 0
        %v1432 = vsel %vm331, %v1412, 0
        %v1435 = vsel %vm331, %v1413, 0
        %v1438 = vsel %vm331, %v1414, 0
        %v1441 = vsel %vm331, %v1415, 0
        %1443 = vmatprep.subr.bf16.mxu0 0
        %1444 = vmatpush1.bf16.msra.mxu0 0
        %1445 = vmatprep.subr.bf16.mxu0 0
        %1446 = vmatpush1.bf16.msra.mxu0 0
        %1447 = vmatprep.subr.bf16.mxu0 0
        %1448 = vmatpush1.bf16.msra.mxu0 0
        %1449 = vmatprep.subr.bf16.mxu0 0
        %1450 = vmatpush1.bf16.msra.mxu0 0
        %1451 = vmatprep.subr.bf16.mxu0 0
        %1452 = vmatpush1.bf16.msra.mxu0 0
        %1453 = vmatprep.subr.bf16.mxu0 0
        %1454 = vmatpush1.bf16.msra.mxu0 0
        %1455 = vmatprep.subr.bf16.mxu0 0
        %1456 = vmatpush1.bf16.msra.mxu0 0
        %1457 = vmatprep.subr.bf16.mxu0 %v1423
        %1458 = vmatpush1.bf16.msra.mxu0 %v1420
        %1459 = vmatprep.subr.bf16.mxu0 0
        %1460 = vmatpush2.bf16.msra.mxu0 0
        %1461 = vmatprep.subr.bf16.mxu0 0
        %1462 = vmatpush2.bf16.msra.mxu0 0
        %1463 = vmatprep.subr.bf16.mxu0 0
        %1464 = vmatpush2.bf16.msra.mxu0 0
        %1465 = vmatprep.subr.bf16.mxu0 0
        %1466 = vmatpush2.bf16.msra.mxu0 0
        %1467 = vmatprep.subr.bf16.mxu0 0
        %1468 = vmatpush2.bf16.msra.mxu0 0
        %1469 = vmatprep.subr.bf16.mxu0 0
        %1470 = vmatpush2.bf16.msra.mxu0 0
        %1471 = vmatprep.subr.bf16.mxu0 0
        %1472 = vmatpush2.bf16.msra.mxu0 0
        %1473 = vmatprep.subr.bf16.mxu0 0
        %1474 = vmatpush2.bf16.msra.mxu0 0
        %1475 = vmatprep.mubr.bf16.mxu0 0
        %1476 = vmatmul.mubr.bf16.gmra.mxu0 %v1417
        %v1477 = vpop.f32.mrf.mxu0
        %v1478 = vadd.f32 0.0, %v1477
        %v1479 = vpop.f32.mrf.mxu0
        %v1480 = vadd.f32 0.0, %v1479
        %v1481 = vpop.f32.mrf.mxu0
        %v1482 = vpop.f32.mrf.mxu0
        %1483 = vdwg.mxu0
        %1484 = vmatprep.subr.bf16.mxu0 0
        %1485 = vmatpush1.bf16.msra.mxu0 0
        %1486 = vmatprep.subr.bf16.mxu0 0
        %1487 = vmatpush1.bf16.msra.mxu0 0
        %1488 = vmatprep.subr.bf16.mxu0 0
        %1489 = vmatpush1.bf16.msra.mxu0 0
        %1490 = vmatprep.subr.bf16.mxu0 0
        %1491 = vmatpush1.bf16.msra.mxu0 0
        %1492 = vmatprep.subr.bf16.mxu0 0
        %1493 = vmatpush1.bf16.msra.mxu0 0
        %1494 = vmatprep.subr.bf16.mxu0 0
        %1495 = vmatpush1.bf16.msra.mxu0 0
        %1496 = vmatprep.subr.bf16.mxu0 0
        %1497 = vmatpush1.bf16.msra.mxu0 0
        %1498 = vmatprep.subr.bf16.mxu0 %v1429
        %1499 = vmatpush1.bf16.msra.mxu0 %v1426
        %1500 = vmatprep.subr.bf16.mxu0 0
        %1501 = vmatpush2.bf16.msra.mxu0 0
        %1502 = vmatprep.subr.bf16.mxu0 0
        %1503 = vmatpush2.bf16.msra.mxu0 0
        %1504 = vmatprep.subr.bf16.mxu0 0
        %1505 = vmatpush2.bf16.msra.mxu0 0
        %1506 = vmatprep.subr.bf16.mxu0 0
        %1507 = vmatpush2.bf16.msra.mxu0 0
        %1508 = vmatprep.subr.bf16.mxu0 0
        %1509 = vmatpush2.bf16.msra.mxu0 0
        %1510 = vmatprep.subr.bf16.mxu0 0
        %1511 = vmatpush2.bf16.msra.mxu0 0
        %1512 = vmatprep.subr.bf16.mxu0 0
        %1513 = vmatpush2.bf16.msra.mxu0 0
        %1514 = vmatprep.subr.bf16.mxu0 0
        %1515 = vmatpush2.bf16.msra.mxu0 0
        %1516 = vmatprep.mubr.bf16.mxu0 0
        %1517 = vmatmul.mubr.bf16.gmra.mxu0 %v1417
        %v1518 = vpop.f32.mrf.mxu0
        %v1519 = vadd.f32 0.0, %v1518
        %v1520 = vpop.f32.mrf.mxu0
        %v1521 = vadd.f32 0.0, %v1520
        %v1522 = vpop.f32.mrf.mxu0
        %v1523 = vpop.f32.mrf.mxu0
        %1524 = vdwg.mxu0
        %1525 = vmatprep.subr.bf16.mxu0 0
        %1526 = vmatpush1.bf16.msra.mxu0 0
        %1527 = vmatprep.subr.bf16.mxu0 0
        %1528 = vmatpush1.bf16.msra.mxu0 0
        %1529 = vmatprep.subr.bf16.mxu0 0
        %1530 = vmatpush1.bf16.msra.mxu0 0
        %1531 = vmatprep.subr.bf16.mxu0 0
        %1532 = vmatpush1.bf16.msra.mxu0 0
        %1533 = vmatprep.subr.bf16.mxu0 0
        %1534 = vmatpush1.bf16.msra.mxu0 0
        %1535 = vmatprep.subr.bf16.mxu0 0
        %1536 = vmatpush1.bf16.msra.mxu0 0
        %1537 = vmatprep.subr.bf16.mxu0 0
        %1538 = vmatpush1.bf16.msra.mxu0 0
        %1539 = vmatprep.subr.bf16.mxu0 %v1435
        %1540 = vmatpush1.bf16.msra.mxu0 %v1432
        %1541 = vmatprep.subr.bf16.mxu0 0
        %1542 = vmatpush2.bf16.msra.mxu0 0
        %1543 = vmatprep.subr.bf16.mxu0 0
        %1544 = vmatpush2.bf16.msra.mxu0 0
        %1545 = vmatprep.subr.bf16.mxu0 0
        %1546 = vmatpush2.bf16.msra.mxu0 0
        %1547 = vmatprep.subr.bf16.mxu0 0
        %1548 = vmatpush2.bf16.msra.mxu0 0
        %1549 = vmatprep.subr.bf16.mxu0 0
        %1550 = vmatpush2.bf16.msra.mxu0 0
        %1551 = vmatprep.subr.bf16.mxu0 0
        %1552 = vmatpush2.bf16.msra.mxu0 0
        %1553 = vmatprep.subr.bf16.mxu0 0
        %1554 = vmatpush2.bf16.msra.mxu0 0
        %1555 = vmatprep.subr.bf16.mxu0 0
        %1556 = vmatpush2.bf16.msra.mxu0 0
        %1557 = vmatprep.mubr.bf16.mxu0 0
        %1558 = vmatmul.mubr.bf16.gmra.mxu0 %v1417
        %v1559 = vpop.f32.mrf.mxu0
        %v1560 = vadd.f32 0.0, %v1559
        %v1561 = vpop.f32.mrf.mxu0
        %v1562 = vadd.f32 0.0, %v1561
        %v1563 = vpop.f32.mrf.mxu0
        %v1564 = vpop.f32.mrf.mxu0
        %1565 = vdwg.mxu0
        %1566 = vmatprep.subr.bf16.mxu0 0
        %1567 = vmatpush1.bf16.msra.mxu0 0
        %1568 = vmatprep.subr.bf16.mxu0 0
        %1569 = vmatpush1.bf16.msra.mxu0 0
        %1570 = vmatprep.subr.bf16.mxu0 0
        %1571 = vmatpush1.bf16.msra.mxu0 0
        %1572 = vmatprep.subr.bf16.mxu0 0
        %1573 = vmatpush1.bf16.msra.mxu0 0
        %1574 = vmatprep.subr.bf16.mxu0 0
        %1575 = vmatpush1.bf16.msra.mxu0 0
        %1576 = vmatprep.subr.bf16.mxu0 0
        %1577 = vmatpush1.bf16.msra.mxu0 0
        %1578 = vmatprep.subr.bf16.mxu0 0
        %1579 = vmatpush1.bf16.msra.mxu0 0
        %1580 = vmatprep.subr.bf16.mxu0 %v1441
        %1581 = vmatpush1.bf16.msra.mxu0 %v1438
        %1582 = vmatprep.subr.bf16.mxu0 0
        %1583 = vmatpush2.bf16.msra.mxu0 0
        %1584 = vmatprep.subr.bf16.mxu0 0
        %1585 = vmatpush2.bf16.msra.mxu0 0
        %1586 = vmatprep.subr.bf16.mxu0 0
        %1587 = vmatpush2.bf16.msra.mxu0 0
        %1588 = vmatprep.subr.bf16.mxu0 0
        %1589 = vmatpush2.bf16.msra.mxu0 0
        %1590 = vmatprep.subr.bf16.mxu0 0
        %1591 = vmatpush2.bf16.msra.mxu0 0
        %1592 = vmatprep.subr.bf16.mxu0 0
        %1593 = vmatpush2.bf16.msra.mxu0 0
        %1594 = vmatprep.subr.bf16.mxu0 0
        %1595 = vmatpush2.bf16.msra.mxu0 0
        %1596 = vmatprep.subr.bf16.mxu0 0
        %1597 = vmatpush2.bf16.msra.mxu0 0
        %1598 = vmatprep.mubr.bf16.mxu0 0
        %1599 = vmatmul.mubr.bf16.gmra.mxu0 %v1417
        %v1600 = vpop.f32.mrf.mxu0
        %v1601 = vadd.f32 0.0, %v1600
        %v1602 = vpop.f32.mrf.mxu0
        %v1603 = vadd.f32 0.0, %v1602
        %v1604 = vpop.f32.mrf.mxu0
        %v1605 = vpop.f32.mrf.mxu0
        %1606 = vdwg.mxu0
        %v1607 = vadd.f32 %v1381, %v1478
        %v1608 = vadd.f32 %v1382, %v1480
        %v1609 = vadd.f32 %v1383, %v1519
        %v1610 = vadd.f32 %v1384, %v1521
        %v1611 = vadd.f32 %v1385, %v1560
        %v1612 = vadd.f32 %v1386, %v1562
        %v1613 = vadd.f32 %v1387, %v1601
        %v1614 = vadd.f32 %v1388, %v1603
        %1615 = vrot.lane.b32.xlu0 %v252, 80
        %v1616 = vpop.permute.xlu0 %1615
        %1617 = vrot.lane.b32.xlu0 %v253, 80
        %v1618 = vpop.permute.xlu0 %1617
        %1619 = vrot.lane.b32.xlu0 %v254, 80
        %v1620 = vpop.permute.xlu0 %1619
        %1621 = vrot.lane.b32.xlu0 %v255, 80
        %v1622 = vpop.permute.xlu0 %1621
        %1623 = vrot.lane.b32.xlu0 %v256, 80
        %v1624 = vpop.permute.xlu0 %1623
        %1625 = vrot.lane.b32.xlu0 %v257, 80
        %v1626 = vpop.permute.xlu0 %1625
        %1627 = vrot.lane.b32.xlu0 %v258, 80
        %v1628 = vpop.permute.xlu0 %1627
        %1629 = vrot.lane.b32.xlu0 %v259, 80
        %v1630 = vpop.permute.xlu0 %1629
        %1631 = vrot.lane.b32.xlu0 %v268, 80
        %v1632 = vpop.permute.xlu0 %1631
        %vm1633 = vcmask 654336
        %v1634 = vsel %vm1633, %v1616, %v1618
        %v1635 = vsel %vm1633, %v1618, %v1620
        %v1636 = vsel %vm1633, %v1620, %v1622
        %v1637 = vsel %vm1633, %v1622, %v1624
        %v1638 = vsel %vm1633, %v1624, %v1626
        %v1639 = vsel %vm1633, %v1626, %v1628
        %v1640 = vsel %vm1633, %v1628, %v1630
        %v1641 = vsel %vm1633, %v1630, %v1632
        %v1643 = vsel %vm327, %v279, 0
        %v1646 = vsel %vm331, %v1634, 0
        %v1649 = vsel %vm331, %v1635, 0
        %v1652 = vsel %vm331, %v1636, 0
        %v1655 = vsel %vm331, %v1637, 0
        %v1658 = vsel %vm331, %v1638, 0
        %v1661 = vsel %vm331, %v1639, 0
        %v1664 = vsel %vm331, %v1640, 0
        %v1667 = vsel %vm331, %v1641, 0
        %1669 = vmatprep.subr.bf16.mxu0 0
        %1670 = vmatpush1.bf16.msra.mxu0 0
        %1671 = vmatprep.subr.bf16.mxu0 0
        %1672 = vmatpush1.bf16.msra.mxu0 0
        %1673 = vmatprep.subr.bf16.mxu0 0
        %1674 = vmatpush1.bf16.msra.mxu0 0
        %1675 = vmatprep.subr.bf16.mxu0 0
        %1676 = vmatpush1.bf16.msra.mxu0 0
        %1677 = vmatprep.subr.bf16.mxu0 0
        %1678 = vmatpush1.bf16.msra.mxu0 0
        %1679 = vmatprep.subr.bf16.mxu0 0
        %1680 = vmatpush1.bf16.msra.mxu0 0
        %1681 = vmatprep.subr.bf16.mxu0 0
        %1682 = vmatpush1.bf16.msra.mxu0 0
        %1683 = vmatprep.subr.bf16.mxu0 %v1649
        %1684 = vmatpush1.bf16.msra.mxu0 %v1646
        %1685 = vmatprep.subr.bf16.mxu0 0
        %1686 = vmatpush2.bf16.msra.mxu0 0
        %1687 = vmatprep.subr.bf16.mxu0 0
        %1688 = vmatpush2.bf16.msra.mxu0 0
        %1689 = vmatprep.subr.bf16.mxu0 0
        %1690 = vmatpush2.bf16.msra.mxu0 0
        %1691 = vmatprep.subr.bf16.mxu0 0
        %1692 = vmatpush2.bf16.msra.mxu0 0
        %1693 = vmatprep.subr.bf16.mxu0 0
        %1694 = vmatpush2.bf16.msra.mxu0 0
        %1695 = vmatprep.subr.bf16.mxu0 0
        %1696 = vmatpush2.bf16.msra.mxu0 0
        %1697 = vmatprep.subr.bf16.mxu0 0
        %1698 = vmatpush2.bf16.msra.mxu0 0
        %1699 = vmatprep.subr.bf16.mxu0 0
        %1700 = vmatpush2.bf16.msra.mxu0 0
        %1701 = vmatprep.mubr.bf16.mxu0 0
        %1702 = vmatmul.mubr.bf16.gmra.mxu0 %v1643
        %v1703 = vpop.f32.mrf.mxu0
        %v1704 = vadd.f32 0.0, %v1703
        %v1705 = vpop.f32.mrf.mxu0
        %v1706 = vadd.f32 0.0, %v1705
        %v1707 = vpop.f32.mrf.mxu0
        %v1708 = vpop.f32.mrf.mxu0
        %1709 = vdwg.mxu0
        %1710 = vmatprep.subr.bf16.mxu0 0
        %1711 = vmatpush1.bf16.msra.mxu0 0
        %1712 = vmatprep.subr.bf16.mxu0 0
        %1713 = vmatpush1.bf16.msra.mxu0 0
        %1714 = vmatprep.subr.bf16.mxu0 0
        %1715 = vmatpush1.bf16.msra.mxu0 0
        %1716 = vmatprep.subr.bf16.mxu0 0
        %1717 = vmatpush1.bf16.msra.mxu0 0
        %1718 = vmatprep.subr.bf16.mxu0 0
        %1719 = vmatpush1.bf16.msra.mxu0 0
        %1720 = vmatprep.subr.bf16.mxu0 0
        %1721 = vmatpush1.bf16.msra.mxu0 0
        %1722 = vmatprep.subr.bf16.mxu0 0
        %1723 = vmatpush1.bf16.msra.mxu0 0
        %1724 = vmatprep.subr.bf16.mxu0 %v1655
        %1725 = vmatpush1.bf16.msra.mxu0 %v1652
        %1726 = vmatprep.subr.bf16.mxu0 0
        %1727 = vmatpush2.bf16.msra.mxu0 0
        %1728 = vmatprep.subr.bf16.mxu0 0
        %1729 = vmatpush2.bf16.msra.mxu0 0
        %1730 = vmatprep.subr.bf16.mxu0 0
        %1731 = vmatpush2.bf16.msra.mxu0 0
        %1732 = vmatprep.subr.bf16.mxu0 0
        %1733 = vmatpush2.bf16.msra.mxu0 0
        %1734 = vmatprep.subr.bf16.mxu0 0
        %1735 = vmatpush2.bf16.msra.mxu0 0
        %1736 = vmatprep.subr.bf16.mxu0 0
        %1737 = vmatpush2.bf16.msra.mxu0 0
        %1738 = vmatprep.subr.bf16.mxu0 0
        %1739 = vmatpush2.bf16.msra.mxu0 0
        %1740 = vmatprep.subr.bf16.mxu0 0
        %1741 = vmatpush2.bf16.msra.mxu0 0
        %1742 = vmatprep.mubr.bf16.mxu0 0
        %1743 = vmatmul.mubr.bf16.gmra.mxu0 %v1643
        %v1744 = vpop.f32.mrf.mxu0
        %v1745 = vadd.f32 0.0, %v1744
        %v1746 = vpop.f32.mrf.mxu0
        %v1747 = vadd.f32 0.0, %v1746
        %v1748 = vpop.f32.mrf.mxu0
        %v1749 = vpop.f32.mrf.mxu0
        %1750 = vdwg.mxu0
        %1751 = vmatprep.subr.bf16.mxu0 0
        %1752 = vmatpush1.bf16.msra.mxu0 0
        %1753 = vmatprep.subr.bf16.mxu0 0
        %1754 = vmatpush1.bf16.msra.mxu0 0
        %1755 = vmatprep.subr.bf16.mxu0 0
        %1756 = vmatpush1.bf16.msra.mxu0 0
        %1757 = vmatprep.subr.bf16.mxu0 0
        %1758 = vmatpush1.bf16.msra.mxu0 0
        %1759 = vmatprep.subr.bf16.mxu0 0
        %1760 = vmatpush1.bf16.msra.mxu0 0
        %1761 = vmatprep.subr.bf16.mxu0 0
        %1762 = vmatpush1.bf16.msra.mxu0 0
        %1763 = vmatprep.subr.bf16.mxu0 0
        %1764 = vmatpush1.bf16.msra.mxu0 0
        %1765 = vmatprep.subr.bf16.mxu0 %v1661
        %1766 = vmatpush1.bf16.msra.mxu0 %v1658
        %1767 = vmatprep.subr.bf16.mxu0 0
        %1768 = vmatpush2.bf16.msra.mxu0 0
        %1769 = vmatprep.subr.bf16.mxu0 0
        %1770 = vmatpush2.bf16.msra.mxu0 0
        %1771 = vmatprep.subr.bf16.mxu0 0
        %1772 = vmatpush2.bf16.msra.mxu0 0
        %1773 = vmatprep.subr.bf16.mxu0 0
        %1774 = vmatpush2.bf16.msra.mxu0 0
        %1775 = vmatprep.subr.bf16.mxu0 0
        %1776 = vmatpush2.bf16.msra.mxu0 0
        %1777 = vmatprep.subr.bf16.mxu0 0
        %1778 = vmatpush2.bf16.msra.mxu0 0
        %1779 = vmatprep.subr.bf16.mxu0 0
        %1780 = vmatpush2.bf16.msra.mxu0 0
        %1781 = vmatprep.subr.bf16.mxu0 0
        %1782 = vmatpush2.bf16.msra.mxu0 0
        %1783 = vmatprep.mubr.bf16.mxu0 0
        %1784 = vmatmul.mubr.bf16.gmra.mxu0 %v1643
        %v1785 = vpop.f32.mrf.mxu0
        %v1786 = vadd.f32 0.0, %v1785
        %v1787 = vpop.f32.mrf.mxu0
        %v1788 = vadd.f32 0.0, %v1787
        %v1789 = vpop.f32.mrf.mxu0
        %v1790 = vpop.f32.mrf.mxu0
        %1791 = vdwg.mxu0
        %1792 = vmatprep.subr.bf16.mxu0 0
        %1793 = vmatpush1.bf16.msra.mxu0 0
        %1794 = vmatprep.subr.bf16.mxu0 0
        %1795 = vmatpush1.bf16.msra.mxu0 0
        %1796 = vmatprep.subr.bf16.mxu0 0
        %1797 = vmatpush1.bf16.msra.mxu0 0
        %1798 = vmatprep.subr.bf16.mxu0 0
        %1799 = vmatpush1.bf16.msra.mxu0 0
        %1800 = vmatprep.subr.bf16.mxu0 0
        %1801 = vmatpush1.bf16.msra.mxu0 0
        %1802 = vmatprep.subr.bf16.mxu0 0
        %1803 = vmatpush1.bf16.msra.mxu0 0
        %1804 = vmatprep.subr.bf16.mxu0 0
        %1805 = vmatpush1.bf16.msra.mxu0 0
        %1806 = vmatprep.subr.bf16.mxu0 %v1667
        %1807 = vmatpush1.bf16.msra.mxu0 %v1664
        %1808 = vmatprep.subr.bf16.mxu0 0
        %1809 = vmatpush2.bf16.msra.mxu0 0
        %1810 = vmatprep.subr.bf16.mxu0 0
        %1811 = vmatpush2.bf16.msra.mxu0 0
        %1812 = vmatprep.subr.bf16.mxu0 0
        %1813 = vmatpush2.bf16.msra.mxu0 0
        %1814 = vmatprep.subr.bf16.mxu0 0
        %1815 = vmatpush2.bf16.msra.mxu0 0
        %1816 = vmatprep.subr.bf16.mxu0 0
        %1817 = vmatpush2.bf16.msra.mxu0 0
        %1818 = vmatprep.subr.bf16.mxu0 0
        %1819 = vmatpush2.bf16.msra.mxu0 0
        %1820 = vmatprep.subr.bf16.mxu0 0
        %1821 = vmatpush2.bf16.msra.mxu0 0
        %1822 = vmatprep.subr.bf16.mxu0 0
        %1823 = vmatpush2.bf16.msra.mxu0 0
        %1824 = vmatprep.mubr.bf16.mxu0 0
        %1825 = vmatmul.mubr.bf16.gmra.mxu0 %v1643
        %v1826 = vpop.f32.mrf.mxu0
        %v1827 = vadd.f32 0.0, %v1826
        %v1828 = vpop.f32.mrf.mxu0
        %v1829 = vadd.f32 0.0, %v1828
        %v1830 = vpop.f32.mrf.mxu0
        %v1831 = vpop.f32.mrf.mxu0
        %1832 = vdwg.mxu0
        %v1833 = vadd.f32 %v1607, %v1704
        %v1834 = vadd.f32 %v1608, %v1706
        %v1835 = vadd.f32 %v1609, %v1745
        %v1836 = vadd.f32 %v1610, %v1747
        %v1837 = vadd.f32 %v1611, %v1786
        %v1838 = vadd.f32 %v1612, %v1788
        %v1839 = vadd.f32 %v1613, %v1827
        %v1840 = vadd.f32 %v1614, %v1829
        %1841 = vrot.lane.b32.xlu0 %v252, 78
        %v1842 = vpop.permute.xlu0 %1841
        %1843 = vrot.lane.b32.xlu0 %v253, 78
        %v1844 = vpop.permute.xlu0 %1843
        %1845 = vrot.lane.b32.xlu0 %v254, 78
        %v1846 = vpop.permute.xlu0 %1845
        %1847 = vrot.lane.b32.xlu0 %v255, 78
        %v1848 = vpop.permute.xlu0 %1847
        %1849 = vrot.lane.b32.xlu0 %v256, 78
        %v1850 = vpop.permute.xlu0 %1849
        %1851 = vrot.lane.b32.xlu0 %v257, 78
        %v1852 = vpop.permute.xlu0 %1851
        %1853 = vrot.lane.b32.xlu0 %v258, 78
        %v1854 = vpop.permute.xlu0 %1853
        %1855 = vrot.lane.b32.xlu0 %v259, 78
        %v1856 = vpop.permute.xlu0 %1855
        %1857 = vrot.lane.b32.xlu0 %v268, 78
        %v1858 = vpop.permute.xlu0 %1857
        %vm1859 = vcmask 637952
        %v1860 = vsel %vm1859, %v1842, %v1844
        %v1861 = vsel %vm1859, %v1844, %v1846
        %v1862 = vsel %vm1859, %v1846, %v1848
        %v1863 = vsel %vm1859, %v1848, %v1850
        %v1864 = vsel %vm1859, %v1850, %v1852
        %v1865 = vsel %vm1859, %v1852, %v1854
        %v1866 = vsel %vm1859, %v1854, %v1856
        %v1867 = vsel %vm1859, %v1856, %v1858
        %v1869 = vsel %vm327, %v280, 0
        %v1872 = vsel %vm331, %v1860, 0
        %v1875 = vsel %vm331, %v1861, 0
        %v1878 = vsel %vm331, %v1862, 0
        %v1881 = vsel %vm331, %v1863, 0
        %v1884 = vsel %vm331, %v1864, 0
        %v1887 = vsel %vm331, %v1865, 0
        %v1890 = vsel %vm331, %v1866, 0
        %v1893 = vsel %vm331, %v1867, 0
        %1895 = vmatprep.subr.bf16.mxu0 0
        %1896 = vmatpush1.bf16.msra.mxu0 0
        %1897 = vmatprep.subr.bf16.mxu0 0
        %1898 = vmatpush1.bf16.msra.mxu0 0
        %1899 = vmatprep.subr.bf16.mxu0 0
        %1900 = vmatpush1.bf16.msra.mxu0 0
        %1901 = vmatprep.subr.bf16.mxu0 0
        %1902 = vmatpush1.bf16.msra.mxu0 0
        %1903 = vmatprep.subr.bf16.mxu0 0
        %1904 = vmatpush1.bf16.msra.mxu0 0
        %1905 = vmatprep.subr.bf16.mxu0 0
        %1906 = vmatpush1.bf16.msra.mxu0 0
        %1907 = vmatprep.subr.bf16.mxu0 0
        %1908 = vmatpush1.bf16.msra.mxu0 0
        %1909 = vmatprep.subr.bf16.mxu0 %v1875
        %1910 = vmatpush1.bf16.msra.mxu0 %v1872
        %1911 = vmatprep.subr.bf16.mxu0 0
        %1912 = vmatpush2.bf16.msra.mxu0 0
        %1913 = vmatprep.subr.bf16.mxu0 0
        %1914 = vmatpush2.bf16.msra.mxu0 0
        %1915 = vmatprep.subr.bf16.mxu0 0
        %1916 = vmatpush2.bf16.msra.mxu0 0
        %1917 = vmatprep.subr.bf16.mxu0 0
        %1918 = vmatpush2.bf16.msra.mxu0 0
        %1919 = vmatprep.subr.bf16.mxu0 0
        %1920 = vmatpush2.bf16.msra.mxu0 0
        %1921 = vmatprep.subr.bf16.mxu0 0
        %1922 = vmatpush2.bf16.msra.mxu0 0
        %1923 = vmatprep.subr.bf16.mxu0 0
        %1924 = vmatpush2.bf16.msra.mxu0 0
        %1925 = vmatprep.subr.bf16.mxu0 0
        %1926 = vmatpush2.bf16.msra.mxu0 0
        %1927 = vmatprep.mubr.bf16.mxu0 0
        %1928 = vmatmul.mubr.bf16.gmra.mxu0 %v1869
        %v1929 = vpop.f32.mrf.mxu0
        %v1930 = vadd.f32 0.0, %v1929
        %v1931 = vpop.f32.mrf.mxu0
        %v1932 = vadd.f32 0.0, %v1931
        %v1933 = vpop.f32.mrf.mxu0
        %v1934 = vpop.f32.mrf.mxu0
        %1935 = vdwg.mxu0
        %1936 = vmatprep.subr.bf16.mxu0 0
        %1937 = vmatpush1.bf16.msra.mxu0 0
        %1938 = vmatprep.subr.bf16.mxu0 0
        %1939 = vmatpush1.bf16.msra.mxu0 0
        %1940 = vmatprep.subr.bf16.mxu0 0
        %1941 = vmatpush1.bf16.msra.mxu0 0
        %1942 = vmatprep.subr.bf16.mxu0 0
        %1943 = vmatpush1.bf16.msra.mxu0 0
        %1944 = vmatprep.subr.bf16.mxu0 0
        %1945 = vmatpush1.bf16.msra.mxu0 0
        %1946 = vmatprep.subr.bf16.mxu0 0
        %1947 = vmatpush1.bf16.msra.mxu0 0
        %1948 = vmatprep.subr.bf16.mxu0 0
        %1949 = vmatpush1.bf16.msra.mxu0 0
        %1950 = vmatprep.subr.bf16.mxu0 %v1881
        %1951 = vmatpush1.bf16.msra.mxu0 %v1878
        %1952 = vmatprep.subr.bf16.mxu0 0
        %1953 = vmatpush2.bf16.msra.mxu0 0
        %1954 = vmatprep.subr.bf16.mxu0 0
        %1955 = vmatpush2.bf16.msra.mxu0 0
        %1956 = vmatprep.subr.bf16.mxu0 0
        %1957 = vmatpush2.bf16.msra.mxu0 0
        %1958 = vmatprep.subr.bf16.mxu0 0
        %1959 = vmatpush2.bf16.msra.mxu0 0
        %1960 = vmatprep.subr.bf16.mxu0 0
        %1961 = vmatpush2.bf16.msra.mxu0 0
        %1962 = vmatprep.subr.bf16.mxu0 0
        %1963 = vmatpush2.bf16.msra.mxu0 0
        %1964 = vmatprep.subr.bf16.mxu0 0
        %1965 = vmatpush2.bf16.msra.mxu0 0
        %1966 = vmatprep.subr.bf16.mxu0 0
        %1967 = vmatpush2.bf16.msra.mxu0 0
        %1968 = vmatprep.mubr.bf16.mxu0 0
        %1969 = vmatmul.mubr.bf16.gmra.mxu0 %v1869
        %v1970 = vpop.f32.mrf.mxu0
        %v1971 = vadd.f32 0.0, %v1970
        %v1972 = vpop.f32.mrf.mxu0
        %v1973 = vadd.f32 0.0, %v1972
        %v1974 = vpop.f32.mrf.mxu0
        %v1975 = vpop.f32.mrf.mxu0
        %1976 = vdwg.mxu0
        %1977 = vmatprep.subr.bf16.mxu0 0
        %1978 = vmatpush1.bf16.msra.mxu0 0
        %1979 = vmatprep.subr.bf16.mxu0 0
        %1980 = vmatpush1.bf16.msra.mxu0 0
        %1981 = vmatprep.subr.bf16.mxu0 0
        %1982 = vmatpush1.bf16.msra.mxu0 0
        %1983 = vmatprep.subr.bf16.mxu0 0
        %1984 = vmatpush1.bf16.msra.mxu0 0
        %1985 = vmatprep.subr.bf16.mxu0 0
        %1986 = vmatpush1.bf16.msra.mxu0 0
        %1987 = vmatprep.subr.bf16.mxu0 0
        %1988 = vmatpush1.bf16.msra.mxu0 0
        %1989 = vmatprep.subr.bf16.mxu0 0
        %1990 = vmatpush1.bf16.msra.mxu0 0
        %1991 = vmatprep.subr.bf16.mxu0 %v1887
        %1992 = vmatpush1.bf16.msra.mxu0 %v1884
        %1993 = vmatprep.subr.bf16.mxu0 0
        %1994 = vmatpush2.bf16.msra.mxu0 0
        %1995 = vmatprep.subr.bf16.mxu0 0
        %1996 = vmatpush2.bf16.msra.mxu0 0
        %1997 = vmatprep.subr.bf16.mxu0 0
        %1998 = vmatpush2.bf16.msra.mxu0 0
        %1999 = vmatprep.subr.bf16.mxu0 0
        %2000 = vmatpush2.bf16.msra.mxu0 0
        %2001 = vmatprep.subr.bf16.mxu0 0
        %2002 = vmatpush2.bf16.msra.mxu0 0
        %2003 = vmatprep.subr.bf16.mxu0 0
        %2004 = vmatpush2.bf16.msra.mxu0 0
        %2005 = vmatprep.subr.bf16.mxu0 0
        %2006 = vmatpush2.bf16.msra.mxu0 0
        %2007 = vmatprep.subr.bf16.mxu0 0
        %2008 = vmatpush2.bf16.msra.mxu0 0
        %2009 = vmatprep.mubr.bf16.mxu0 0
        %2010 = vmatmul.mubr.bf16.gmra.mxu0 %v1869
        %v2011 = vpop.f32.mrf.mxu0
        %v2012 = vadd.f32 0.0, %v2011
        %v2013 = vpop.f32.mrf.mxu0
        %v2014 = vadd.f32 0.0, %v2013
        %v2015 = vpop.f32.mrf.mxu0
        %v2016 = vpop.f32.mrf.mxu0
        %2017 = vdwg.mxu0
        %2018 = vmatprep.subr.bf16.mxu0 0
        %2019 = vmatpush1.bf16.msra.mxu0 0
        %2020 = vmatprep.subr.bf16.mxu0 0
        %2021 = vmatpush1.bf16.msra.mxu0 0
        %2022 = vmatprep.subr.bf16.mxu0 0
        %2023 = vmatpush1.bf16.msra.mxu0 0
        %2024 = vmatprep.subr.bf16.mxu0 0
        %2025 = vmatpush1.bf16.msra.mxu0 0
        %2026 = vmatprep.subr.bf16.mxu0 0
        %2027 = vmatpush1.bf16.msra.mxu0 0
        %2028 = vmatprep.subr.bf16.mxu0 0
        %2029 = vmatpush1.bf16.msra.mxu0 0
        %2030 = vmatprep.subr.bf16.mxu0 0
        %2031 = vmatpush1.bf16.msra.mxu0 0
        %2032 = vmatprep.subr.bf16.mxu0 %v1893
        %2033 = vmatpush1.bf16.msra.mxu0 %v1890
        %2034 = vmatprep.subr.bf16.mxu0 0
        %2035 = vmatpush2.bf16.msra.mxu0 0
        %2036 = vmatprep.subr.bf16.mxu0 0
        %2037 = vmatpush2.bf16.msra.mxu0 0
        %2038 = vmatprep.subr.bf16.mxu0 0
        %2039 = vmatpush2.bf16.msra.mxu0 0
        %2040 = vmatprep.subr.bf16.mxu0 0
        %2041 = vmatpush2.bf16.msra.mxu0 0
        %2042 = vmatprep.subr.bf16.mxu0 0
        %2043 = vmatpush2.bf16.msra.mxu0 0
        %2044 = vmatprep.subr.bf16.mxu0 0
        %2045 = vmatpush2.bf16.msra.mxu0 0
        %2046 = vmatprep.subr.bf16.mxu0 0
        %2047 = vmatpush2.bf16.msra.mxu0 0
        %2048 = vmatprep.subr.bf16.mxu0 0
        %2049 = vmatpush2.bf16.msra.mxu0 0
        %2050 = vmatprep.mubr.bf16.mxu0 0
        %2051 = vmatmul.mubr.bf16.gmra.mxu0 %v1869
        %v2052 = vpop.f32.mrf.mxu0
        %v2053 = vadd.f32 0.0, %v2052
        %v2054 = vpop.f32.mrf.mxu0
        %v2055 = vadd.f32 0.0, %v2054
        %v2056 = vpop.f32.mrf.mxu0
        %v2057 = vpop.f32.mrf.mxu0
        %2058 = vdwg.mxu0
        %v2059 = vadd.f32 %v1833, %v1930
        %v2060 = vadd.f32 %v1834, %v1932
        %v2061 = vadd.f32 %v1835, %v1971
        %v2062 = vadd.f32 %v1836, %v1973
        %v2063 = vadd.f32 %v1837, %v2012
        %v2064 = vadd.f32 %v1838, %v2014
        %v2065 = vadd.f32 %v1839, %v2053
        %v2066 = vadd.f32 %v1840, %v2055
        %2067 = vrot.lane.b32.xlu0 %v252, 76
        %v2068 = vpop.permute.xlu0 %2067
        %2069 = vrot.lane.b32.xlu0 %v253, 76
        %v2070 = vpop.permute.xlu0 %2069
        %2071 = vrot.lane.b32.xlu0 %v254, 76
        %v2072 = vpop.permute.xlu0 %2071
        %2073 = vrot.lane.b32.xlu0 %v255, 76
        %v2074 = vpop.permute.xlu0 %2073
        %2075 = vrot.lane.b32.xlu0 %v256, 76
        %v2076 = vpop.permute.xlu0 %2075
        %2077 = vrot.lane.b32.xlu0 %v257, 76
        %v2078 = vpop.permute.xlu0 %2077
        %2079 = vrot.lane.b32.xlu0 %v258, 76
        %v2080 = vpop.permute.xlu0 %2079
        %2081 = vrot.lane.b32.xlu0 %v259, 76
        %v2082 = vpop.permute.xlu0 %2081
        %2083 = vrot.lane.b32.xlu0 %v268, 76
        %v2084 = vpop.permute.xlu0 %2083
        %vm2085 = vcmask 621568
        %v2086 = vsel %vm2085, %v2068, %v2070
        %v2087 = vsel %vm2085, %v2070, %v2072
        %v2088 = vsel %vm2085, %v2072, %v2074
        %v2089 = vsel %vm2085, %v2074, %v2076
        %v2090 = vsel %vm2085, %v2076, %v2078
        %v2091 = vsel %vm2085, %v2078, %v2080
        %v2092 = vsel %vm2085, %v2080, %v2082
        %v2093 = vsel %vm2085, %v2082, %v2084
        %v2095 = vsel %vm327, %v281, 0
        %v2098 = vsel %vm331, %v2086, 0
        %v2101 = vsel %vm331, %v2087, 0
        %v2104 = vsel %vm331, %v2088, 0
        %v2107 = vsel %vm331, %v2089, 0
        %v2110 = vsel %vm331, %v2090, 0
        %v2113 = vsel %vm331, %v2091, 0
        %v2116 = vsel %vm331, %v2092, 0
        %v2119 = vsel %vm331, %v2093, 0
        %2121 = vmatprep.subr.bf16.mxu0 0
        %2122 = vmatpush1.bf16.msra.mxu0 0
        %2123 = vmatprep.subr.bf16.mxu0 0
        %2124 = vmatpush1.bf16.msra.mxu0 0
        %2125 = vmatprep.subr.bf16.mxu0 0
        %2126 = vmatpush1.bf16.msra.mxu0 0
        %2127 = vmatprep.subr.bf16.mxu0 0
        %2128 = vmatpush1.bf16.msra.mxu0 0
        %2129 = vmatprep.subr.bf16.mxu0 0
        %2130 = vmatpush1.bf16.msra.mxu0 0
        %2131 = vmatprep.subr.bf16.mxu0 0
        %2132 = vmatpush1.bf16.msra.mxu0 0
        %2133 = vmatprep.subr.bf16.mxu0 0
        %2134 = vmatpush1.bf16.msra.mxu0 0
        %2135 = vmatprep.subr.bf16.mxu0 %v2101
        %2136 = vmatpush1.bf16.msra.mxu0 %v2098
        %2137 = vmatprep.subr.bf16.mxu0 0
        %2138 = vmatpush2.bf16.msra.mxu0 0
        %2139 = vmatprep.subr.bf16.mxu0 0
        %2140 = vmatpush2.bf16.msra.mxu0 0
        %2141 = vmatprep.subr.bf16.mxu0 0
        %2142 = vmatpush2.bf16.msra.mxu0 0
        %2143 = vmatprep.subr.bf16.mxu0 0
        %2144 = vmatpush2.bf16.msra.mxu0 0
        %2145 = vmatprep.subr.bf16.mxu0 0
        %2146 = vmatpush2.bf16.msra.mxu0 0
        %2147 = vmatprep.subr.bf16.mxu0 0
        %2148 = vmatpush2.bf16.msra.mxu0 0
        %2149 = vmatprep.subr.bf16.mxu0 0
        %2150 = vmatpush2.bf16.msra.mxu0 0
        %2151 = vmatprep.subr.bf16.mxu0 0
        %2152 = vmatpush2.bf16.msra.mxu0 0
        %2153 = vmatprep.mubr.bf16.mxu0 0
        %2154 = vmatmul.mubr.bf16.gmra.mxu0 %v2095
        %v2155 = vpop.f32.mrf.mxu0
        %v2156 = vadd.f32 0.0, %v2155
        %v2157 = vpop.f32.mrf.mxu0
        %v2158 = vadd.f32 0.0, %v2157
        %v2159 = vpop.f32.mrf.mxu0
        %v2160 = vpop.f32.mrf.mxu0
        %2161 = vdwg.mxu0
        %2162 = vmatprep.subr.bf16.mxu0 0
        %2163 = vmatpush1.bf16.msra.mxu0 0
        %2164 = vmatprep.subr.bf16.mxu0 0
        %2165 = vmatpush1.bf16.msra.mxu0 0
        %2166 = vmatprep.subr.bf16.mxu0 0
        %2167 = vmatpush1.bf16.msra.mxu0 0
        %2168 = vmatprep.subr.bf16.mxu0 0
        %2169 = vmatpush1.bf16.msra.mxu0 0
        %2170 = vmatprep.subr.bf16.mxu0 0
        %2171 = vmatpush1.bf16.msra.mxu0 0
        %2172 = vmatprep.subr.bf16.mxu0 0
        %2173 = vmatpush1.bf16.msra.mxu0 0
        %2174 = vmatprep.subr.bf16.mxu0 0
        %2175 = vmatpush1.bf16.msra.mxu0 0
        %2176 = vmatprep.subr.bf16.mxu0 %v2107
        %2177 = vmatpush1.bf16.msra.mxu0 %v2104
        %2178 = vmatprep.subr.bf16.mxu0 0
        %2179 = vmatpush2.bf16.msra.mxu0 0
        %2180 = vmatprep.subr.bf16.mxu0 0
        %2181 = vmatpush2.bf16.msra.mxu0 0
        %2182 = vmatprep.subr.bf16.mxu0 0
        %2183 = vmatpush2.bf16.msra.mxu0 0
        %2184 = vmatprep.subr.bf16.mxu0 0
        %2185 = vmatpush2.bf16.msra.mxu0 0
        %2186 = vmatprep.subr.bf16.mxu0 0
        %2187 = vmatpush2.bf16.msra.mxu0 0
        %2188 = vmatprep.subr.bf16.mxu0 0
        %2189 = vmatpush2.bf16.msra.mxu0 0
        %2190 = vmatprep.subr.bf16.mxu0 0
        %2191 = vmatpush2.bf16.msra.mxu0 0
        %2192 = vmatprep.subr.bf16.mxu0 0
        %2193 = vmatpush2.bf16.msra.mxu0 0
        %2194 = vmatprep.mubr.bf16.mxu0 0
        %2195 = vmatmul.mubr.bf16.gmra.mxu0 %v2095
        %v2196 = vpop.f32.mrf.mxu0
        %v2197 = vadd.f32 0.0, %v2196
        %v2198 = vpop.f32.mrf.mxu0
        %v2199 = vadd.f32 0.0, %v2198
        %v2200 = vpop.f32.mrf.mxu0
        %v2201 = vpop.f32.mrf.mxu0
        %2202 = vdwg.mxu0
        %2203 = vmatprep.subr.bf16.mxu0 0
        %2204 = vmatpush1.bf16.msra.mxu0 0
        %2205 = vmatprep.subr.bf16.mxu0 0
        %2206 = vmatpush1.bf16.msra.mxu0 0
        %2207 = vmatprep.subr.bf16.mxu0 0
        %2208 = vmatpush1.bf16.msra.mxu0 0
        %2209 = vmatprep.subr.bf16.mxu0 0
        %2210 = vmatpush1.bf16.msra.mxu0 0
        %2211 = vmatprep.subr.bf16.mxu0 0
        %2212 = vmatpush1.bf16.msra.mxu0 0
        %2213 = vmatprep.subr.bf16.mxu0 0
        %2214 = vmatpush1.bf16.msra.mxu0 0
        %2215 = vmatprep.subr.bf16.mxu0 0
        %2216 = vmatpush1.bf16.msra.mxu0 0
        %2217 = vmatprep.subr.bf16.mxu0 %v2113
        %2218 = vmatpush1.bf16.msra.mxu0 %v2110
        %2219 = vmatprep.subr.bf16.mxu0 0
        %2220 = vmatpush2.bf16.msra.mxu0 0
        %2221 = vmatprep.subr.bf16.mxu0 0
        %2222 = vmatpush2.bf16.msra.mxu0 0
        %2223 = vmatprep.subr.bf16.mxu0 0
        %2224 = vmatpush2.bf16.msra.mxu0 0
        %2225 = vmatprep.subr.bf16.mxu0 0
        %2226 = vmatpush2.bf16.msra.mxu0 0
        %2227 = vmatprep.subr.bf16.mxu0 0
        %2228 = vmatpush2.bf16.msra.mxu0 0
        %2229 = vmatprep.subr.bf16.mxu0 0
        %2230 = vmatpush2.bf16.msra.mxu0 0
        %2231 = vmatprep.subr.bf16.mxu0 0
        %2232 = vmatpush2.bf16.msra.mxu0 0
        %2233 = vmatprep.subr.bf16.mxu0 0
        %2234 = vmatpush2.bf16.msra.mxu0 0
        %2235 = vmatprep.mubr.bf16.mxu0 0
        %2236 = vmatmul.mubr.bf16.gmra.mxu0 %v2095
        %v2237 = vpop.f32.mrf.mxu0
        %v2238 = vadd.f32 0.0, %v2237
        %v2239 = vpop.f32.mrf.mxu0
        %v2240 = vadd.f32 0.0, %v2239
        %v2241 = vpop.f32.mrf.mxu0
        %v2242 = vpop.f32.mrf.mxu0
        %2243 = vdwg.mxu0
        %2244 = vmatprep.subr.bf16.mxu0 0
        %2245 = vmatpush1.bf16.msra.mxu0 0
        %2246 = vmatprep.subr.bf16.mxu0 0
        %2247 = vmatpush1.bf16.msra.mxu0 0
        %2248 = vmatprep.subr.bf16.mxu0 0
        %2249 = vmatpush1.bf16.msra.mxu0 0
        %2250 = vmatprep.subr.bf16.mxu0 0
        %2251 = vmatpush1.bf16.msra.mxu0 0
        %2252 = vmatprep.subr.bf16.mxu0 0
        %2253 = vmatpush1.bf16.msra.mxu0 0
        %2254 = vmatprep.subr.bf16.mxu0 0
        %2255 = vmatpush1.bf16.msra.mxu0 0
        %2256 = vmatprep.subr.bf16.mxu0 0
        %2257 = vmatpush1.bf16.msra.mxu0 0
        %2258 = vmatprep.subr.bf16.mxu0 %v2119
        %2259 = vmatpush1.bf16.msra.mxu0 %v2116
        %2260 = vmatprep.subr.bf16.mxu0 0
        %2261 = vmatpush2.bf16.msra.mxu0 0
        %2262 = vmatprep.subr.bf16.mxu0 0
        %2263 = vmatpush2.bf16.msra.mxu0 0
        %2264 = vmatprep.subr.bf16.mxu0 0
        %2265 = vmatpush2.bf16.msra.mxu0 0
        %2266 = vmatprep.subr.bf16.mxu0 0
        %2267 = vmatpush2.bf16.msra.mxu0 0
        %2268 = vmatprep.subr.bf16.mxu0 0
        %2269 = vmatpush2.bf16.msra.mxu0 0
        %2270 = vmatprep.subr.bf16.mxu0 0
        %2271 = vmatpush2.bf16.msra.mxu0 0
        %2272 = vmatprep.subr.bf16.mxu0 0
        %2273 = vmatpush2.bf16.msra.mxu0 0
        %2274 = vmatprep.subr.bf16.mxu0 0
        %2275 = vmatpush2.bf16.msra.mxu0 0
        %2276 = vmatprep.mubr.bf16.mxu0 0
        %2277 = vmatmul.mubr.bf16.gmra.mxu0 %v2095
        %v2278 = vpop.f32.mrf.mxu0
        %v2279 = vadd.f32 0.0, %v2278
        %v2280 = vpop.f32.mrf.mxu0
        %v2281 = vadd.f32 0.0, %v2280
        %v2282 = vpop.f32.mrf.mxu0
        %v2283 = vpop.f32.mrf.mxu0
        %2284 = vdwg.mxu0
        %v2285 = vadd.f32 %v2059, %v2156
        %v2286 = vadd.f32 %v2060, %v2158
        %v2287 = vadd.f32 %v2061, %v2197
        %v2288 = vadd.f32 %v2062, %v2199
        %v2289 = vadd.f32 %v2063, %v2238
        %v2290 = vadd.f32 %v2064, %v2240
        %v2291 = vadd.f32 %v2065, %v2279
        %v2292 = vadd.f32 %v2066, %v2281
        %2293 = vrot.lane.b32.xlu0 %v254, 96
        %v2294 = vpop.permute.xlu0 %2293
        %2295 = vrot.lane.b32.xlu0 %v255, 96
        %v2296 = vpop.permute.xlu0 %2295
        %2297 = vrot.lane.b32.xlu0 %v256, 96
        %v2298 = vpop.permute.xlu0 %2297
        %2299 = vrot.lane.b32.xlu0 %v257, 96
        %v2300 = vpop.permute.xlu0 %2299
        %2301 = vrot.lane.b32.xlu0 %v258, 96
        %v2302 = vpop.permute.xlu0 %2301
        %2303 = vrot.lane.b32.xlu0 %v259, 96
        %v2304 = vpop.permute.xlu0 %2303
        %2305 = vrot.lane.b32.xlu0 %v268, 96
        %v2306 = vpop.permute.xlu0 %2305
        %2307 = vrot.lane.b32.xlu0 %v269, 96
        %v2308 = vpop.permute.xlu0 %2307
        %2309 = vrot.lane.b32.xlu0 %v270, 96
        %v2310 = vpop.permute.xlu0 %2309
        %vm2311 = vcmask 785408
        %v2312 = vsel %vm2311, %v2294, %v2296
        %v2313 = vsel %vm2311, %v2296, %v2298
        %v2314 = vsel %vm2311, %v2298, %v2300
        %v2315 = vsel %vm2311, %v2300, %v2302
        %v2316 = vsel %vm2311, %v2302, %v2304
        %v2317 = vsel %vm2311, %v2304, %v2306
        %v2318 = vsel %vm2311, %v2306, %v2308
        %v2319 = vsel %vm2311, %v2308, %v2310
        %v2321 = vsel %vm327, %v282, 0
        %v2324 = vsel %vm331, %v2312, 0
        %v2327 = vsel %vm331, %v2313, 0
        %v2330 = vsel %vm331, %v2314, 0
        %v2333 = vsel %vm331, %v2315, 0
        %v2336 = vsel %vm331, %v2316, 0
        %v2339 = vsel %vm331, %v2317, 0
        %v2342 = vsel %vm331, %v2318, 0
        %v2345 = vsel %vm331, %v2319, 0
        %2347 = vmatprep.subr.bf16.mxu0 0
        %2348 = vmatpush1.bf16.msra.mxu0 0
        %2349 = vmatprep.subr.bf16.mxu0 0
        %2350 = vmatpush1.bf16.msra.mxu0 0
        %2351 = vmatprep.subr.bf16.mxu0 0
        %2352 = vmatpush1.bf16.msra.mxu0 0
        %2353 = vmatprep.subr.bf16.mxu0 0
        %2354 = vmatpush1.bf16.msra.mxu0 0
        %2355 = vmatprep.subr.bf16.mxu0 0
        %2356 = vmatpush1.bf16.msra.mxu0 0
        %2357 = vmatprep.subr.bf16.mxu0 0
        %2358 = vmatpush1.bf16.msra.mxu0 0
        %2359 = vmatprep.subr.bf16.mxu0 0
        %2360 = vmatpush1.bf16.msra.mxu0 0
        %2361 = vmatprep.subr.bf16.mxu0 %v2327
        %2362 = vmatpush1.bf16.msra.mxu0 %v2324
        %2363 = vmatprep.subr.bf16.mxu0 0
        %2364 = vmatpush2.bf16.msra.mxu0 0
        %2365 = vmatprep.subr.bf16.mxu0 0
        %2366 = vmatpush2.bf16.msra.mxu0 0
        %2367 = vmatprep.subr.bf16.mxu0 0
        %2368 = vmatpush2.bf16.msra.mxu0 0
        %2369 = vmatprep.subr.bf16.mxu0 0
        %2370 = vmatpush2.bf16.msra.mxu0 0
        %2371 = vmatprep.subr.bf16.mxu0 0
        %2372 = vmatpush2.bf16.msra.mxu0 0
        %2373 = vmatprep.subr.bf16.mxu0 0
        %2374 = vmatpush2.bf16.msra.mxu0 0
        %2375 = vmatprep.subr.bf16.mxu0 0
        %2376 = vmatpush2.bf16.msra.mxu0 0
        %2377 = vmatprep.subr.bf16.mxu0 0
        %2378 = vmatpush2.bf16.msra.mxu0 0
        %2379 = vmatprep.mubr.bf16.mxu0 0
        %2380 = vmatmul.mubr.bf16.gmra.mxu0 %v2321
        %v2381 = vpop.f32.mrf.mxu0
        %v2382 = vadd.f32 0.0, %v2381
        %v2383 = vpop.f32.mrf.mxu0
        %v2384 = vadd.f32 0.0, %v2383
        %v2385 = vpop.f32.mrf.mxu0
        %v2386 = vpop.f32.mrf.mxu0
        %2387 = vdwg.mxu0
        %2388 = vmatprep.subr.bf16.mxu0 0
        %2389 = vmatpush1.bf16.msra.mxu0 0
        %2390 = vmatprep.subr.bf16.mxu0 0
        %2391 = vmatpush1.bf16.msra.mxu0 0
        %2392 = vmatprep.subr.bf16.mxu0 0
        %2393 = vmatpush1.bf16.msra.mxu0 0
        %2394 = vmatprep.subr.bf16.mxu0 0
        %2395 = vmatpush1.bf16.msra.mxu0 0
        %2396 = vmatprep.subr.bf16.mxu0 0
        %2397 = vmatpush1.bf16.msra.mxu0 0
        %2398 = vmatprep.subr.bf16.mxu0 0
        %2399 = vmatpush1.bf16.msra.mxu0 0
        %2400 = vmatprep.subr.bf16.mxu0 0
        %2401 = vmatpush1.bf16.msra.mxu0 0
        %2402 = vmatprep.subr.bf16.mxu0 %v2333
        %2403 = vmatpush1.bf16.msra.mxu0 %v2330
        %2404 = vmatprep.subr.bf16.mxu0 0
        %2405 = vmatpush2.bf16.msra.mxu0 0
        %2406 = vmatprep.subr.bf16.mxu0 0
        %2407 = vmatpush2.bf16.msra.mxu0 0
        %2408 = vmatprep.subr.bf16.mxu0 0
        %2409 = vmatpush2.bf16.msra.mxu0 0
        %2410 = vmatprep.subr.bf16.mxu0 0
        %2411 = vmatpush2.bf16.msra.mxu0 0
        %2412 = vmatprep.subr.bf16.mxu0 0
        %2413 = vmatpush2.bf16.msra.mxu0 0
        %2414 = vmatprep.subr.bf16.mxu0 0
        %2415 = vmatpush2.bf16.msra.mxu0 0
        %2416 = vmatprep.subr.bf16.mxu0 0
        %2417 = vmatpush2.bf16.msra.mxu0 0
        %2418 = vmatprep.subr.bf16.mxu0 0
        %2419 = vmatpush2.bf16.msra.mxu0 0
        %2420 = vmatprep.mubr.bf16.mxu0 0
        %2421 = vmatmul.mubr.bf16.gmra.mxu0 %v2321
        %v2422 = vpop.f32.mrf.mxu0
        %v2423 = vadd.f32 0.0, %v2422
        %v2424 = vpop.f32.mrf.mxu0
        %v2425 = vadd.f32 0.0, %v2424
        %v2426 = vpop.f32.mrf.mxu0
        %v2427 = vpop.f32.mrf.mxu0
        %2428 = vdwg.mxu0
        %2429 = vmatprep.subr.bf16.mxu0 0
        %2430 = vmatpush1.bf16.msra.mxu0 0
        %2431 = vmatprep.subr.bf16.mxu0 0
        %2432 = vmatpush1.bf16.msra.mxu0 0
        %2433 = vmatprep.subr.bf16.mxu0 0
        %2434 = vmatpush1.bf16.msra.mxu0 0
        %2435 = vmatprep.subr.bf16.mxu0 0
        %2436 = vmatpush1.bf16.msra.mxu0 0
        %2437 = vmatprep.subr.bf16.mxu0 0
        %2438 = vmatpush1.bf16.msra.mxu0 0
        %2439 = vmatprep.subr.bf16.mxu0 0
        %2440 = vmatpush1.bf16.msra.mxu0 0
        %2441 = vmatprep.subr.bf16.mxu0 0
        %2442 = vmatpush1.bf16.msra.mxu0 0
        %2443 = vmatprep.subr.bf16.mxu0 %v2339
        %2444 = vmatpush1.bf16.msra.mxu0 %v2336
        %2445 = vmatprep.subr.bf16.mxu0 0
        %2446 = vmatpush2.bf16.msra.mxu0 0
        %2447 = vmatprep.subr.bf16.mxu0 0
        %2448 = vmatpush2.bf16.msra.mxu0 0
        %2449 = vmatprep.subr.bf16.mxu0 0
        %2450 = vmatpush2.bf16.msra.mxu0 0
        %2451 = vmatprep.subr.bf16.mxu0 0
        %2452 = vmatpush2.bf16.msra.mxu0 0
        %2453 = vmatprep.subr.bf16.mxu0 0
        %2454 = vmatpush2.bf16.msra.mxu0 0
        %2455 = vmatprep.subr.bf16.mxu0 0
        %2456 = vmatpush2.bf16.msra.mxu0 0
        %2457 = vmatprep.subr.bf16.mxu0 0
        %2458 = vmatpush2.bf16.msra.mxu0 0
        %2459 = vmatprep.subr.bf16.mxu0 0
        %2460 = vmatpush2.bf16.msra.mxu0 0
        %2461 = vmatprep.mubr.bf16.mxu0 0
        %2462 = vmatmul.mubr.bf16.gmra.mxu0 %v2321
        %v2463 = vpop.f32.mrf.mxu0
        %v2464 = vadd.f32 0.0, %v2463
        %v2465 = vpop.f32.mrf.mxu0
        %v2466 = vadd.f32 0.0, %v2465
        %v2467 = vpop.f32.mrf.mxu0
        %v2468 = vpop.f32.mrf.mxu0
        %2469 = vdwg.mxu0
        %2470 = vmatprep.subr.bf16.mxu0 0
        %2471 = vmatpush1.bf16.msra.mxu0 0
        %2472 = vmatprep.subr.bf16.mxu0 0
        %2473 = vmatpush1.bf16.msra.mxu0 0
        %2474 = vmatprep.subr.bf16.mxu0 0
        %2475 = vmatpush1.bf16.msra.mxu0 0
        %2476 = vmatprep.subr.bf16.mxu0 0
        %2477 = vmatpush1.bf16.msra.mxu0 0
        %2478 = vmatprep.subr.bf16.mxu0 0
        %2479 = vmatpush1.bf16.msra.mxu0 0
        %2480 = vmatprep.subr.bf16.mxu0 0
        %2481 = vmatpush1.bf16.msra.mxu0 0
        %2482 = vmatprep.subr.bf16.mxu0 0
        %2483 = vmatpush1.bf16.msra.mxu0 0
        %2484 = vmatprep.subr.bf16.mxu0 %v2345
        %2485 = vmatpush1.bf16.msra.mxu0 %v2342
        %2486 = vmatprep.subr.bf16.mxu0 0
        %2487 = vmatpush2.bf16.msra.mxu0 0
        %2488 = vmatprep.subr.bf16.mxu0 0
        %2489 = vmatpush2.bf16.msra.mxu0 0
        %2490 = vmatprep.subr.bf16.mxu0 0
        %2491 = vmatpush2.bf16.msra.mxu0 0
        %2492 = vmatprep.subr.bf16.mxu0 0
        %2493 = vmatpush2.bf16.msra.mxu0 0
        %2494 = vmatprep.subr.bf16.mxu0 0
        %2495 = vmatpush2.bf16.msra.mxu0 0
        %2496 = vmatprep.subr.bf16.mxu0 0
        %2497 = vmatpush2.bf16.msra.mxu0 0
        %2498 = vmatprep.subr.bf16.mxu0 0
        %2499 = vmatpush2.bf16.msra.mxu0 0
        %2500 = vmatprep.subr.bf16.mxu0 0
        %2501 = vmatpush2.bf16.msra.mxu0 0
        %2502 = vmatprep.mubr.bf16.mxu0 0
        %2503 = vmatmul.mubr.bf16.gmra.mxu0 %v2321
        %v2504 = vpop.f32.mrf.mxu0
        %v2505 = vadd.f32 0.0, %v2504
        %v2506 = vpop.f32.mrf.mxu0
        %v2507 = vadd.f32 0.0, %v2506
        %v2508 = vpop.f32.mrf.mxu0
        %v2509 = vpop.f32.mrf.mxu0
        %2510 = vdwg.mxu0
        %v2511 = vadd.f32 %v2285, %v2382
        %v2512 = vadd.f32 %v2286, %v2384
        %v2513 = vadd.f32 %v2287, %v2423
        %v2514 = vadd.f32 %v2288, %v2425
        %v2515 = vadd.f32 %v2289, %v2464
        %v2516 = vadd.f32 %v2290, %v2466
        %v2517 = vadd.f32 %v2291, %v2505
        %v2518 = vadd.f32 %v2292, %v2507
        %2519 = vrot.lane.b32.xlu0 %v254, 94
        %v2520 = vpop.permute.xlu0 %2519
        %2521 = vrot.lane.b32.xlu0 %v255, 94
        %v2522 = vpop.permute.xlu0 %2521
        %2523 = vrot.lane.b32.xlu0 %v256, 94
        %v2524 = vpop.permute.xlu0 %2523
        %2525 = vrot.lane.b32.xlu0 %v257, 94
        %v2526 = vpop.permute.xlu0 %2525
        %2527 = vrot.lane.b32.xlu0 %v258, 94
        %v2528 = vpop.permute.xlu0 %2527
        %2529 = vrot.lane.b32.xlu0 %v259, 94
        %v2530 = vpop.permute.xlu0 %2529
        %2531 = vrot.lane.b32.xlu0 %v268, 94
        %v2532 = vpop.permute.xlu0 %2531
        %2533 = vrot.lane.b32.xlu0 %v269, 94
        %v2534 = vpop.permute.xlu0 %2533
        %2535 = vrot.lane.b32.xlu0 %v270, 94
        %v2536 = vpop.permute.xlu0 %2535
        %vm2537 = vcmask 769024
        %v2538 = vsel %vm2537, %v2520, %v2522
        %v2539 = vsel %vm2537, %v2522, %v2524
        %v2540 = vsel %vm2537, %v2524, %v2526
        %v2541 = vsel %vm2537, %v2526, %v2528
        %v2542 = vsel %vm2537, %v2528, %v2530
        %v2543 = vsel %vm2537, %v2530, %v2532
        %v2544 = vsel %vm2537, %v2532, %v2534
        %v2545 = vsel %vm2537, %v2534, %v2536
        %v2547 = vsel %vm327, %v283, 0
        %v2550 = vsel %vm331, %v2538, 0
        %v2553 = vsel %vm331, %v2539, 0
        %v2556 = vsel %vm331, %v2540, 0
        %v2559 = vsel %vm331, %v2541, 0
        %v2562 = vsel %vm331, %v2542, 0
        %v2565 = vsel %vm331, %v2543, 0
        %v2568 = vsel %vm331, %v2544, 0
        %v2571 = vsel %vm331, %v2545, 0
        %2573 = vmatprep.subr.bf16.mxu0 0
        %2574 = vmatpush1.bf16.msra.mxu0 0
        %2575 = vmatprep.subr.bf16.mxu0 0
        %2576 = vmatpush1.bf16.msra.mxu0 0
        %2577 = vmatprep.subr.bf16.mxu0 0
        %2578 = vmatpush1.bf16.msra.mxu0 0
        %2579 = vmatprep.subr.bf16.mxu0 0
        %2580 = vmatpush1.bf16.msra.mxu0 0
        %2581 = vmatprep.subr.bf16.mxu0 0
        %2582 = vmatpush1.bf16.msra.mxu0 0
        %2583 = vmatprep.subr.bf16.mxu0 0
        %2584 = vmatpush1.bf16.msra.mxu0 0
        %2585 = vmatprep.subr.bf16.mxu0 0
        %2586 = vmatpush1.bf16.msra.mxu0 0
        %2587 = vmatprep.subr.bf16.mxu0 %v2553
        %2588 = vmatpush1.bf16.msra.mxu0 %v2550
        %2589 = vmatprep.subr.bf16.mxu0 0
        %2590 = vmatpush2.bf16.msra.mxu0 0
        %2591 = vmatprep.subr.bf16.mxu0 0
        %2592 = vmatpush2.bf16.msra.mxu0 0
        %2593 = vmatprep.subr.bf16.mxu0 0
        %2594 = vmatpush2.bf16.msra.mxu0 0
        %2595 = vmatprep.subr.bf16.mxu0 0
        %2596 = vmatpush2.bf16.msra.mxu0 0
        %2597 = vmatprep.subr.bf16.mxu0 0
        %2598 = vmatpush2.bf16.msra.mxu0 0
        %2599 = vmatprep.subr.bf16.mxu0 0
        %2600 = vmatpush2.bf16.msra.mxu0 0
        %2601 = vmatprep.subr.bf16.mxu0 0
        %2602 = vmatpush2.bf16.msra.mxu0 0
        %2603 = vmatprep.subr.bf16.mxu0 0
        %2604 = vmatpush2.bf16.msra.mxu0 0
        %2605 = vmatprep.mubr.bf16.mxu0 0
        %2606 = vmatmul.mubr.bf16.gmra.mxu0 %v2547
        %v2607 = vpop.f32.mrf.mxu0
        %v2608 = vadd.f32 0.0, %v2607
        %v2609 = vpop.f32.mrf.mxu0
        %v2610 = vadd.f32 0.0, %v2609
        %v2611 = vpop.f32.mrf.mxu0
        %v2612 = vpop.f32.mrf.mxu0
        %2613 = vdwg.mxu0
        %2614 = vmatprep.subr.bf16.mxu0 0
        %2615 = vmatpush1.bf16.msra.mxu0 0
        %2616 = vmatprep.subr.bf16.mxu0 0
        %2617 = vmatpush1.bf16.msra.mxu0 0
        %2618 = vmatprep.subr.bf16.mxu0 0
        %2619 = vmatpush1.bf16.msra.mxu0 0
        %2620 = vmatprep.subr.bf16.mxu0 0
        %2621 = vmatpush1.bf16.msra.mxu0 0
        %2622 = vmatprep.subr.bf16.mxu0 0
        %2623 = vmatpush1.bf16.msra.mxu0 0
        %2624 = vmatprep.subr.bf16.mxu0 0
        %2625 = vmatpush1.bf16.msra.mxu0 0
        %2626 = vmatprep.subr.bf16.mxu0 0
        %2627 = vmatpush1.bf16.msra.mxu0 0
        %2628 = vmatprep.subr.bf16.mxu0 %v2559
        %2629 = vmatpush1.bf16.msra.mxu0 %v2556
        %2630 = vmatprep.subr.bf16.mxu0 0
        %2631 = vmatpush2.bf16.msra.mxu0 0
        %2632 = vmatprep.subr.bf16.mxu0 0
        %2633 = vmatpush2.bf16.msra.mxu0 0
        %2634 = vmatprep.subr.bf16.mxu0 0
        %2635 = vmatpush2.bf16.msra.mxu0 0
        %2636 = vmatprep.subr.bf16.mxu0 0
        %2637 = vmatpush2.bf16.msra.mxu0 0
        %2638 = vmatprep.subr.bf16.mxu0 0
        %2639 = vmatpush2.bf16.msra.mxu0 0
        %2640 = vmatprep.subr.bf16.mxu0 0
        %2641 = vmatpush2.bf16.msra.mxu0 0
        %2642 = vmatprep.subr.bf16.mxu0 0
        %2643 = vmatpush2.bf16.msra.mxu0 0
        %2644 = vmatprep.subr.bf16.mxu0 0
        %2645 = vmatpush2.bf16.msra.mxu0 0
        %2646 = vmatprep.mubr.bf16.mxu0 0
        %2647 = vmatmul.mubr.bf16.gmra.mxu0 %v2547
        %v2648 = vpop.f32.mrf.mxu0
        %v2649 = vadd.f32 0.0, %v2648
        %v2650 = vpop.f32.mrf.mxu0
        %v2651 = vadd.f32 0.0, %v2650
        %v2652 = vpop.f32.mrf.mxu0
        %v2653 = vpop.f32.mrf.mxu0
        %2654 = vdwg.mxu0
        %2655 = vmatprep.subr.bf16.mxu0 0
        %2656 = vmatpush1.bf16.msra.mxu0 0
        %2657 = vmatprep.subr.bf16.mxu0 0
        %2658 = vmatpush1.bf16.msra.mxu0 0
        %2659 = vmatprep.subr.bf16.mxu0 0
        %2660 = vmatpush1.bf16.msra.mxu0 0
        %2661 = vmatprep.subr.bf16.mxu0 0
        %2662 = vmatpush1.bf16.msra.mxu0 0
        %2663 = vmatprep.subr.bf16.mxu0 0
        %2664 = vmatpush1.bf16.msra.mxu0 0
        %2665 = vmatprep.subr.bf16.mxu0 0
        %2666 = vmatpush1.bf16.msra.mxu0 0
        %2667 = vmatprep.subr.bf16.mxu0 0
        %2668 = vmatpush1.bf16.msra.mxu0 0
        %2669 = vmatprep.subr.bf16.mxu0 %v2565
        %2670 = vmatpush1.bf16.msra.mxu0 %v2562
        %2671 = vmatprep.subr.bf16.mxu0 0
        %2672 = vmatpush2.bf16.msra.mxu0 0
        %2673 = vmatprep.subr.bf16.mxu0 0
        %2674 = vmatpush2.bf16.msra.mxu0 0
        %2675 = vmatprep.subr.bf16.mxu0 0
        %2676 = vmatpush2.bf16.msra.mxu0 0
        %2677 = vmatprep.subr.bf16.mxu0 0
        %2678 = vmatpush2.bf16.msra.mxu0 0
        %2679 = vmatprep.subr.bf16.mxu0 0
        %2680 = vmatpush2.bf16.msra.mxu0 0
        %2681 = vmatprep.subr.bf16.mxu0 0
        %2682 = vmatpush2.bf16.msra.mxu0 0
        %2683 = vmatprep.subr.bf16.mxu0 0
        %2684 = vmatpush2.bf16.msra.mxu0 0
        %2685 = vmatprep.subr.bf16.mxu0 0
        %2686 = vmatpush2.bf16.msra.mxu0 0
        %2687 = vmatprep.mubr.bf16.mxu0 0
        %2688 = vmatmul.mubr.bf16.gmra.mxu0 %v2547
        %v2689 = vpop.f32.mrf.mxu0
        %v2690 = vadd.f32 0.0, %v2689
        %v2691 = vpop.f32.mrf.mxu0
        %v2692 = vadd.f32 0.0, %v2691
        %v2693 = vpop.f32.mrf.mxu0
        %v2694 = vpop.f32.mrf.mxu0
        %2695 = vdwg.mxu0
        %2696 = vmatprep.subr.bf16.mxu0 0
        %2697 = vmatpush1.bf16.msra.mxu0 0
        %2698 = vmatprep.subr.bf16.mxu0 0
        %2699 = vmatpush1.bf16.msra.mxu0 0
        %2700 = vmatprep.subr.bf16.mxu0 0
        %2701 = vmatpush1.bf16.msra.mxu0 0
        %2702 = vmatprep.subr.bf16.mxu0 0
        %2703 = vmatpush1.bf16.msra.mxu0 0
        %2704 = vmatprep.subr.bf16.mxu0 0
        %2705 = vmatpush1.bf16.msra.mxu0 0
        %2706 = vmatprep.subr.bf16.mxu0 0
        %2707 = vmatpush1.bf16.msra.mxu0 0
        %2708 = vmatprep.subr.bf16.mxu0 0
        %2709 = vmatpush1.bf16.msra.mxu0 0
        %2710 = vmatprep.subr.bf16.mxu0 %v2571
        %2711 = vmatpush1.bf16.msra.mxu0 %v2568
        %2712 = vmatprep.subr.bf16.mxu0 0
        %2713 = vmatpush2.bf16.msra.mxu0 0
        %2714 = vmatprep.subr.bf16.mxu0 0
        %2715 = vmatpush2.bf16.msra.mxu0 0
        %2716 = vmatprep.subr.bf16.mxu0 0
        %2717 = vmatpush2.bf16.msra.mxu0 0
        %2718 = vmatprep.subr.bf16.mxu0 0
        %2719 = vmatpush2.bf16.msra.mxu0 0
        %2720 = vmatprep.subr.bf16.mxu0 0
        %2721 = vmatpush2.bf16.msra.mxu0 0
        %2722 = vmatprep.subr.bf16.mxu0 0
        %2723 = vmatpush2.bf16.msra.mxu0 0
        %2724 = vmatprep.subr.bf16.mxu0 0
        %2725 = vmatpush2.bf16.msra.mxu0 0
        %2726 = vmatprep.subr.bf16.mxu0 0
        %2727 = vmatpush2.bf16.msra.mxu0 0
        %2728 = vmatprep.mubr.bf16.mxu0 0
        %2729 = vmatmul.mubr.bf16.gmra.mxu0 %v2547
        %v2730 = vpop.f32.mrf.mxu0
        %v2731 = vadd.f32 0.0, %v2730
        %v2732 = vpop.f32.mrf.mxu0
        %v2733 = vadd.f32 0.0, %v2732
        %v2734 = vpop.f32.mrf.mxu0
        %v2735 = vpop.f32.mrf.mxu0
        %2736 = vdwg.mxu0
        %v2737 = vadd.f32 %v2511, %v2608
        %v2738 = vadd.f32 %v2512, %v2610
        %v2739 = vadd.f32 %v2513, %v2649
        %v2740 = vadd.f32 %v2514, %v2651
        %v2741 = vadd.f32 %v2515, %v2690
        %v2742 = vadd.f32 %v2516, %v2692
        %v2743 = vadd.f32 %v2517, %v2731
        %v2744 = vadd.f32 %v2518, %v2733
        %2745 = vrot.lane.b32.xlu0 %v254, 92
        %v2746 = vpop.permute.xlu0 %2745
        %2747 = vrot.lane.b32.xlu0 %v255, 92
        %v2748 = vpop.permute.xlu0 %2747
        %2749 = vrot.lane.b32.xlu0 %v256, 92
        %v2750 = vpop.permute.xlu0 %2749
        %2751 = vrot.lane.b32.xlu0 %v257, 92
        %v2752 = vpop.permute.xlu0 %2751
        %2753 = vrot.lane.b32.xlu0 %v258, 92
        %v2754 = vpop.permute.xlu0 %2753
        %2755 = vrot.lane.b32.xlu0 %v259, 92
        %v2756 = vpop.permute.xlu0 %2755
        %2757 = vrot.lane.b32.xlu0 %v268, 92
        %v2758 = vpop.permute.xlu0 %2757
        %2759 = vrot.lane.b32.xlu0 %v269, 92
        %v2760 = vpop.permute.xlu0 %2759
        %2761 = vrot.lane.b32.xlu0 %v270, 92
        %v2762 = vpop.permute.xlu0 %2761
        %vm2763 = vcmask 752640
        %v2764 = vsel %vm2763, %v2746, %v2748
        %v2765 = vsel %vm2763, %v2748, %v2750
        %v2766 = vsel %vm2763, %v2750, %v2752
        %v2767 = vsel %vm2763, %v2752, %v2754
        %v2768 = vsel %vm2763, %v2754, %v2756
        %v2769 = vsel %vm2763, %v2756, %v2758
        %v2770 = vsel %vm2763, %v2758, %v2760
        %v2771 = vsel %vm2763, %v2760, %v2762
        %v2773 = vsel %vm327, %v284, 0
        %v2776 = vsel %vm331, %v2764, 0
        %v2779 = vsel %vm331, %v2765, 0
        %v2782 = vsel %vm331, %v2766, 0
        %v2785 = vsel %vm331, %v2767, 0
        %v2788 = vsel %vm331, %v2768, 0
        %v2791 = vsel %vm331, %v2769, 0
        %v2794 = vsel %vm331, %v2770, 0
        %v2797 = vsel %vm331, %v2771, 0
        %2799 = vmatprep.subr.bf16.mxu0 0
        %2800 = vmatpush1.bf16.msra.mxu0 0
        %2801 = vmatprep.subr.bf16.mxu0 0
        %2802 = vmatpush1.bf16.msra.mxu0 0
        %2803 = vmatprep.subr.bf16.mxu0 0
        %2804 = vmatpush1.bf16.msra.mxu0 0
        %2805 = vmatprep.subr.bf16.mxu0 0
        %2806 = vmatpush1.bf16.msra.mxu0 0
        %2807 = vmatprep.subr.bf16.mxu0 0
        %2808 = vmatpush1.bf16.msra.mxu0 0
        %2809 = vmatprep.subr.bf16.mxu0 0
        %2810 = vmatpush1.bf16.msra.mxu0 0
        %2811 = vmatprep.subr.bf16.mxu0 0
        %2812 = vmatpush1.bf16.msra.mxu0 0
        %2813 = vmatprep.subr.bf16.mxu0 %v2779
        %2814 = vmatpush1.bf16.msra.mxu0 %v2776
        %2815 = vmatprep.subr.bf16.mxu0 0
        %2816 = vmatpush2.bf16.msra.mxu0 0
        %2817 = vmatprep.subr.bf16.mxu0 0
        %2818 = vmatpush2.bf16.msra.mxu0 0
        %2819 = vmatprep.subr.bf16.mxu0 0
        %2820 = vmatpush2.bf16.msra.mxu0 0
        %2821 = vmatprep.subr.bf16.mxu0 0
        %2822 = vmatpush2.bf16.msra.mxu0 0
        %2823 = vmatprep.subr.bf16.mxu0 0
        %2824 = vmatpush2.bf16.msra.mxu0 0
        %2825 = vmatprep.subr.bf16.mxu0 0
        %2826 = vmatpush2.bf16.msra.mxu0 0
        %2827 = vmatprep.subr.bf16.mxu0 0
        %2828 = vmatpush2.bf16.msra.mxu0 0
        %2829 = vmatprep.subr.bf16.mxu0 0
        %2830 = vmatpush2.bf16.msra.mxu0 0
        %2831 = vmatprep.mubr.bf16.mxu0 0
        %2832 = vmatmul.mubr.bf16.gmra.mxu0 %v2773
        %v2833 = vpop.f32.mrf.mxu0
        %v2834 = vadd.f32 0.0, %v2833
        %v2835 = vpop.f32.mrf.mxu0
        %v2836 = vadd.f32 0.0, %v2835
        %v2837 = vpop.f32.mrf.mxu0
        %v2838 = vpop.f32.mrf.mxu0
        %2839 = vdwg.mxu0
        %2840 = vmatprep.subr.bf16.mxu0 0
        %2841 = vmatpush1.bf16.msra.mxu0 0
        %2842 = vmatprep.subr.bf16.mxu0 0
        %2843 = vmatpush1.bf16.msra.mxu0 0
        %2844 = vmatprep.subr.bf16.mxu0 0
        %2845 = vmatpush1.bf16.msra.mxu0 0
        %2846 = vmatprep.subr.bf16.mxu0 0
        %2847 = vmatpush1.bf16.msra.mxu0 0
        %2848 = vmatprep.subr.bf16.mxu0 0
        %2849 = vmatpush1.bf16.msra.mxu0 0
        %2850 = vmatprep.subr.bf16.mxu0 0
        %2851 = vmatpush1.bf16.msra.mxu0 0
        %2852 = vmatprep.subr.bf16.mxu0 0
        %2853 = vmatpush1.bf16.msra.mxu0 0
        %2854 = vmatprep.subr.bf16.mxu0 %v2785
        %2855 = vmatpush1.bf16.msra.mxu0 %v2782
        %2856 = vmatprep.subr.bf16.mxu0 0
        %2857 = vmatpush2.bf16.msra.mxu0 0
        %2858 = vmatprep.subr.bf16.mxu0 0
        %2859 = vmatpush2.bf16.msra.mxu0 0
        %2860 = vmatprep.subr.bf16.mxu0 0
        %2861 = vmatpush2.bf16.msra.mxu0 0
        %2862 = vmatprep.subr.bf16.mxu0 0
        %2863 = vmatpush2.bf16.msra.mxu0 0
        %2864 = vmatprep.subr.bf16.mxu0 0
        %2865 = vmatpush2.bf16.msra.mxu0 0
        %2866 = vmatprep.subr.bf16.mxu0 0
        %2867 = vmatpush2.bf16.msra.mxu0 0
        %2868 = vmatprep.subr.bf16.mxu0 0
        %2869 = vmatpush2.bf16.msra.mxu0 0
        %2870 = vmatprep.subr.bf16.mxu0 0
        %2871 = vmatpush2.bf16.msra.mxu0 0
        %2872 = vmatprep.mubr.bf16.mxu0 0
        %2873 = vmatmul.mubr.bf16.gmra.mxu0 %v2773
        %v2874 = vpop.f32.mrf.mxu0
        %v2875 = vadd.f32 0.0, %v2874
        %v2876 = vpop.f32.mrf.mxu0
        %v2877 = vadd.f32 0.0, %v2876
        %v2878 = vpop.f32.mrf.mxu0
        %v2879 = vpop.f32.mrf.mxu0
        %2880 = vdwg.mxu0
        %2881 = vmatprep.subr.bf16.mxu0 0
        %2882 = vmatpush1.bf16.msra.mxu0 0
        %2883 = vmatprep.subr.bf16.mxu0 0
        %2884 = vmatpush1.bf16.msra.mxu0 0
        %2885 = vmatprep.subr.bf16.mxu0 0
        %2886 = vmatpush1.bf16.msra.mxu0 0
        %2887 = vmatprep.subr.bf16.mxu0 0
        %2888 = vmatpush1.bf16.msra.mxu0 0
        %2889 = vmatprep.subr.bf16.mxu0 0
        %2890 = vmatpush1.bf16.msra.mxu0 0
        %2891 = vmatprep.subr.bf16.mxu0 0
        %2892 = vmatpush1.bf16.msra.mxu0 0
        %2893 = vmatprep.subr.bf16.mxu0 0
        %2894 = vmatpush1.bf16.msra.mxu0 0
        %2895 = vmatprep.subr.bf16.mxu0 %v2791
        %2896 = vmatpush1.bf16.msra.mxu0 %v2788
        %2897 = vmatprep.subr.bf16.mxu0 0
        %2898 = vmatpush2.bf16.msra.mxu0 0
        %2899 = vmatprep.subr.bf16.mxu0 0
        %2900 = vmatpush2.bf16.msra.mxu0 0
        %2901 = vmatprep.subr.bf16.mxu0 0
        %2902 = vmatpush2.bf16.msra.mxu0 0
        %2903 = vmatprep.subr.bf16.mxu0 0
        %2904 = vmatpush2.bf16.msra.mxu0 0
        %2905 = vmatprep.subr.bf16.mxu0 0
        %2906 = vmatpush2.bf16.msra.mxu0 0
        %2907 = vmatprep.subr.bf16.mxu0 0
        %2908 = vmatpush2.bf16.msra.mxu0 0
        %2909 = vmatprep.subr.bf16.mxu0 0
        %2910 = vmatpush2.bf16.msra.mxu0 0
        %2911 = vmatprep.subr.bf16.mxu0 0
        %2912 = vmatpush2.bf16.msra.mxu0 0
        %2913 = vmatprep.mubr.bf16.mxu0 0
        %2914 = vmatmul.mubr.bf16.gmra.mxu0 %v2773
        %v2915 = vpop.f32.mrf.mxu0
        %v2916 = vadd.f32 0.0, %v2915
        %v2917 = vpop.f32.mrf.mxu0
        %v2918 = vadd.f32 0.0, %v2917
        %v2919 = vpop.f32.mrf.mxu0
        %v2920 = vpop.f32.mrf.mxu0
        %2921 = vdwg.mxu0
        %2922 = vmatprep.subr.bf16.mxu0 0
        %2923 = vmatpush1.bf16.msra.mxu0 0
        %2924 = vmatprep.subr.bf16.mxu0 0
        %2925 = vmatpush1.bf16.msra.mxu0 0
        %2926 = vmatprep.subr.bf16.mxu0 0
        %2927 = vmatpush1.bf16.msra.mxu0 0
        %2928 = vmatprep.subr.bf16.mxu0 0
        %2929 = vmatpush1.bf16.msra.mxu0 0
        %2930 = vmatprep.subr.bf16.mxu0 0
        %2931 = vmatpush1.bf16.msra.mxu0 0
        %2932 = vmatprep.subr.bf16.mxu0 0
        %2933 = vmatpush1.bf16.msra.mxu0 0
        %2934 = vmatprep.subr.bf16.mxu0 0
        %2935 = vmatpush1.bf16.msra.mxu0 0
        %2936 = vmatprep.subr.bf16.mxu0 %v2797
        %2937 = vmatpush1.bf16.msra.mxu0 %v2794
        %2938 = vmatprep.subr.bf16.mxu0 0
        %2939 = vmatpush2.bf16.msra.mxu0 0
        %2940 = vmatprep.subr.bf16.mxu0 0
        %2941 = vmatpush2.bf16.msra.mxu0 0
        %2942 = vmatprep.subr.bf16.mxu0 0
        %2943 = vmatpush2.bf16.msra.mxu0 0
        %2944 = vmatprep.subr.bf16.mxu0 0
        %2945 = vmatpush2.bf16.msra.mxu0 0
        %2946 = vmatprep.subr.bf16.mxu0 0
        %2947 = vmatpush2.bf16.msra.mxu0 0
        %2948 = vmatprep.subr.bf16.mxu0 0
        %2949 = vmatpush2.bf16.msra.mxu0 0
        %2950 = vmatprep.subr.bf16.mxu0 0
        %2951 = vmatpush2.bf16.msra.mxu0 0
        %2952 = vmatprep.subr.bf16.mxu0 0
        %2953 = vmatpush2.bf16.msra.mxu0 0
        %2954 = vmatprep.mubr.bf16.mxu0 0
        %2955 = vmatmul.mubr.bf16.gmra.mxu0 %v2773
        %v2956 = vpop.f32.mrf.mxu0
        %v2957 = vadd.f32 0.0, %v2956
        %v2958 = vpop.f32.mrf.mxu0
        %v2959 = vadd.f32 0.0, %v2958
        %v2960 = vpop.f32.mrf.mxu0
        %v2961 = vpop.f32.mrf.mxu0
        %2962 = vdwg.mxu0
        %v2963 = vadd.f32 %v2737, %v2834
        %v2964 = vadd.f32 %v2738, %v2836
        %v2965 = vadd.f32 %v2739, %v2875
        %v2966 = vadd.f32 %v2740, %v2877
        %v2967 = vadd.f32 %v2741, %v2916
        %v2968 = vadd.f32 %v2742, %v2918
        %v2969 = vadd.f32 %v2743, %v2957
        %v2970 = vadd.f32 %v2744, %v2959
        %2971 = vrot.lane.b32.xlu0 %v254, 72
        %v2972 = vpop.permute.xlu0 %2971
        %2973 = vrot.lane.b32.xlu0 %v255, 72
        %v2974 = vpop.permute.xlu0 %2973
        %2975 = vrot.lane.b32.xlu0 %v256, 72
        %v2976 = vpop.permute.xlu0 %2975
        %2977 = vrot.lane.b32.xlu0 %v257, 72
        %v2978 = vpop.permute.xlu0 %2977
        %2979 = vrot.lane.b32.xlu0 %v258, 72
        %v2980 = vpop.permute.xlu0 %2979
        %2981 = vrot.lane.b32.xlu0 %v259, 72
        %v2982 = vpop.permute.xlu0 %2981
        %2983 = vrot.lane.b32.xlu0 %v268, 72
        %v2984 = vpop.permute.xlu0 %2983
        %2985 = vrot.lane.b32.xlu0 %v269, 72
        %v2986 = vpop.permute.xlu0 %2985
        %2987 = vrot.lane.b32.xlu0 %v270, 72
        %v2988 = vpop.permute.xlu0 %2987
        %vm2989 = vcmask 588800
        %v2990 = vsel %vm2989, %v2972, %v2974
        %v2991 = vsel %vm2989, %v2974, %v2976
        %v2992 = vsel %vm2989, %v2976, %v2978
        %v2993 = vsel %vm2989, %v2978, %v2980
        %v2994 = vsel %vm2989, %v2980, %v2982
        %v2995 = vsel %vm2989, %v2982, %v2984
        %v2996 = vsel %vm2989, %v2984, %v2986
        %v2997 = vsel %vm2989, %v2986, %v2988
        %v2999 = vsel %vm327, %v285, 0
        %v3002 = vsel %vm331, %v2990, 0
        %v3005 = vsel %vm331, %v2991, 0
        %v3008 = vsel %vm331, %v2992, 0
        %v3011 = vsel %vm331, %v2993, 0
        %v3014 = vsel %vm331, %v2994, 0
        %v3017 = vsel %vm331, %v2995, 0
        %v3020 = vsel %vm331, %v2996, 0
        %v3023 = vsel %vm331, %v2997, 0
        %3025 = vmatprep.subr.bf16.mxu0 0
        %3026 = vmatpush1.bf16.msra.mxu0 0
        %3027 = vmatprep.subr.bf16.mxu0 0
        %3028 = vmatpush1.bf16.msra.mxu0 0
        %3029 = vmatprep.subr.bf16.mxu0 0
        %3030 = vmatpush1.bf16.msra.mxu0 0
        %3031 = vmatprep.subr.bf16.mxu0 0
        %3032 = vmatpush1.bf16.msra.mxu0 0
        %3033 = vmatprep.subr.bf16.mxu0 0
        %3034 = vmatpush1.bf16.msra.mxu0 0
        %3035 = vmatprep.subr.bf16.mxu0 0
        %3036 = vmatpush1.bf16.msra.mxu0 0
        %3037 = vmatprep.subr.bf16.mxu0 0
        %3038 = vmatpush1.bf16.msra.mxu0 0
        %3039 = vmatprep.subr.bf16.mxu0 %v3005
        %3040 = vmatpush1.bf16.msra.mxu0 %v3002
        %3041 = vmatprep.subr.bf16.mxu0 0
        %3042 = vmatpush2.bf16.msra.mxu0 0
        %3043 = vmatprep.subr.bf16.mxu0 0
        %3044 = vmatpush2.bf16.msra.mxu0 0
        %3045 = vmatprep.subr.bf16.mxu0 0
        %3046 = vmatpush2.bf16.msra.mxu0 0
        %3047 = vmatprep.subr.bf16.mxu0 0
        %3048 = vmatpush2.bf16.msra.mxu0 0
        %3049 = vmatprep.subr.bf16.mxu0 0
        %3050 = vmatpush2.bf16.msra.mxu0 0
        %3051 = vmatprep.subr.bf16.mxu0 0
        %3052 = vmatpush2.bf16.msra.mxu0 0
        %3053 = vmatprep.subr.bf16.mxu0 0
        %3054 = vmatpush2.bf16.msra.mxu0 0
        %3055 = vmatprep.subr.bf16.mxu0 0
        %3056 = vmatpush2.bf16.msra.mxu0 0
        %3057 = vmatprep.mubr.bf16.mxu0 0
        %3058 = vmatmul.mubr.bf16.gmra.mxu0 %v2999
        %v3059 = vpop.f32.mrf.mxu0
        %v3060 = vadd.f32 0.0, %v3059
        %v3061 = vpop.f32.mrf.mxu0
        %v3062 = vadd.f32 0.0, %v3061
        %v3063 = vpop.f32.mrf.mxu0
        %v3064 = vpop.f32.mrf.mxu0
        %3065 = vdwg.mxu0
        %3066 = vmatprep.subr.bf16.mxu0 0
        %3067 = vmatpush1.bf16.msra.mxu0 0
        %3068 = vmatprep.subr.bf16.mxu0 0
        %3069 = vmatpush1.bf16.msra.mxu0 0
        %3070 = vmatprep.subr.bf16.mxu0 0
        %3071 = vmatpush1.bf16.msra.mxu0 0
        %3072 = vmatprep.subr.bf16.mxu0 0
        %3073 = vmatpush1.bf16.msra.mxu0 0
        %3074 = vmatprep.subr.bf16.mxu0 0
        %3075 = vmatpush1.bf16.msra.mxu0 0
        %3076 = vmatprep.subr.bf16.mxu0 0
        %3077 = vmatpush1.bf16.msra.mxu0 0
        %3078 = vmatprep.subr.bf16.mxu0 0
        %3079 = vmatpush1.bf16.msra.mxu0 0
        %3080 = vmatprep.subr.bf16.mxu0 %v3011
        %3081 = vmatpush1.bf16.msra.mxu0 %v3008
        %3082 = vmatprep.subr.bf16.mxu0 0
        %3083 = vmatpush2.bf16.msra.mxu0 0
        %3084 = vmatprep.subr.bf16.mxu0 0
        %3085 = vmatpush2.bf16.msra.mxu0 0
        %3086 = vmatprep.subr.bf16.mxu0 0
        %3087 = vmatpush2.bf16.msra.mxu0 0
        %3088 = vmatprep.subr.bf16.mxu0 0
        %3089 = vmatpush2.bf16.msra.mxu0 0
        %3090 = vmatprep.subr.bf16.mxu0 0
        %3091 = vmatpush2.bf16.msra.mxu0 0
        %3092 = vmatprep.subr.bf16.mxu0 0
        %3093 = vmatpush2.bf16.msra.mxu0 0
        %3094 = vmatprep.subr.bf16.mxu0 0
        %3095 = vmatpush2.bf16.msra.mxu0 0
        %3096 = vmatprep.subr.bf16.mxu0 0
        %3097 = vmatpush2.bf16.msra.mxu0 0
        %3098 = vmatprep.mubr.bf16.mxu0 0
        %3099 = vmatmul.mubr.bf16.gmra.mxu0 %v2999
        %v3100 = vpop.f32.mrf.mxu0
        %v3101 = vadd.f32 0.0, %v3100
        %v3102 = vpop.f32.mrf.mxu0
        %v3103 = vadd.f32 0.0, %v3102
        %v3104 = vpop.f32.mrf.mxu0
        %v3105 = vpop.f32.mrf.mxu0
        %3106 = vdwg.mxu0
        %3107 = vmatprep.subr.bf16.mxu0 0
        %3108 = vmatpush1.bf16.msra.mxu0 0
        %3109 = vmatprep.subr.bf16.mxu0 0
        %3110 = vmatpush1.bf16.msra.mxu0 0
        %3111 = vmatprep.subr.bf16.mxu0 0
        %3112 = vmatpush1.bf16.msra.mxu0 0
        %3113 = vmatprep.subr.bf16.mxu0 0
        %3114 = vmatpush1.bf16.msra.mxu0 0
        %3115 = vmatprep.subr.bf16.mxu0 0
        %3116 = vmatpush1.bf16.msra.mxu0 0
        %3117 = vmatprep.subr.bf16.mxu0 0
        %3118 = vmatpush1.bf16.msra.mxu0 0
        %3119 = vmatprep.subr.bf16.mxu0 0
        %3120 = vmatpush1.bf16.msra.mxu0 0
        %3121 = vmatprep.subr.bf16.mxu0 %v3017
        %3122 = vmatpush1.bf16.msra.mxu0 %v3014
        %3123 = vmatprep.subr.bf16.mxu0 0
        %3124 = vmatpush2.bf16.msra.mxu0 0
        %3125 = vmatprep.subr.bf16.mxu0 0
        %3126 = vmatpush2.bf16.msra.mxu0 0
        %3127 = vmatprep.subr.bf16.mxu0 0
        %3128 = vmatpush2.bf16.msra.mxu0 0
        %3129 = vmatprep.subr.bf16.mxu0 0
        %3130 = vmatpush2.bf16.msra.mxu0 0
        %3131 = vmatprep.subr.bf16.mxu0 0
        %3132 = vmatpush2.bf16.msra.mxu0 0
        %3133 = vmatprep.subr.bf16.mxu0 0
        %3134 = vmatpush2.bf16.msra.mxu0 0
        %3135 = vmatprep.subr.bf16.mxu0 0
        %3136 = vmatpush2.bf16.msra.mxu0 0
        %3137 = vmatprep.subr.bf16.mxu0 0
        %3138 = vmatpush2.bf16.msra.mxu0 0
        %3139 = vmatprep.mubr.bf16.mxu0 0
        %3140 = vmatmul.mubr.bf16.gmra.mxu0 %v2999
        %v3141 = vpop.f32.mrf.mxu0
        %v3142 = vadd.f32 0.0, %v3141
        %v3143 = vpop.f32.mrf.mxu0
        %v3144 = vadd.f32 0.0, %v3143
        %v3145 = vpop.f32.mrf.mxu0
        %v3146 = vpop.f32.mrf.mxu0
        %3147 = vdwg.mxu0
        %3148 = vmatprep.subr.bf16.mxu0 0
        %3149 = vmatpush1.bf16.msra.mxu0 0
        %3150 = vmatprep.subr.bf16.mxu0 0
        %3151 = vmatpush1.bf16.msra.mxu0 0
        %3152 = vmatprep.subr.bf16.mxu0 0
        %3153 = vmatpush1.bf16.msra.mxu0 0
        %3154 = vmatprep.subr.bf16.mxu0 0
        %3155 = vmatpush1.bf16.msra.mxu0 0
        %3156 = vmatprep.subr.bf16.mxu0 0
        %3157 = vmatpush1.bf16.msra.mxu0 0
        %3158 = vmatprep.subr.bf16.mxu0 0
        %3159 = vmatpush1.bf16.msra.mxu0 0
        %3160 = vmatprep.subr.bf16.mxu0 0
        %3161 = vmatpush1.bf16.msra.mxu0 0
        %3162 = vmatprep.subr.bf16.mxu0 %v3023
        %3163 = vmatpush1.bf16.msra.mxu0 %v3020
        %3164 = vmatprep.subr.bf16.mxu0 0
        %3165 = vmatpush2.bf16.msra.mxu0 0
        %3166 = vmatprep.subr.bf16.mxu0 0
        %3167 = vmatpush2.bf16.msra.mxu0 0
        %3168 = vmatprep.subr.bf16.mxu0 0
        %3169 = vmatpush2.bf16.msra.mxu0 0
        %3170 = vmatprep.subr.bf16.mxu0 0
        %3171 = vmatpush2.bf16.msra.mxu0 0
        %3172 = vmatprep.subr.bf16.mxu0 0
        %3173 = vmatpush2.bf16.msra.mxu0 0
        %3174 = vmatprep.subr.bf16.mxu0 0
        %3175 = vmatpush2.bf16.msra.mxu0 0
        %3176 = vmatprep.subr.bf16.mxu0 0
        %3177 = vmatpush2.bf16.msra.mxu0 0
        %3178 = vmatprep.subr.bf16.mxu0 0
        %3179 = vmatpush2.bf16.msra.mxu0 0
        %3180 = vmatprep.mubr.bf16.mxu0 0
        %3181 = vmatmul.mubr.bf16.gmra.mxu0 %v2999
        %v3182 = vpop.f32.mrf.mxu0
        %v3183 = vadd.f32 0.0, %v3182
        %v3184 = vpop.f32.mrf.mxu0
        %v3185 = vadd.f32 0.0, %v3184
        %v3186 = vpop.f32.mrf.mxu0
        %v3187 = vpop.f32.mrf.mxu0
        %3188 = vdwg.mxu0
        %v3189 = vadd.f32 %v2963, %v3060
        %v3190 = vadd.f32 %v2964, %v3062
        %v3191 = vadd.f32 %v2965, %v3101
        %v3192 = vadd.f32 %v2966, %v3103
        %v3193 = vadd.f32 %v2967, %v3142
        %v3194 = vadd.f32 %v2968, %v3144
        %v3195 = vadd.f32 %v2969, %v3183
        %v3196 = vadd.f32 %v2970, %v3185
        %3197 = vrot.lane.b32.xlu0 %v254, 70
        %v3198 = vpop.permute.xlu0 %3197
        %3199 = vrot.lane.b32.xlu0 %v255, 70
        %v3200 = vpop.permute.xlu0 %3199
        %3201 = vrot.lane.b32.xlu0 %v256, 70
        %v3202 = vpop.permute.xlu0 %3201
        %3203 = vrot.lane.b32.xlu0 %v257, 70
        %v3204 = vpop.permute.xlu0 %3203
        %3205 = vrot.lane.b32.xlu0 %v258, 70
        %v3206 = vpop.permute.xlu0 %3205
        %3207 = vrot.lane.b32.xlu0 %v259, 70
        %v3208 = vpop.permute.xlu0 %3207
        %3209 = vrot.lane.b32.xlu0 %v268, 70
        %v3210 = vpop.permute.xlu0 %3209
        %3211 = vrot.lane.b32.xlu0 %v269, 70
        %v3212 = vpop.permute.xlu0 %3211
        %3213 = vrot.lane.b32.xlu0 %v270, 70
        %v3214 = vpop.permute.xlu0 %3213
        %vm3215 = vcmask 572416
        %v3216 = vsel %vm3215, %v3198, %v3200
        %v3217 = vsel %vm3215, %v3200, %v3202
        %v3218 = vsel %vm3215, %v3202, %v3204
        %v3219 = vsel %vm3215, %v3204, %v3206
        %v3220 = vsel %vm3215, %v3206, %v3208
        %v3221 = vsel %vm3215, %v3208, %v3210
        %v3222 = vsel %vm3215, %v3210, %v3212
        %v3223 = vsel %vm3215, %v3212, %v3214
        %v3225 = vsel %vm327, %v286, 0
        %v3228 = vsel %vm331, %v3216, 0
        %v3231 = vsel %vm331, %v3217, 0
        %v3234 = vsel %vm331, %v3218, 0
        %v3237 = vsel %vm331, %v3219, 0
        %v3240 = vsel %vm331, %v3220, 0
        %v3243 = vsel %vm331, %v3221, 0
        %v3246 = vsel %vm331, %v3222, 0
        %v3249 = vsel %vm331, %v3223, 0
        %3251 = vmatprep.subr.bf16.mxu0 0
        %3252 = vmatpush1.bf16.msra.mxu0 0
        %3253 = vmatprep.subr.bf16.mxu0 0
        %3254 = vmatpush1.bf16.msra.mxu0 0
        %3255 = vmatprep.subr.bf16.mxu0 0
        %3256 = vmatpush1.bf16.msra.mxu0 0
        %3257 = vmatprep.subr.bf16.mxu0 0
        %3258 = vmatpush1.bf16.msra.mxu0 0
        %3259 = vmatprep.subr.bf16.mxu0 0
        %3260 = vmatpush1.bf16.msra.mxu0 0
        %3261 = vmatprep.subr.bf16.mxu0 0
        %3262 = vmatpush1.bf16.msra.mxu0 0
        %3263 = vmatprep.subr.bf16.mxu0 0
        %3264 = vmatpush1.bf16.msra.mxu0 0
        %3265 = vmatprep.subr.bf16.mxu0 %v3231
        %3266 = vmatpush1.bf16.msra.mxu0 %v3228
        %3267 = vmatprep.subr.bf16.mxu0 0
        %3268 = vmatpush2.bf16.msra.mxu0 0
        %3269 = vmatprep.subr.bf16.mxu0 0
        %3270 = vmatpush2.bf16.msra.mxu0 0
        %3271 = vmatprep.subr.bf16.mxu0 0
        %3272 = vmatpush2.bf16.msra.mxu0 0
        %3273 = vmatprep.subr.bf16.mxu0 0
        %3274 = vmatpush2.bf16.msra.mxu0 0
        %3275 = vmatprep.subr.bf16.mxu0 0
        %3276 = vmatpush2.bf16.msra.mxu0 0
        %3277 = vmatprep.subr.bf16.mxu0 0
        %3278 = vmatpush2.bf16.msra.mxu0 0
        %3279 = vmatprep.subr.bf16.mxu0 0
        %3280 = vmatpush2.bf16.msra.mxu0 0
        %3281 = vmatprep.subr.bf16.mxu0 0
        %3282 = vmatpush2.bf16.msra.mxu0 0
        %3283 = vmatprep.mubr.bf16.mxu0 0
        %3284 = vmatmul.mubr.bf16.gmra.mxu0 %v3225
        %v3285 = vpop.f32.mrf.mxu0
        %v3286 = vadd.f32 0.0, %v3285
        %v3287 = vpop.f32.mrf.mxu0
        %v3288 = vadd.f32 0.0, %v3287
        %v3289 = vpop.f32.mrf.mxu0
        %v3290 = vpop.f32.mrf.mxu0
        %3291 = vdwg.mxu0
        %3292 = vmatprep.subr.bf16.mxu0 0
        %3293 = vmatpush1.bf16.msra.mxu0 0
        %3294 = vmatprep.subr.bf16.mxu0 0
        %3295 = vmatpush1.bf16.msra.mxu0 0
        %3296 = vmatprep.subr.bf16.mxu0 0
        %3297 = vmatpush1.bf16.msra.mxu0 0
        %3298 = vmatprep.subr.bf16.mxu0 0
        %3299 = vmatpush1.bf16.msra.mxu0 0
        %3300 = vmatprep.subr.bf16.mxu0 0
        %3301 = vmatpush1.bf16.msra.mxu0 0
        %3302 = vmatprep.subr.bf16.mxu0 0
        %3303 = vmatpush1.bf16.msra.mxu0 0
        %3304 = vmatprep.subr.bf16.mxu0 0
        %3305 = vmatpush1.bf16.msra.mxu0 0
        %3306 = vmatprep.subr.bf16.mxu0 %v3237
        %3307 = vmatpush1.bf16.msra.mxu0 %v3234
        %3308 = vmatprep.subr.bf16.mxu0 0
        %3309 = vmatpush2.bf16.msra.mxu0 0
        %3310 = vmatprep.subr.bf16.mxu0 0
        %3311 = vmatpush2.bf16.msra.mxu0 0
        %3312 = vmatprep.subr.bf16.mxu0 0
        %3313 = vmatpush2.bf16.msra.mxu0 0
        %3314 = vmatprep.subr.bf16.mxu0 0
        %3315 = vmatpush2.bf16.msra.mxu0 0
        %3316 = vmatprep.subr.bf16.mxu0 0
        %3317 = vmatpush2.bf16.msra.mxu0 0
        %3318 = vmatprep.subr.bf16.mxu0 0
        %3319 = vmatpush2.bf16.msra.mxu0 0
        %3320 = vmatprep.subr.bf16.mxu0 0
        %3321 = vmatpush2.bf16.msra.mxu0 0
        %3322 = vmatprep.subr.bf16.mxu0 0
        %3323 = vmatpush2.bf16.msra.mxu0 0
        %3324 = vmatprep.mubr.bf16.mxu0 0
        %3325 = vmatmul.mubr.bf16.gmra.mxu0 %v3225
        %v3326 = vpop.f32.mrf.mxu0
        %v3327 = vadd.f32 0.0, %v3326
        %v3328 = vpop.f32.mrf.mxu0
        %v3329 = vadd.f32 0.0, %v3328
        %v3330 = vpop.f32.mrf.mxu0
        %v3331 = vpop.f32.mrf.mxu0
        %3332 = vdwg.mxu0
        %3333 = vmatprep.subr.bf16.mxu0 0
        %3334 = vmatpush1.bf16.msra.mxu0 0
        %3335 = vmatprep.subr.bf16.mxu0 0
        %3336 = vmatpush1.bf16.msra.mxu0 0
        %3337 = vmatprep.subr.bf16.mxu0 0
        %3338 = vmatpush1.bf16.msra.mxu0 0
        %3339 = vmatprep.subr.bf16.mxu0 0
        %3340 = vmatpush1.bf16.msra.mxu0 0
        %3341 = vmatprep.subr.bf16.mxu0 0
        %3342 = vmatpush1.bf16.msra.mxu0 0
        %3343 = vmatprep.subr.bf16.mxu0 0
        %3344 = vmatpush1.bf16.msra.mxu0 0
        %3345 = vmatprep.subr.bf16.mxu0 0
        %3346 = vmatpush1.bf16.msra.mxu0 0
        %3347 = vmatprep.subr.bf16.mxu0 %v3243
        %3348 = vmatpush1.bf16.msra.mxu0 %v3240
        %3349 = vmatprep.subr.bf16.mxu0 0
        %3350 = vmatpush2.bf16.msra.mxu0 0
        %3351 = vmatprep.subr.bf16.mxu0 0
        %3352 = vmatpush2.bf16.msra.mxu0 0
        %3353 = vmatprep.subr.bf16.mxu0 0
        %3354 = vmatpush2.bf16.msra.mxu0 0
        %3355 = vmatprep.subr.bf16.mxu0 0
        %3356 = vmatpush2.bf16.msra.mxu0 0
        %3357 = vmatprep.subr.bf16.mxu0 0
        %3358 = vmatpush2.bf16.msra.mxu0 0
        %3359 = vmatprep.subr.bf16.mxu0 0
        %3360 = vmatpush2.bf16.msra.mxu0 0
        %3361 = vmatprep.subr.bf16.mxu0 0
        %3362 = vmatpush2.bf16.msra.mxu0 0
        %3363 = vmatprep.subr.bf16.mxu0 0
        %3364 = vmatpush2.bf16.msra.mxu0 0
        %3365 = vmatprep.mubr.bf16.mxu0 0
        %3366 = vmatmul.mubr.bf16.gmra.mxu0 %v3225
        %v3367 = vpop.f32.mrf.mxu0
        %v3368 = vadd.f32 0.0, %v3367
        %v3369 = vpop.f32.mrf.mxu0
        %v3370 = vadd.f32 0.0, %v3369
        %v3371 = vpop.f32.mrf.mxu0
        %v3372 = vpop.f32.mrf.mxu0
        %3373 = vdwg.mxu0
        %3374 = vmatprep.subr.bf16.mxu0 0
        %3375 = vmatpush1.bf16.msra.mxu0 0
        %3376 = vmatprep.subr.bf16.mxu0 0
        %3377 = vmatpush1.bf16.msra.mxu0 0
        %3378 = vmatprep.subr.bf16.mxu0 0
        %3379 = vmatpush1.bf16.msra.mxu0 0
        %3380 = vmatprep.subr.bf16.mxu0 0
        %3381 = vmatpush1.bf16.msra.mxu0 0
        %3382 = vmatprep.subr.bf16.mxu0 0
        %3383 = vmatpush1.bf16.msra.mxu0 0
        %3384 = vmatprep.subr.bf16.mxu0 0
        %3385 = vmatpush1.bf16.msra.mxu0 0
        %3386 = vmatprep.subr.bf16.mxu0 0
        %3387 = vmatpush1.bf16.msra.mxu0 0
        %3388 = vmatprep.subr.bf16.mxu0 %v3249
        %3389 = vmatpush1.bf16.msra.mxu0 %v3246
        %3390 = vmatprep.subr.bf16.mxu0 0
        %3391 = vmatpush2.bf16.msra.mxu0 0
        %3392 = vmatprep.subr.bf16.mxu0 0
        %3393 = vmatpush2.bf16.msra.mxu0 0
        %3394 = vmatprep.subr.bf16.mxu0 0
        %3395 = vmatpush2.bf16.msra.mxu0 0
        %3396 = vmatprep.subr.bf16.mxu0 0
        %3397 = vmatpush2.bf16.msra.mxu0 0
        %3398 = vmatprep.subr.bf16.mxu0 0
        %3399 = vmatpush2.bf16.msra.mxu0 0
        %3400 = vmatprep.subr.bf16.mxu0 0
        %3401 = vmatpush2.bf16.msra.mxu0 0
        %3402 = vmatprep.subr.bf16.mxu0 0
        %3403 = vmatpush2.bf16.msra.mxu0 0
        %3404 = vmatprep.subr.bf16.mxu0 0
        %3405 = vmatpush2.bf16.msra.mxu0 0
        %3406 = vmatprep.mubr.bf16.mxu0 0
        %3407 = vmatmul.mubr.bf16.gmra.mxu0 %v3225
        %v3408 = vpop.f32.mrf.mxu0
        %v3409 = vadd.f32 0.0, %v3408
        %v3410 = vpop.f32.mrf.mxu0
        %v3411 = vadd.f32 0.0, %v3410
        %v3412 = vpop.f32.mrf.mxu0
        %v3413 = vpop.f32.mrf.mxu0
        %3414 = vdwg.mxu0
        %v3415 = vadd.f32 %v3189, %v3286
        %v3416 = vadd.f32 %v3190, %v3288
        %v3417 = vadd.f32 %v3191, %v3327
        %v3418 = vadd.f32 %v3192, %v3329
        %v3419 = vadd.f32 %v3193, %v3368
        %v3420 = vadd.f32 %v3194, %v3370
        %v3421 = vadd.f32 %v3195, %v3409
        %v3422 = vadd.f32 %v3196, %v3411
        %3423 = vrot.lane.b32.xlu0 %v254, 68
        %v3424 = vpop.permute.xlu0 %3423
        %3425 = vrot.lane.b32.xlu0 %v255, 68
        %v3426 = vpop.permute.xlu0 %3425
        %3427 = vrot.lane.b32.xlu0 %v256, 68
        %v3428 = vpop.permute.xlu0 %3427
        %3429 = vrot.lane.b32.xlu0 %v257, 68
        %v3430 = vpop.permute.xlu0 %3429
        %3431 = vrot.lane.b32.xlu0 %v258, 68
        %v3432 = vpop.permute.xlu0 %3431
        %3433 = vrot.lane.b32.xlu0 %v259, 68
        %v3434 = vpop.permute.xlu0 %3433
        %3435 = vrot.lane.b32.xlu0 %v268, 68
        %v3436 = vpop.permute.xlu0 %3435
        %3437 = vrot.lane.b32.xlu0 %v269, 68
        %v3438 = vpop.permute.xlu0 %3437
        %3439 = vrot.lane.b32.xlu0 %v270, 68
        %v3440 = vpop.permute.xlu0 %3439
        %vm3441 = vcmask 556032
        %v3442 = vsel %vm3441, %v3424, %v3426
        %v3443 = vsel %vm3441, %v3426, %v3428
        %v3444 = vsel %vm3441, %v3428, %v3430
        %v3445 = vsel %vm3441, %v3430, %v3432
        %v3446 = vsel %vm3441, %v3432, %v3434
        %v3447 = vsel %vm3441, %v3434, %v3436
        %v3448 = vsel %vm3441, %v3436, %v3438
        %v3449 = vsel %vm3441, %v3438, %v3440
        %v3451 = vsel %vm327, %v287, 0
        %v3454 = vsel %vm331, %v3442, 0
        %v3457 = vsel %vm331, %v3443, 0
        %v3460 = vsel %vm331, %v3444, 0
        %v3463 = vsel %vm331, %v3445, 0
        %v3466 = vsel %vm331, %v3446, 0
        %v3469 = vsel %vm331, %v3447, 0
        %v3472 = vsel %vm331, %v3448, 0
        %v3475 = vsel %vm331, %v3449, 0
        %3477 = vmatprep.subr.bf16.mxu0 0
        %3478 = vmatpush1.bf16.msra.mxu0 0
        %3479 = vmatprep.subr.bf16.mxu0 0
        %3480 = vmatpush1.bf16.msra.mxu0 0
        %3481 = vmatprep.subr.bf16.mxu0 0
        %3482 = vmatpush1.bf16.msra.mxu0 0
        %3483 = vmatprep.subr.bf16.mxu0 0
        %3484 = vmatpush1.bf16.msra.mxu0 0
        %3485 = vmatprep.subr.bf16.mxu0 0
        %3486 = vmatpush1.bf16.msra.mxu0 0
        %3487 = vmatprep.subr.bf16.mxu0 0
        %3488 = vmatpush1.bf16.msra.mxu0 0
        %3489 = vmatprep.subr.bf16.mxu0 0
        %3490 = vmatpush1.bf16.msra.mxu0 0
        %3491 = vmatprep.subr.bf16.mxu0 %v3457
        %3492 = vmatpush1.bf16.msra.mxu0 %v3454
        %3493 = vmatprep.subr.bf16.mxu0 0
        %3494 = vmatpush2.bf16.msra.mxu0 0
        %3495 = vmatprep.subr.bf16.mxu0 0
        %3496 = vmatpush2.bf16.msra.mxu0 0
        %3497 = vmatprep.subr.bf16.mxu0 0
        %3498 = vmatpush2.bf16.msra.mxu0 0
        %3499 = vmatprep.subr.bf16.mxu0 0
        %3500 = vmatpush2.bf16.msra.mxu0 0
        %3501 = vmatprep.subr.bf16.mxu0 0
        %3502 = vmatpush2.bf16.msra.mxu0 0
        %3503 = vmatprep.subr.bf16.mxu0 0
        %3504 = vmatpush2.bf16.msra.mxu0 0
        %3505 = vmatprep.subr.bf16.mxu0 0
        %3506 = vmatpush2.bf16.msra.mxu0 0
        %3507 = vmatprep.subr.bf16.mxu0 0
        %3508 = vmatpush2.bf16.msra.mxu0 0
        %3509 = vmatprep.mubr.bf16.mxu0 0
        %3510 = vmatmul.mubr.bf16.gmra.mxu0 %v3451
        %v3511 = vpop.f32.mrf.mxu0
        %v3512 = vadd.f32 0.0, %v3511
        %v3513 = vpop.f32.mrf.mxu0
        %v3514 = vadd.f32 0.0, %v3513
        %v3515 = vpop.f32.mrf.mxu0
        %v3516 = vpop.f32.mrf.mxu0
        %3517 = vdwg.mxu0
        %3518 = vmatprep.subr.bf16.mxu0 0
        %3519 = vmatpush1.bf16.msra.mxu0 0
        %3520 = vmatprep.subr.bf16.mxu0 0
        %3521 = vmatpush1.bf16.msra.mxu0 0
        %3522 = vmatprep.subr.bf16.mxu0 0
        %3523 = vmatpush1.bf16.msra.mxu0 0
        %3524 = vmatprep.subr.bf16.mxu0 0
        %3525 = vmatpush1.bf16.msra.mxu0 0
        %3526 = vmatprep.subr.bf16.mxu0 0
        %3527 = vmatpush1.bf16.msra.mxu0 0
        %3528 = vmatprep.subr.bf16.mxu0 0
        %3529 = vmatpush1.bf16.msra.mxu0 0
        %3530 = vmatprep.subr.bf16.mxu0 0
        %3531 = vmatpush1.bf16.msra.mxu0 0
        %3532 = vmatprep.subr.bf16.mxu0 %v3463
        %3533 = vmatpush1.bf16.msra.mxu0 %v3460
        %3534 = vmatprep.subr.bf16.mxu0 0
        %3535 = vmatpush2.bf16.msra.mxu0 0
        %3536 = vmatprep.subr.bf16.mxu0 0
        %3537 = vmatpush2.bf16.msra.mxu0 0
        %3538 = vmatprep.subr.bf16.mxu0 0
        %3539 = vmatpush2.bf16.msra.mxu0 0
        %3540 = vmatprep.subr.bf16.mxu0 0
        %3541 = vmatpush2.bf16.msra.mxu0 0
        %3542 = vmatprep.subr.bf16.mxu0 0
        %3543 = vmatpush2.bf16.msra.mxu0 0
        %3544 = vmatprep.subr.bf16.mxu0 0
        %3545 = vmatpush2.bf16.msra.mxu0 0
        %3546 = vmatprep.subr.bf16.mxu0 0
        %3547 = vmatpush2.bf16.msra.mxu0 0
        %3548 = vmatprep.subr.bf16.mxu0 0
        %3549 = vmatpush2.bf16.msra.mxu0 0
        %3550 = vmatprep.mubr.bf16.mxu0 0
        %3551 = vmatmul.mubr.bf16.gmra.mxu0 %v3451
        %v3552 = vpop.f32.mrf.mxu0
        %v3553 = vadd.f32 0.0, %v3552
        %v3554 = vpop.f32.mrf.mxu0
        %v3555 = vadd.f32 0.0, %v3554
        %v3556 = vpop.f32.mrf.mxu0
        %v3557 = vpop.f32.mrf.mxu0
        %3558 = vdwg.mxu0
        %3559 = vmatprep.subr.bf16.mxu0 0
        %3560 = vmatpush1.bf16.msra.mxu0 0
        %3561 = vmatprep.subr.bf16.mxu0 0
        %3562 = vmatpush1.bf16.msra.mxu0 0
        %3563 = vmatprep.subr.bf16.mxu0 0
        %3564 = vmatpush1.bf16.msra.mxu0 0
        %3565 = vmatprep.subr.bf16.mxu0 0
        %3566 = vmatpush1.bf16.msra.mxu0 0
        %3567 = vmatprep.subr.bf16.mxu0 0
        %3568 = vmatpush1.bf16.msra.mxu0 0
        %3569 = vmatprep.subr.bf16.mxu0 0
        %3570 = vmatpush1.bf16.msra.mxu0 0
        %3571 = vmatprep.subr.bf16.mxu0 0
        %3572 = vmatpush1.bf16.msra.mxu0 0
        %3573 = vmatprep.subr.bf16.mxu0 %v3469
        %3574 = vmatpush1.bf16.msra.mxu0 %v3466
        %3575 = vmatprep.subr.bf16.mxu0 0
        %3576 = vmatpush2.bf16.msra.mxu0 0
        %3577 = vmatprep.subr.bf16.mxu0 0
        %3578 = vmatpush2.bf16.msra.mxu0 0
        %3579 = vmatprep.subr.bf16.mxu0 0
        %3580 = vmatpush2.bf16.msra.mxu0 0
        %3581 = vmatprep.subr.bf16.mxu0 0
        %3582 = vmatpush2.bf16.msra.mxu0 0
        %3583 = vmatprep.subr.bf16.mxu0 0
        %3584 = vmatpush2.bf16.msra.mxu0 0
        %3585 = vmatprep.subr.bf16.mxu0 0
        %3586 = vmatpush2.bf16.msra.mxu0 0
        %3587 = vmatprep.subr.bf16.mxu0 0
        %3588 = vmatpush2.bf16.msra.mxu0 0
        %3589 = vmatprep.subr.bf16.mxu0 0
        %3590 = vmatpush2.bf16.msra.mxu0 0
        %3591 = vmatprep.mubr.bf16.mxu0 0
        %3592 = vmatmul.mubr.bf16.gmra.mxu0 %v3451
        %v3593 = vpop.f32.mrf.mxu0
        %v3594 = vadd.f32 0.0, %v3593
        %v3595 = vpop.f32.mrf.mxu0
        %v3596 = vadd.f32 0.0, %v3595
        %v3597 = vpop.f32.mrf.mxu0
        %v3598 = vpop.f32.mrf.mxu0
        %3599 = vdwg.mxu0
        %3600 = vmatprep.subr.bf16.mxu0 0
        %3601 = vmatpush1.bf16.msra.mxu0 0
        %3602 = vmatprep.subr.bf16.mxu0 0
        %3603 = vmatpush1.bf16.msra.mxu0 0
        %3604 = vmatprep.subr.bf16.mxu0 0
        %3605 = vmatpush1.bf16.msra.mxu0 0
        %3606 = vmatprep.subr.bf16.mxu0 0
        %3607 = vmatpush1.bf16.msra.mxu0 0
        %3608 = vmatprep.subr.bf16.mxu0 0
        %3609 = vmatpush1.bf16.msra.mxu0 0
        %3610 = vmatprep.subr.bf16.mxu0 0
        %3611 = vmatpush1.bf16.msra.mxu0 0
        %3612 = vmatprep.subr.bf16.mxu0 0
        %3613 = vmatpush1.bf16.msra.mxu0 0
        %3614 = vmatprep.subr.bf16.mxu0 %v3475
        %3615 = vmatpush1.bf16.msra.mxu0 %v3472
        %3616 = vmatprep.subr.bf16.mxu0 0
        %3617 = vmatpush2.bf16.msra.mxu0 0
        %3618 = vmatprep.subr.bf16.mxu0 0
        %3619 = vmatpush2.bf16.msra.mxu0 0
        %3620 = vmatprep.subr.bf16.mxu0 0
        %3621 = vmatpush2.bf16.msra.mxu0 0
        %3622 = vmatprep.subr.bf16.mxu0 0
        %3623 = vmatpush2.bf16.msra.mxu0 0
        %3624 = vmatprep.subr.bf16.mxu0 0
        %3625 = vmatpush2.bf16.msra.mxu0 0
        %3626 = vmatprep.subr.bf16.mxu0 0
        %3627 = vmatpush2.bf16.msra.mxu0 0
        %3628 = vmatprep.subr.bf16.mxu0 0
        %3629 = vmatpush2.bf16.msra.mxu0 0
        %3630 = vmatprep.subr.bf16.mxu0 0
        %3631 = vmatpush2.bf16.msra.mxu0 0
        %3632 = vmatprep.mubr.bf16.mxu0 0
        %3633 = vmatmul.mubr.bf16.gmra.mxu0 %v3451
        %v3634 = vpop.f32.mrf.mxu0
        %v3635 = vadd.f32 0.0, %v3634
        %v3636 = vpop.f32.mrf.mxu0
        %v3637 = vadd.f32 0.0, %v3636
        %v3638 = vpop.f32.mrf.mxu0
        %v3639 = vpop.f32.mrf.mxu0
        %3640 = vdwg.mxu0
        %v3641 = vadd.f32 %v3415, %v3512
        %v3642 = vadd.f32 %v3416, %v3514
        %v3643 = vadd.f32 %v3417, %v3553
        %v3644 = vadd.f32 %v3418, %v3555
        %v3645 = vadd.f32 %v3419, %v3594
        %v3646 = vadd.f32 %v3420, %v3596
        %v3647 = vadd.f32 %v3421, %v3635
        %v3648 = vadd.f32 %v3422, %v3637
        %3649 = vrot.lane.b32.xlu0 %v254, 48
        %v3650 = vpop.permute.xlu0 %3649
        %3651 = vrot.lane.b32.xlu0 %v255, 48
        %v3652 = vpop.permute.xlu0 %3651
        %3653 = vrot.lane.b32.xlu0 %v256, 48
        %v3654 = vpop.permute.xlu0 %3653
        %3655 = vrot.lane.b32.xlu0 %v257, 48
        %v3656 = vpop.permute.xlu0 %3655
        %3657 = vrot.lane.b32.xlu0 %v258, 48
        %v3658 = vpop.permute.xlu0 %3657
        %3659 = vrot.lane.b32.xlu0 %v259, 48
        %v3660 = vpop.permute.xlu0 %3659
        %3661 = vrot.lane.b32.xlu0 %v268, 48
        %v3662 = vpop.permute.xlu0 %3661
        %3663 = vrot.lane.b32.xlu0 %v269, 48
        %v3664 = vpop.permute.xlu0 %3663
        %3665 = vrot.lane.b32.xlu0 %v270, 48
        %v3666 = vpop.permute.xlu0 %3665
        %vm3667 = vcmask 392192
        %v3668 = vsel %vm3667, %v3650, %v3652
        %v3669 = vsel %vm3667, %v3652, %v3654
        %v3670 = vsel %vm3667, %v3654, %v3656
        %v3671 = vsel %vm3667, %v3656, %v3658
        %v3672 = vsel %vm3667, %v3658, %v3660
        %v3673 = vsel %vm3667, %v3660, %v3662
        %v3674 = vsel %vm3667, %v3662, %v3664
        %v3675 = vsel %vm3667, %v3664, %v3666
        %v3677 = vsel %vm327, %v288, 0
        %v3680 = vsel %vm331, %v3668, 0
        %v3683 = vsel %vm331, %v3669, 0
        %v3686 = vsel %vm331, %v3670, 0
        %v3689 = vsel %vm331, %v3671, 0
        %v3692 = vsel %vm331, %v3672, 0
        %v3695 = vsel %vm331, %v3673, 0
        %v3698 = vsel %vm331, %v3674, 0
        %v3701 = vsel %vm331, %v3675, 0
        %3703 = vmatprep.subr.bf16.mxu0 0
        %3704 = vmatpush1.bf16.msra.mxu0 0
        %3705 = vmatprep.subr.bf16.mxu0 0
        %3706 = vmatpush1.bf16.msra.mxu0 0
        %3707 = vmatprep.subr.bf16.mxu0 0
        %3708 = vmatpush1.bf16.msra.mxu0 0
        %3709 = vmatprep.subr.bf16.mxu0 0
        %3710 = vmatpush1.bf16.msra.mxu0 0
        %3711 = vmatprep.subr.bf16.mxu0 0
        %3712 = vmatpush1.bf16.msra.mxu0 0
        %3713 = vmatprep.subr.bf16.mxu0 0
        %3714 = vmatpush1.bf16.msra.mxu0 0
        %3715 = vmatprep.subr.bf16.mxu0 0
        %3716 = vmatpush1.bf16.msra.mxu0 0
        %3717 = vmatprep.subr.bf16.mxu0 %v3683
        %3718 = vmatpush1.bf16.msra.mxu0 %v3680
        %3719 = vmatprep.subr.bf16.mxu0 0
        %3720 = vmatpush2.bf16.msra.mxu0 0
        %3721 = vmatprep.subr.bf16.mxu0 0
        %3722 = vmatpush2.bf16.msra.mxu0 0
        %3723 = vmatprep.subr.bf16.mxu0 0
        %3724 = vmatpush2.bf16.msra.mxu0 0
        %3725 = vmatprep.subr.bf16.mxu0 0
        %3726 = vmatpush2.bf16.msra.mxu0 0
        %3727 = vmatprep.subr.bf16.mxu0 0
        %3728 = vmatpush2.bf16.msra.mxu0 0
        %3729 = vmatprep.subr.bf16.mxu0 0
        %3730 = vmatpush2.bf16.msra.mxu0 0
        %3731 = vmatprep.subr.bf16.mxu0 0
        %3732 = vmatpush2.bf16.msra.mxu0 0
        %3733 = vmatprep.subr.bf16.mxu0 0
        %3734 = vmatpush2.bf16.msra.mxu0 0
        %3735 = vmatprep.mubr.bf16.mxu0 0
        %3736 = vmatmul.mubr.bf16.gmra.mxu0 %v3677
        %v3737 = vpop.f32.mrf.mxu0
        %v3738 = vadd.f32 0.0, %v3737
        %v3739 = vpop.f32.mrf.mxu0
        %v3740 = vadd.f32 0.0, %v3739
        %v3741 = vpop.f32.mrf.mxu0
        %v3742 = vpop.f32.mrf.mxu0
        %3743 = vdwg.mxu0
        %3744 = vmatprep.subr.bf16.mxu0 0
        %3745 = vmatpush1.bf16.msra.mxu0 0
        %3746 = vmatprep.subr.bf16.mxu0 0
        %3747 = vmatpush1.bf16.msra.mxu0 0
        %3748 = vmatprep.subr.bf16.mxu0 0
        %3749 = vmatpush1.bf16.msra.mxu0 0
        %3750 = vmatprep.subr.bf16.mxu0 0
        %3751 = vmatpush1.bf16.msra.mxu0 0
        %3752 = vmatprep.subr.bf16.mxu0 0
        %3753 = vmatpush1.bf16.msra.mxu0 0
        %3754 = vmatprep.subr.bf16.mxu0 0
        %3755 = vmatpush1.bf16.msra.mxu0 0
        %3756 = vmatprep.subr.bf16.mxu0 0
        %3757 = vmatpush1.bf16.msra.mxu0 0
        %3758 = vmatprep.subr.bf16.mxu0 %v3689
        %3759 = vmatpush1.bf16.msra.mxu0 %v3686
        %3760 = vmatprep.subr.bf16.mxu0 0
        %3761 = vmatpush2.bf16.msra.mxu0 0
        %3762 = vmatprep.subr.bf16.mxu0 0
        %3763 = vmatpush2.bf16.msra.mxu0 0
        %3764 = vmatprep.subr.bf16.mxu0 0
        %3765 = vmatpush2.bf16.msra.mxu0 0
        %3766 = vmatprep.subr.bf16.mxu0 0
        %3767 = vmatpush2.bf16.msra.mxu0 0
        %3768 = vmatprep.subr.bf16.mxu0 0
        %3769 = vmatpush2.bf16.msra.mxu0 0
        %3770 = vmatprep.subr.bf16.mxu0 0
        %3771 = vmatpush2.bf16.msra.mxu0 0
        %3772 = vmatprep.subr.bf16.mxu0 0
        %3773 = vmatpush2.bf16.msra.mxu0 0
        %3774 = vmatprep.subr.bf16.mxu0 0
        %3775 = vmatpush2.bf16.msra.mxu0 0
        %3776 = vmatprep.mubr.bf16.mxu0 0
        %3777 = vmatmul.mubr.bf16.gmra.mxu0 %v3677
        %v3778 = vpop.f32.mrf.mxu0
        %v3779 = vadd.f32 0.0, %v3778
        %v3780 = vpop.f32.mrf.mxu0
        %v3781 = vadd.f32 0.0, %v3780
        %v3782 = vpop.f32.mrf.mxu0
        %v3783 = vpop.f32.mrf.mxu0
        %3784 = vdwg.mxu0
        %3785 = vmatprep.subr.bf16.mxu0 0
        %3786 = vmatpush1.bf16.msra.mxu0 0
        %3787 = vmatprep.subr.bf16.mxu0 0
        %3788 = vmatpush1.bf16.msra.mxu0 0
        %3789 = vmatprep.subr.bf16.mxu0 0
        %3790 = vmatpush1.bf16.msra.mxu0 0
        %3791 = vmatprep.subr.bf16.mxu0 0
        %3792 = vmatpush1.bf16.msra.mxu0 0
        %3793 = vmatprep.subr.bf16.mxu0 0
        %3794 = vmatpush1.bf16.msra.mxu0 0
        %3795 = vmatprep.subr.bf16.mxu0 0
        %3796 = vmatpush1.bf16.msra.mxu0 0
        %3797 = vmatprep.subr.bf16.mxu0 0
        %3798 = vmatpush1.bf16.msra.mxu0 0
        %3799 = vmatprep.subr.bf16.mxu0 %v3695
        %3800 = vmatpush1.bf16.msra.mxu0 %v3692
        %3801 = vmatprep.subr.bf16.mxu0 0
        %3802 = vmatpush2.bf16.msra.mxu0 0
        %3803 = vmatprep.subr.bf16.mxu0 0
        %3804 = vmatpush2.bf16.msra.mxu0 0
        %3805 = vmatprep.subr.bf16.mxu0 0
        %3806 = vmatpush2.bf16.msra.mxu0 0
        %3807 = vmatprep.subr.bf16.mxu0 0
        %3808 = vmatpush2.bf16.msra.mxu0 0
        %3809 = vmatprep.subr.bf16.mxu0 0
        %3810 = vmatpush2.bf16.msra.mxu0 0
        %3811 = vmatprep.subr.bf16.mxu0 0
        %3812 = vmatpush2.bf16.msra.mxu0 0
        %3813 = vmatprep.subr.bf16.mxu0 0
        %3814 = vmatpush2.bf16.msra.mxu0 0
        %3815 = vmatprep.subr.bf16.mxu0 0
        %3816 = vmatpush2.bf16.msra.mxu0 0
        %3817 = vmatprep.mubr.bf16.mxu0 0
        %3818 = vmatmul.mubr.bf16.gmra.mxu0 %v3677
        %v3819 = vpop.f32.mrf.mxu0
        %v3820 = vadd.f32 0.0, %v3819
        %v3821 = vpop.f32.mrf.mxu0
        %v3822 = vadd.f32 0.0, %v3821
        %v3823 = vpop.f32.mrf.mxu0
        %v3824 = vpop.f32.mrf.mxu0
        %3825 = vdwg.mxu0
        %3826 = vmatprep.subr.bf16.mxu0 0
        %3827 = vmatpush1.bf16.msra.mxu0 0
        %3828 = vmatprep.subr.bf16.mxu0 0
        %3829 = vmatpush1.bf16.msra.mxu0 0
        %3830 = vmatprep.subr.bf16.mxu0 0
        %3831 = vmatpush1.bf16.msra.mxu0 0
        %3832 = vmatprep.subr.bf16.mxu0 0
        %3833 = vmatpush1.bf16.msra.mxu0 0
        %3834 = vmatprep.subr.bf16.mxu0 0
        %3835 = vmatpush1.bf16.msra.mxu0 0
        %3836 = vmatprep.subr.bf16.mxu0 0
        %3837 = vmatpush1.bf16.msra.mxu0 0
        %3838 = vmatprep.subr.bf16.mxu0 0
        %3839 = vmatpush1.bf16.msra.mxu0 0
        %3840 = vmatprep.subr.bf16.mxu0 %v3701
        %3841 = vmatpush1.bf16.msra.mxu0 %v3698
        %3842 = vmatprep.subr.bf16.mxu0 0
        %3843 = vmatpush2.bf16.msra.mxu0 0
        %3844 = vmatprep.subr.bf16.mxu0 0
        %3845 = vmatpush2.bf16.msra.mxu0 0
        %3846 = vmatprep.subr.bf16.mxu0 0
        %3847 = vmatpush2.bf16.msra.mxu0 0
        %3848 = vmatprep.subr.bf16.mxu0 0
        %3849 = vmatpush2.bf16.msra.mxu0 0
        %3850 = vmatprep.subr.bf16.mxu0 0
        %3851 = vmatpush2.bf16.msra.mxu0 0
        %3852 = vmatprep.subr.bf16.mxu0 0
        %3853 = vmatpush2.bf16.msra.mxu0 0
        %3854 = vmatprep.subr.bf16.mxu0 0
        %3855 = vmatpush2.bf16.msra.mxu0 0
        %3856 = vmatprep.subr.bf16.mxu0 0
        %3857 = vmatpush2.bf16.msra.mxu0 0
        %3858 = vmatprep.mubr.bf16.mxu0 0
        %3859 = vmatmul.mubr.bf16.gmra.mxu0 %v3677
        %v3860 = vpop.f32.mrf.mxu0
        %v3861 = vadd.f32 0.0, %v3860
        %v3862 = vpop.f32.mrf.mxu0
        %v3863 = vadd.f32 0.0, %v3862
        %v3864 = vpop.f32.mrf.mxu0
        %v3865 = vpop.f32.mrf.mxu0
        %3866 = vdwg.mxu0
        %v3867 = vadd.f32 %v3641, %v3738
        %v3868 = vadd.f32 %v3642, %v3740
        %v3869 = vadd.f32 %v3643, %v3779
        %v3870 = vadd.f32 %v3644, %v3781
        %v3871 = vadd.f32 %v3645, %v3820
        %v3872 = vadd.f32 %v3646, %v3822
        %v3873 = vadd.f32 %v3647, %v3861
        %v3874 = vadd.f32 %v3648, %v3863
        %3875 = vrot.lane.b32.xlu0 %v254, 46
        %v3876 = vpop.permute.xlu0 %3875
        %3877 = vrot.lane.b32.xlu0 %v255, 46
        %v3878 = vpop.permute.xlu0 %3877
        %3879 = vrot.lane.b32.xlu0 %v256, 46
        %v3880 = vpop.permute.xlu0 %3879
        %3881 = vrot.lane.b32.xlu0 %v257, 46
        %v3882 = vpop.permute.xlu0 %3881
        %3883 = vrot.lane.b32.xlu0 %v258, 46
        %v3884 = vpop.permute.xlu0 %3883
        %3885 = vrot.lane.b32.xlu0 %v259, 46
        %v3886 = vpop.permute.xlu0 %3885
        %3887 = vrot.lane.b32.xlu0 %v268, 46
        %v3888 = vpop.permute.xlu0 %3887
        %3889 = vrot.lane.b32.xlu0 %v269, 46
        %v3890 = vpop.permute.xlu0 %3889
        %3891 = vrot.lane.b32.xlu0 %v270, 46
        %v3892 = vpop.permute.xlu0 %3891
        %vm3893 = vcmask 375808
        %v3894 = vsel %vm3893, %v3876, %v3878
        %v3895 = vsel %vm3893, %v3878, %v3880
        %v3896 = vsel %vm3893, %v3880, %v3882
        %v3897 = vsel %vm3893, %v3882, %v3884
        %v3898 = vsel %vm3893, %v3884, %v3886
        %v3899 = vsel %vm3893, %v3886, %v3888
        %v3900 = vsel %vm3893, %v3888, %v3890
        %v3901 = vsel %vm3893, %v3890, %v3892
        %v3903 = vsel %vm327, %v289, 0
        %v3906 = vsel %vm331, %v3894, 0
        %v3909 = vsel %vm331, %v3895, 0
        %v3912 = vsel %vm331, %v3896, 0
        %v3915 = vsel %vm331, %v3897, 0
        %v3918 = vsel %vm331, %v3898, 0
        %v3921 = vsel %vm331, %v3899, 0
        %v3924 = vsel %vm331, %v3900, 0
        %v3927 = vsel %vm331, %v3901, 0
        %3929 = vmatprep.subr.bf16.mxu0 0
        %3930 = vmatpush1.bf16.msra.mxu0 0
        %3931 = vmatprep.subr.bf16.mxu0 0
        %3932 = vmatpush1.bf16.msra.mxu0 0
        %3933 = vmatprep.subr.bf16.mxu0 0
        %3934 = vmatpush1.bf16.msra.mxu0 0
        %3935 = vmatprep.subr.bf16.mxu0 0
        %3936 = vmatpush1.bf16.msra.mxu0 0
        %3937 = vmatprep.subr.bf16.mxu0 0
        %3938 = vmatpush1.bf16.msra.mxu0 0
        %3939 = vmatprep.subr.bf16.mxu0 0
        %3940 = vmatpush1.bf16.msra.mxu0 0
        %3941 = vmatprep.subr.bf16.mxu0 0
        %3942 = vmatpush1.bf16.msra.mxu0 0
        %3943 = vmatprep.subr.bf16.mxu0 %v3909
        %3944 = vmatpush1.bf16.msra.mxu0 %v3906
        %3945 = vmatprep.subr.bf16.mxu0 0
        %3946 = vmatpush2.bf16.msra.mxu0 0
        %3947 = vmatprep.subr.bf16.mxu0 0
        %3948 = vmatpush2.bf16.msra.mxu0 0
        %3949 = vmatprep.subr.bf16.mxu0 0
        %3950 = vmatpush2.bf16.msra.mxu0 0
        %3951 = vmatprep.subr.bf16.mxu0 0
        %3952 = vmatpush2.bf16.msra.mxu0 0
        %3953 = vmatprep.subr.bf16.mxu0 0
        %3954 = vmatpush2.bf16.msra.mxu0 0
        %3955 = vmatprep.subr.bf16.mxu0 0
        %3956 = vmatpush2.bf16.msra.mxu0 0
        %3957 = vmatprep.subr.bf16.mxu0 0
        %3958 = vmatpush2.bf16.msra.mxu0 0
        %3959 = vmatprep.subr.bf16.mxu0 0
        %3960 = vmatpush2.bf16.msra.mxu0 0
        %3961 = vmatprep.mubr.bf16.mxu0 0
        %3962 = vmatmul.mubr.bf16.gmra.mxu0 %v3903
        %v3963 = vpop.f32.mrf.mxu0
        %v3964 = vadd.f32 0.0, %v3963
        %v3965 = vpop.f32.mrf.mxu0
        %v3966 = vadd.f32 0.0, %v3965
        %v3967 = vpop.f32.mrf.mxu0
        %v3968 = vpop.f32.mrf.mxu0
        %3969 = vdwg.mxu0
        %3970 = vmatprep.subr.bf16.mxu0 0
        %3971 = vmatpush1.bf16.msra.mxu0 0
        %3972 = vmatprep.subr.bf16.mxu0 0
        %3973 = vmatpush1.bf16.msra.mxu0 0
        %3974 = vmatprep.subr.bf16.mxu0 0
        %3975 = vmatpush1.bf16.msra.mxu0 0
        %3976 = vmatprep.subr.bf16.mxu0 0
        %3977 = vmatpush1.bf16.msra.mxu0 0
        %3978 = vmatprep.subr.bf16.mxu0 0
        %3979 = vmatpush1.bf16.msra.mxu0 0
        %3980 = vmatprep.subr.bf16.mxu0 0
        %3981 = vmatpush1.bf16.msra.mxu0 0
        %3982 = vmatprep.subr.bf16.mxu0 0
        %3983 = vmatpush1.bf16.msra.mxu0 0
        %3984 = vmatprep.subr.bf16.mxu0 %v3915
        %3985 = vmatpush1.bf16.msra.mxu0 %v3912
        %3986 = vmatprep.subr.bf16.mxu0 0
        %3987 = vmatpush2.bf16.msra.mxu0 0
        %3988 = vmatprep.subr.bf16.mxu0 0
        %3989 = vmatpush2.bf16.msra.mxu0 0
        %3990 = vmatprep.subr.bf16.mxu0 0
        %3991 = vmatpush2.bf16.msra.mxu0 0
        %3992 = vmatprep.subr.bf16.mxu0 0
        %3993 = vmatpush2.bf16.msra.mxu0 0
        %3994 = vmatprep.subr.bf16.mxu0 0
        %3995 = vmatpush2.bf16.msra.mxu0 0
        %3996 = vmatprep.subr.bf16.mxu0 0
        %3997 = vmatpush2.bf16.msra.mxu0 0
        %3998 = vmatprep.subr.bf16.mxu0 0
        %3999 = vmatpush2.bf16.msra.mxu0 0
        %4000 = vmatprep.subr.bf16.mxu0 0
        %4001 = vmatpush2.bf16.msra.mxu0 0
        %4002 = vmatprep.mubr.bf16.mxu0 0
        %4003 = vmatmul.mubr.bf16.gmra.mxu0 %v3903
        %v4004 = vpop.f32.mrf.mxu0
        %v4005 = vadd.f32 0.0, %v4004
        %v4006 = vpop.f32.mrf.mxu0
        %v4007 = vadd.f32 0.0, %v4006
        %v4008 = vpop.f32.mrf.mxu0
        %v4009 = vpop.f32.mrf.mxu0
        %4010 = vdwg.mxu0
        %4011 = vmatprep.subr.bf16.mxu0 0
        %4012 = vmatpush1.bf16.msra.mxu0 0
        %4013 = vmatprep.subr.bf16.mxu0 0
        %4014 = vmatpush1.bf16.msra.mxu0 0
        %4015 = vmatprep.subr.bf16.mxu0 0
        %4016 = vmatpush1.bf16.msra.mxu0 0
        %4017 = vmatprep.subr.bf16.mxu0 0
        %4018 = vmatpush1.bf16.msra.mxu0 0
        %4019 = vmatprep.subr.bf16.mxu0 0
        %4020 = vmatpush1.bf16.msra.mxu0 0
        %4021 = vmatprep.subr.bf16.mxu0 0
        %4022 = vmatpush1.bf16.msra.mxu0 0
        %4023 = vmatprep.subr.bf16.mxu0 0
        %4024 = vmatpush1.bf16.msra.mxu0 0
        %4025 = vmatprep.subr.bf16.mxu0 %v3921
        %4026 = vmatpush1.bf16.msra.mxu0 %v3918
        %4027 = vmatprep.subr.bf16.mxu0 0
        %4028 = vmatpush2.bf16.msra.mxu0 0
        %4029 = vmatprep.subr.bf16.mxu0 0
        %4030 = vmatpush2.bf16.msra.mxu0 0
        %4031 = vmatprep.subr.bf16.mxu0 0
        %4032 = vmatpush2.bf16.msra.mxu0 0
        %4033 = vmatprep.subr.bf16.mxu0 0
        %4034 = vmatpush2.bf16.msra.mxu0 0
        %4035 = vmatprep.subr.bf16.mxu0 0
        %4036 = vmatpush2.bf16.msra.mxu0 0
        %4037 = vmatprep.subr.bf16.mxu0 0
        %4038 = vmatpush2.bf16.msra.mxu0 0
        %4039 = vmatprep.subr.bf16.mxu0 0
        %4040 = vmatpush2.bf16.msra.mxu0 0
        %4041 = vmatprep.subr.bf16.mxu0 0
        %4042 = vmatpush2.bf16.msra.mxu0 0
        %4043 = vmatprep.mubr.bf16.mxu0 0
        %4044 = vmatmul.mubr.bf16.gmra.mxu0 %v3903
        %v4045 = vpop.f32.mrf.mxu0
        %v4046 = vadd.f32 0.0, %v4045
        %v4047 = vpop.f32.mrf.mxu0
        %v4048 = vadd.f32 0.0, %v4047
        %v4049 = vpop.f32.mrf.mxu0
        %v4050 = vpop.f32.mrf.mxu0
        %4051 = vdwg.mxu0
        %4052 = vmatprep.subr.bf16.mxu0 0
        %4053 = vmatpush1.bf16.msra.mxu0 0
        %4054 = vmatprep.subr.bf16.mxu0 0
        %4055 = vmatpush1.bf16.msra.mxu0 0
        %4056 = vmatprep.subr.bf16.mxu0 0
        %4057 = vmatpush1.bf16.msra.mxu0 0
        %4058 = vmatprep.subr.bf16.mxu0 0
        %4059 = vmatpush1.bf16.msra.mxu0 0
        %4060 = vmatprep.subr.bf16.mxu0 0
        %4061 = vmatpush1.bf16.msra.mxu0 0
        %4062 = vmatprep.subr.bf16.mxu0 0
        %4063 = vmatpush1.bf16.msra.mxu0 0
        %4064 = vmatprep.subr.bf16.mxu0 0
        %4065 = vmatpush1.bf16.msra.mxu0 0
        %4066 = vmatprep.subr.bf16.mxu0 %v3927
        %4067 = vmatpush1.bf16.msra.mxu0 %v3924
        %4068 = vmatprep.subr.bf16.mxu0 0
        %4069 = vmatpush2.bf16.msra.mxu0 0
        %4070 = vmatprep.subr.bf16.mxu0 0
        %4071 = vmatpush2.bf16.msra.mxu0 0
        %4072 = vmatprep.subr.bf16.mxu0 0
        %4073 = vmatpush2.bf16.msra.mxu0 0
        %4074 = vmatprep.subr.bf16.mxu0 0
        %4075 = vmatpush2.bf16.msra.mxu0 0
        %4076 = vmatprep.subr.bf16.mxu0 0
        %4077 = vmatpush2.bf16.msra.mxu0 0
        %4078 = vmatprep.subr.bf16.mxu0 0
        %4079 = vmatpush2.bf16.msra.mxu0 0
        %4080 = vmatprep.subr.bf16.mxu0 0
        %4081 = vmatpush2.bf16.msra.mxu0 0
        %4082 = vmatprep.subr.bf16.mxu0 0
        %4083 = vmatpush2.bf16.msra.mxu0 0
        %4084 = vmatprep.mubr.bf16.mxu0 0
        %4085 = vmatmul.mubr.bf16.gmra.mxu0 %v3903
        %v4086 = vpop.f32.mrf.mxu0
        %v4087 = vadd.f32 0.0, %v4086
        %v4088 = vpop.f32.mrf.mxu0
        %v4089 = vadd.f32 0.0, %v4088
        %v4090 = vpop.f32.mrf.mxu0
        %v4091 = vpop.f32.mrf.mxu0
        %4092 = vdwg.mxu0
        %v4093 = vadd.f32 %v3867, %v3964
        %v4094 = vadd.f32 %v3868, %v3966
        %v4095 = vadd.f32 %v3869, %v4005
        %v4096 = vadd.f32 %v3870, %v4007
        %v4097 = vadd.f32 %v3871, %v4046
        %v4098 = vadd.f32 %v3872, %v4048
        %v4099 = vadd.f32 %v3873, %v4087
        %v4100 = vadd.f32 %v3874, %v4089
        %4101 = vrot.lane.b32.xlu0 %v254, 44
        %v4102 = vpop.permute.xlu0 %4101
        %4103 = vrot.lane.b32.xlu0 %v255, 44
        %v4104 = vpop.permute.xlu0 %4103
        %4105 = vrot.lane.b32.xlu0 %v256, 44
        %v4106 = vpop.permute.xlu0 %4105
        %4107 = vrot.lane.b32.xlu0 %v257, 44
        %v4108 = vpop.permute.xlu0 %4107
        %4109 = vrot.lane.b32.xlu0 %v258, 44
        %v4110 = vpop.permute.xlu0 %4109
        %4111 = vrot.lane.b32.xlu0 %v259, 44
        %v4112 = vpop.permute.xlu0 %4111
        %4113 = vrot.lane.b32.xlu0 %v268, 44
        %v4114 = vpop.permute.xlu0 %4113
        %4115 = vrot.lane.b32.xlu0 %v269, 44
        %v4116 = vpop.permute.xlu0 %4115
        %4117 = vrot.lane.b32.xlu0 %v270, 44
        %v4118 = vpop.permute.xlu0 %4117
        %vm4119 = vcmask 359424
        %v4120 = vsel %vm4119, %v4102, %v4104
        %v4121 = vsel %vm4119, %v4104, %v4106
        %v4122 = vsel %vm4119, %v4106, %v4108
        %v4123 = vsel %vm4119, %v4108, %v4110
        %v4124 = vsel %vm4119, %v4110, %v4112
        %v4125 = vsel %vm4119, %v4112, %v4114
        %v4126 = vsel %vm4119, %v4114, %v4116
        %v4127 = vsel %vm4119, %v4116, %v4118
        %v4129 = vsel %vm327, %v290, 0
        %v4132 = vsel %vm331, %v4120, 0
        %v4135 = vsel %vm331, %v4121, 0
        %v4138 = vsel %vm331, %v4122, 0
        %v4141 = vsel %vm331, %v4123, 0
        %v4144 = vsel %vm331, %v4124, 0
        %v4147 = vsel %vm331, %v4125, 0
        %v4150 = vsel %vm331, %v4126, 0
        %v4153 = vsel %vm331, %v4127, 0
        %4155 = vmatprep.subr.bf16.mxu0 0
        %4156 = vmatpush1.bf16.msra.mxu0 0
        %4157 = vmatprep.subr.bf16.mxu0 0
        %4158 = vmatpush1.bf16.msra.mxu0 0
        %4159 = vmatprep.subr.bf16.mxu0 0
        %4160 = vmatpush1.bf16.msra.mxu0 0
        %4161 = vmatprep.subr.bf16.mxu0 0
        %4162 = vmatpush1.bf16.msra.mxu0 0
        %4163 = vmatprep.subr.bf16.mxu0 0
        %4164 = vmatpush1.bf16.msra.mxu0 0
        %4165 = vmatprep.subr.bf16.mxu0 0
        %4166 = vmatpush1.bf16.msra.mxu0 0
        %4167 = vmatprep.subr.bf16.mxu0 0
        %4168 = vmatpush1.bf16.msra.mxu0 0
        %4169 = vmatprep.subr.bf16.mxu0 %v4135
        %4170 = vmatpush1.bf16.msra.mxu0 %v4132
        %4171 = vmatprep.subr.bf16.mxu0 0
        %4172 = vmatpush2.bf16.msra.mxu0 0
        %4173 = vmatprep.subr.bf16.mxu0 0
        %4174 = vmatpush2.bf16.msra.mxu0 0
        %4175 = vmatprep.subr.bf16.mxu0 0
        %4176 = vmatpush2.bf16.msra.mxu0 0
        %4177 = vmatprep.subr.bf16.mxu0 0
        %4178 = vmatpush2.bf16.msra.mxu0 0
        %4179 = vmatprep.subr.bf16.mxu0 0
        %4180 = vmatpush2.bf16.msra.mxu0 0
        %4181 = vmatprep.subr.bf16.mxu0 0
        %4182 = vmatpush2.bf16.msra.mxu0 0
        %4183 = vmatprep.subr.bf16.mxu0 0
        %4184 = vmatpush2.bf16.msra.mxu0 0
        %4185 = vmatprep.subr.bf16.mxu0 0
        %4186 = vmatpush2.bf16.msra.mxu0 0
        %4187 = vmatprep.mubr.bf16.mxu0 0
        %4188 = vmatmul.mubr.bf16.gmra.mxu0 %v4129
        %v4189 = vpop.f32.mrf.mxu0
        %v4190 = vadd.f32 0.0, %v4189
        %v4191 = vpop.f32.mrf.mxu0
        %v4192 = vadd.f32 0.0, %v4191
        %v4193 = vpop.f32.mrf.mxu0
        %v4194 = vpop.f32.mrf.mxu0
        %4195 = vdwg.mxu0
        %4196 = vmatprep.subr.bf16.mxu0 0
        %4197 = vmatpush1.bf16.msra.mxu0 0
        %4198 = vmatprep.subr.bf16.mxu0 0
        %4199 = vmatpush1.bf16.msra.mxu0 0
        %4200 = vmatprep.subr.bf16.mxu0 0
        %4201 = vmatpush1.bf16.msra.mxu0 0
        %4202 = vmatprep.subr.bf16.mxu0 0
        %4203 = vmatpush1.bf16.msra.mxu0 0
        %4204 = vmatprep.subr.bf16.mxu0 0
        %4205 = vmatpush1.bf16.msra.mxu0 0
        %4206 = vmatprep.subr.bf16.mxu0 0
        %4207 = vmatpush1.bf16.msra.mxu0 0
        %4208 = vmatprep.subr.bf16.mxu0 0
        %4209 = vmatpush1.bf16.msra.mxu0 0
        %4210 = vmatprep.subr.bf16.mxu0 %v4141
        %4211 = vmatpush1.bf16.msra.mxu0 %v4138
        %4212 = vmatprep.subr.bf16.mxu0 0
        %4213 = vmatpush2.bf16.msra.mxu0 0
        %4214 = vmatprep.subr.bf16.mxu0 0
        %4215 = vmatpush2.bf16.msra.mxu0 0
        %4216 = vmatprep.subr.bf16.mxu0 0
        %4217 = vmatpush2.bf16.msra.mxu0 0
        %4218 = vmatprep.subr.bf16.mxu0 0
        %4219 = vmatpush2.bf16.msra.mxu0 0
        %4220 = vmatprep.subr.bf16.mxu0 0
        %4221 = vmatpush2.bf16.msra.mxu0 0
        %4222 = vmatprep.subr.bf16.mxu0 0
        %4223 = vmatpush2.bf16.msra.mxu0 0
        %4224 = vmatprep.subr.bf16.mxu0 0
        %4225 = vmatpush2.bf16.msra.mxu0 0
        %4226 = vmatprep.subr.bf16.mxu0 0
        %4227 = vmatpush2.bf16.msra.mxu0 0
        %4228 = vmatprep.mubr.bf16.mxu0 0
        %4229 = vmatmul.mubr.bf16.gmra.mxu0 %v4129
        %v4230 = vpop.f32.mrf.mxu0
        %v4231 = vadd.f32 0.0, %v4230
        %v4232 = vpop.f32.mrf.mxu0
        %v4233 = vadd.f32 0.0, %v4232
        %v4234 = vpop.f32.mrf.mxu0
        %v4235 = vpop.f32.mrf.mxu0
        %4236 = vdwg.mxu0
        %4237 = vmatprep.subr.bf16.mxu0 0
        %4238 = vmatpush1.bf16.msra.mxu0 0
        %4239 = vmatprep.subr.bf16.mxu0 0
        %4240 = vmatpush1.bf16.msra.mxu0 0
        %4241 = vmatprep.subr.bf16.mxu0 0
        %4242 = vmatpush1.bf16.msra.mxu0 0
        %4243 = vmatprep.subr.bf16.mxu0 0
        %4244 = vmatpush1.bf16.msra.mxu0 0
        %4245 = vmatprep.subr.bf16.mxu0 0
        %4246 = vmatpush1.bf16.msra.mxu0 0
        %4247 = vmatprep.subr.bf16.mxu0 0
        %4248 = vmatpush1.bf16.msra.mxu0 0
        %4249 = vmatprep.subr.bf16.mxu0 0
        %4250 = vmatpush1.bf16.msra.mxu0 0
        %4251 = vmatprep.subr.bf16.mxu0 %v4147
        %4252 = vmatpush1.bf16.msra.mxu0 %v4144
        %4253 = vmatprep.subr.bf16.mxu0 0
        %4254 = vmatpush2.bf16.msra.mxu0 0
        %4255 = vmatprep.subr.bf16.mxu0 0
        %4256 = vmatpush2.bf16.msra.mxu0 0
        %4257 = vmatprep.subr.bf16.mxu0 0
        %4258 = vmatpush2.bf16.msra.mxu0 0
        %4259 = vmatprep.subr.bf16.mxu0 0
        %4260 = vmatpush2.bf16.msra.mxu0 0
        %4261 = vmatprep.subr.bf16.mxu0 0
        %4262 = vmatpush2.bf16.msra.mxu0 0
        %4263 = vmatprep.subr.bf16.mxu0 0
        %4264 = vmatpush2.bf16.msra.mxu0 0
        %4265 = vmatprep.subr.bf16.mxu0 0
        %4266 = vmatpush2.bf16.msra.mxu0 0
        %4267 = vmatprep.subr.bf16.mxu0 0
        %4268 = vmatpush2.bf16.msra.mxu0 0
        %4269 = vmatprep.mubr.bf16.mxu0 0
        %4270 = vmatmul.mubr.bf16.gmra.mxu0 %v4129
        %v4271 = vpop.f32.mrf.mxu0
        %v4272 = vadd.f32 0.0, %v4271
        %v4273 = vpop.f32.mrf.mxu0
        %v4274 = vadd.f32 0.0, %v4273
        %v4275 = vpop.f32.mrf.mxu0
        %v4276 = vpop.f32.mrf.mxu0
        %4277 = vdwg.mxu0
        %4278 = vmatprep.subr.bf16.mxu0 0
        %4279 = vmatpush1.bf16.msra.mxu0 0
        %4280 = vmatprep.subr.bf16.mxu0 0
        %4281 = vmatpush1.bf16.msra.mxu0 0
        %4282 = vmatprep.subr.bf16.mxu0 0
        %4283 = vmatpush1.bf16.msra.mxu0 0
        %4284 = vmatprep.subr.bf16.mxu0 0
        %4285 = vmatpush1.bf16.msra.mxu0 0
        %4286 = vmatprep.subr.bf16.mxu0 0
        %4287 = vmatpush1.bf16.msra.mxu0 0
        %4288 = vmatprep.subr.bf16.mxu0 0
        %4289 = vmatpush1.bf16.msra.mxu0 0
        %4290 = vmatprep.subr.bf16.mxu0 0
        %4291 = vmatpush1.bf16.msra.mxu0 0
        %4292 = vmatprep.subr.bf16.mxu0 %v4153
        %4293 = vmatpush1.bf16.msra.mxu0 %v4150
        %4294 = vmatprep.subr.bf16.mxu0 0
        %4295 = vmatpush2.bf16.msra.mxu0 0
        %4296 = vmatprep.subr.bf16.mxu0 0
        %4297 = vmatpush2.bf16.msra.mxu0 0
        %4298 = vmatprep.subr.bf16.mxu0 0
        %4299 = vmatpush2.bf16.msra.mxu0 0
        %4300 = vmatprep.subr.bf16.mxu0 0
        %4301 = vmatpush2.bf16.msra.mxu0 0
        %4302 = vmatprep.subr.bf16.mxu0 0
        %4303 = vmatpush2.bf16.msra.mxu0 0
        %4304 = vmatprep.subr.bf16.mxu0 0
        %4305 = vmatpush2.bf16.msra.mxu0 0
        %4306 = vmatprep.subr.bf16.mxu0 0
        %4307 = vmatpush2.bf16.msra.mxu0 0
        %4308 = vmatprep.subr.bf16.mxu0 0
        %4309 = vmatpush2.bf16.msra.mxu0 0
        %4310 = vmatprep.mubr.bf16.mxu0 0
        %4311 = vmatmul.mubr.bf16.gmra.mxu0 %v4129
        %v4312 = vpop.f32.mrf.mxu0
        %v4313 = vadd.f32 0.0, %v4312
        %v4314 = vpop.f32.mrf.mxu0
        %v4315 = vadd.f32 0.0, %v4314
        %v4316 = vpop.f32.mrf.mxu0
        %v4317 = vpop.f32.mrf.mxu0
        %4318 = vdwg.mxu0
        %v4319 = vadd.f32 %v4093, %v4190
        %v4320 = vadd.f32 %v4094, %v4192
        %v4321 = vadd.f32 %v4095, %v4231
        %v4322 = vadd.f32 %v4096, %v4233
        %v4323 = vadd.f32 %v4097, %v4272
        %v4324 = vadd.f32 %v4098, %v4274
        %v4325 = vadd.f32 %v4099, %v4313
        %v4326 = vadd.f32 %v4100, %v4315
        %4327 = vrot.lane.b32.xlu0 %v256, 64
        %v4328 = vpop.permute.xlu0 %4327
        %4329 = vrot.lane.b32.xlu0 %v257, 64
        %v4330 = vpop.permute.xlu0 %4329
        %4331 = vrot.lane.b32.xlu0 %v258, 64
        %v4332 = vpop.permute.xlu0 %4331
        %4333 = vrot.lane.b32.xlu0 %v259, 64
        %v4334 = vpop.permute.xlu0 %4333
        %4335 = vrot.lane.b32.xlu0 %v268, 64
        %v4336 = vpop.permute.xlu0 %4335
        %4337 = vrot.lane.b32.xlu0 %v269, 64
        %v4338 = vpop.permute.xlu0 %4337
        %4339 = vrot.lane.b32.xlu0 %v270, 64
        %v4340 = vpop.permute.xlu0 %4339
        %4341 = vrot.lane.b32.xlu0 %v271, 64
        %v4342 = vpop.permute.xlu0 %4341
        %4343 = vrot.lane.b32.xlu0 %v272, 64
        %v4344 = vpop.permute.xlu0 %4343
        %vm4345 = vcmask 523264
        %v4346 = vsel %vm4345, %v4328, %v4330
        %v4347 = vsel %vm4345, %v4330, %v4332
        %v4348 = vsel %vm4345, %v4332, %v4334
        %v4349 = vsel %vm4345, %v4334, %v4336
        %v4350 = vsel %vm4345, %v4336, %v4338
        %v4351 = vsel %vm4345, %v4338, %v4340
        %v4352 = vsel %vm4345, %v4340, %v4342
        %v4353 = vsel %vm4345, %v4342, %v4344
        %v4355 = vsel %vm327, %v291, 0
        %v4358 = vsel %vm331, %v4346, 0
        %v4361 = vsel %vm331, %v4347, 0
        %v4364 = vsel %vm331, %v4348, 0
        %v4367 = vsel %vm331, %v4349, 0
        %v4370 = vsel %vm331, %v4350, 0
        %v4373 = vsel %vm331, %v4351, 0
        %v4376 = vsel %vm331, %v4352, 0
        %v4379 = vsel %vm331, %v4353, 0
        %4381 = vmatprep.subr.bf16.mxu0 0
        %4382 = vmatpush1.bf16.msra.mxu0 0
        %4383 = vmatprep.subr.bf16.mxu0 0
        %4384 = vmatpush1.bf16.msra.mxu0 0
        %4385 = vmatprep.subr.bf16.mxu0 0
        %4386 = vmatpush1.bf16.msra.mxu0 0
        %4387 = vmatprep.subr.bf16.mxu0 0
        %4388 = vmatpush1.bf16.msra.mxu0 0
        %4389 = vmatprep.subr.bf16.mxu0 0
        %4390 = vmatpush1.bf16.msra.mxu0 0
        %4391 = vmatprep.subr.bf16.mxu0 0
        %4392 = vmatpush1.bf16.msra.mxu0 0
        %4393 = vmatprep.subr.bf16.mxu0 0
        %4394 = vmatpush1.bf16.msra.mxu0 0
        %4395 = vmatprep.subr.bf16.mxu0 %v4361
        %4396 = vmatpush1.bf16.msra.mxu0 %v4358
        %4397 = vmatprep.subr.bf16.mxu0 0
        %4398 = vmatpush2.bf16.msra.mxu0 0
        %4399 = vmatprep.subr.bf16.mxu0 0
        %4400 = vmatpush2.bf16.msra.mxu0 0
        %4401 = vmatprep.subr.bf16.mxu0 0
        %4402 = vmatpush2.bf16.msra.mxu0 0
        %4403 = vmatprep.subr.bf16.mxu0 0
        %4404 = vmatpush2.bf16.msra.mxu0 0
        %4405 = vmatprep.subr.bf16.mxu0 0
        %4406 = vmatpush2.bf16.msra.mxu0 0
        %4407 = vmatprep.subr.bf16.mxu0 0
        %4408 = vmatpush2.bf16.msra.mxu0 0
        %4409 = vmatprep.subr.bf16.mxu0 0
        %4410 = vmatpush2.bf16.msra.mxu0 0
        %4411 = vmatprep.subr.bf16.mxu0 0
        %4412 = vmatpush2.bf16.msra.mxu0 0
        %4413 = vmatprep.mubr.bf16.mxu0 0
        %4414 = vmatmul.mubr.bf16.gmra.mxu0 %v4355
        %v4415 = vpop.f32.mrf.mxu0
        %v4416 = vadd.f32 0.0, %v4415
        %v4417 = vpop.f32.mrf.mxu0
        %v4418 = vadd.f32 0.0, %v4417
        %v4419 = vpop.f32.mrf.mxu0
        %v4420 = vpop.f32.mrf.mxu0
        %4421 = vdwg.mxu0
        %4422 = vmatprep.subr.bf16.mxu0 0
        %4423 = vmatpush1.bf16.msra.mxu0 0
        %4424 = vmatprep.subr.bf16.mxu0 0
        %4425 = vmatpush1.bf16.msra.mxu0 0
        %4426 = vmatprep.subr.bf16.mxu0 0
        %4427 = vmatpush1.bf16.msra.mxu0 0
        %4428 = vmatprep.subr.bf16.mxu0 0
        %4429 = vmatpush1.bf16.msra.mxu0 0
        %4430 = vmatprep.subr.bf16.mxu0 0
        %4431 = vmatpush1.bf16.msra.mxu0 0
        %4432 = vmatprep.subr.bf16.mxu0 0
        %4433 = vmatpush1.bf16.msra.mxu0 0
        %4434 = vmatprep.subr.bf16.mxu0 0
        %4435 = vmatpush1.bf16.msra.mxu0 0
        %4436 = vmatprep.subr.bf16.mxu0 %v4367
        %4437 = vmatpush1.bf16.msra.mxu0 %v4364
        %4438 = vmatprep.subr.bf16.mxu0 0
        %4439 = vmatpush2.bf16.msra.mxu0 0
        %4440 = vmatprep.subr.bf16.mxu0 0
        %4441 = vmatpush2.bf16.msra.mxu0 0
        %4442 = vmatprep.subr.bf16.mxu0 0
        %4443 = vmatpush2.bf16.msra.mxu0 0
        %4444 = vmatprep.subr.bf16.mxu0 0
        %4445 = vmatpush2.bf16.msra.mxu0 0
        %4446 = vmatprep.subr.bf16.mxu0 0
        %4447 = vmatpush2.bf16.msra.mxu0 0
        %4448 = vmatprep.subr.bf16.mxu0 0
        %4449 = vmatpush2.bf16.msra.mxu0 0
        %4450 = vmatprep.subr.bf16.mxu0 0
        %4451 = vmatpush2.bf16.msra.mxu0 0
        %4452 = vmatprep.subr.bf16.mxu0 0
        %4453 = vmatpush2.bf16.msra.mxu0 0
        %4454 = vmatprep.mubr.bf16.mxu0 0
        %4455 = vmatmul.mubr.bf16.gmra.mxu0 %v4355
        %v4456 = vpop.f32.mrf.mxu0
        %v4457 = vadd.f32 0.0, %v4456
        %v4458 = vpop.f32.mrf.mxu0
        %v4459 = vadd.f32 0.0, %v4458
        %v4460 = vpop.f32.mrf.mxu0
        %v4461 = vpop.f32.mrf.mxu0
        %4462 = vdwg.mxu0
        %4463 = vmatprep.subr.bf16.mxu0 0
        %4464 = vmatpush1.bf16.msra.mxu0 0
        %4465 = vmatprep.subr.bf16.mxu0 0
        %4466 = vmatpush1.bf16.msra.mxu0 0
        %4467 = vmatprep.subr.bf16.mxu0 0
        %4468 = vmatpush1.bf16.msra.mxu0 0
        %4469 = vmatprep.subr.bf16.mxu0 0
        %4470 = vmatpush1.bf16.msra.mxu0 0
        %4471 = vmatprep.subr.bf16.mxu0 0
        %4472 = vmatpush1.bf16.msra.mxu0 0
        %4473 = vmatprep.subr.bf16.mxu0 0
        %4474 = vmatpush1.bf16.msra.mxu0 0
        %4475 = vmatprep.subr.bf16.mxu0 0
        %4476 = vmatpush1.bf16.msra.mxu0 0
        %4477 = vmatprep.subr.bf16.mxu0 %v4373
        %4478 = vmatpush1.bf16.msra.mxu0 %v4370
        %4479 = vmatprep.subr.bf16.mxu0 0
        %4480 = vmatpush2.bf16.msra.mxu0 0
        %4481 = vmatprep.subr.bf16.mxu0 0
        %4482 = vmatpush2.bf16.msra.mxu0 0
        %4483 = vmatprep.subr.bf16.mxu0 0
        %4484 = vmatpush2.bf16.msra.mxu0 0
        %4485 = vmatprep.subr.bf16.mxu0 0
        %4486 = vmatpush2.bf16.msra.mxu0 0
        %4487 = vmatprep.subr.bf16.mxu0 0
        %4488 = vmatpush2.bf16.msra.mxu0 0
        %4489 = vmatprep.subr.bf16.mxu0 0
        %4490 = vmatpush2.bf16.msra.mxu0 0
        %4491 = vmatprep.subr.bf16.mxu0 0
        %4492 = vmatpush2.bf16.msra.mxu0 0
        %4493 = vmatprep.subr.bf16.mxu0 0
        %4494 = vmatpush2.bf16.msra.mxu0 0
        %4495 = vmatprep.mubr.bf16.mxu0 0
        %4496 = vmatmul.mubr.bf16.gmra.mxu0 %v4355
        %v4497 = vpop.f32.mrf.mxu0
        %v4498 = vadd.f32 0.0, %v4497
        %v4499 = vpop.f32.mrf.mxu0
        %v4500 = vadd.f32 0.0, %v4499
        %v4501 = vpop.f32.mrf.mxu0
        %v4502 = vpop.f32.mrf.mxu0
        %4503 = vdwg.mxu0
        %4504 = vmatprep.subr.bf16.mxu0 0
        %4505 = vmatpush1.bf16.msra.mxu0 0
        %4506 = vmatprep.subr.bf16.mxu0 0
        %4507 = vmatpush1.bf16.msra.mxu0 0
        %4508 = vmatprep.subr.bf16.mxu0 0
        %4509 = vmatpush1.bf16.msra.mxu0 0
        %4510 = vmatprep.subr.bf16.mxu0 0
        %4511 = vmatpush1.bf16.msra.mxu0 0
        %4512 = vmatprep.subr.bf16.mxu0 0
        %4513 = vmatpush1.bf16.msra.mxu0 0
        %4514 = vmatprep.subr.bf16.mxu0 0
        %4515 = vmatpush1.bf16.msra.mxu0 0
        %4516 = vmatprep.subr.bf16.mxu0 0
        %4517 = vmatpush1.bf16.msra.mxu0 0
        %4518 = vmatprep.subr.bf16.mxu0 %v4379
        %4519 = vmatpush1.bf16.msra.mxu0 %v4376
        %4520 = vmatprep.subr.bf16.mxu0 0
        %4521 = vmatpush2.bf16.msra.mxu0 0
        %4522 = vmatprep.subr.bf16.mxu0 0
        %4523 = vmatpush2.bf16.msra.mxu0 0
        %4524 = vmatprep.subr.bf16.mxu0 0
        %4525 = vmatpush2.bf16.msra.mxu0 0
        %4526 = vmatprep.subr.bf16.mxu0 0
        %4527 = vmatpush2.bf16.msra.mxu0 0
        %4528 = vmatprep.subr.bf16.mxu0 0
        %4529 = vmatpush2.bf16.msra.mxu0 0
        %4530 = vmatprep.subr.bf16.mxu0 0
        %4531 = vmatpush2.bf16.msra.mxu0 0
        %4532 = vmatprep.subr.bf16.mxu0 0
        %4533 = vmatpush2.bf16.msra.mxu0 0
        %4534 = vmatprep.subr.bf16.mxu0 0
        %4535 = vmatpush2.bf16.msra.mxu0 0
        %4536 = vmatprep.mubr.bf16.mxu0 0
        %4537 = vmatmul.mubr.bf16.gmra.mxu0 %v4355
        %v4538 = vpop.f32.mrf.mxu0
        %v4539 = vadd.f32 0.0, %v4538
        %v4540 = vpop.f32.mrf.mxu0
        %v4541 = vadd.f32 0.0, %v4540
        %v4542 = vpop.f32.mrf.mxu0
        %v4543 = vpop.f32.mrf.mxu0
        %4544 = vdwg.mxu0
        %v4545 = vadd.f32 %v4319, %v4416
        %v4546 = vadd.f32 %v4320, %v4418
        %v4547 = vadd.f32 %v4321, %v4457
        %v4548 = vadd.f32 %v4322, %v4459
        %v4549 = vadd.f32 %v4323, %v4498
        %v4550 = vadd.f32 %v4324, %v4500
        %v4551 = vadd.f32 %v4325, %v4539
        %v4552 = vadd.f32 %v4326, %v4541
        %4553 = vrot.lane.b32.xlu0 %v256, 62
        %v4554 = vpop.permute.xlu0 %4553
        %4555 = vrot.lane.b32.xlu0 %v257, 62
        %v4556 = vpop.permute.xlu0 %4555
        %4557 = vrot.lane.b32.xlu0 %v258, 62
        %v4558 = vpop.permute.xlu0 %4557
        %4559 = vrot.lane.b32.xlu0 %v259, 62
        %v4560 = vpop.permute.xlu0 %4559
        %4561 = vrot.lane.b32.xlu0 %v268, 62
        %v4562 = vpop.permute.xlu0 %4561
        %4563 = vrot.lane.b32.xlu0 %v269, 62
        %v4564 = vpop.permute.xlu0 %4563
        %4565 = vrot.lane.b32.xlu0 %v270, 62
        %v4566 = vpop.permute.xlu0 %4565
        %4567 = vrot.lane.b32.xlu0 %v271, 62
        %v4568 = vpop.permute.xlu0 %4567
        %4569 = vrot.lane.b32.xlu0 %v272, 62
        %v4570 = vpop.permute.xlu0 %4569
        %vm4571 = vcmask 506880
        %v4572 = vsel %vm4571, %v4554, %v4556
        %v4573 = vsel %vm4571, %v4556, %v4558
        %v4574 = vsel %vm4571, %v4558, %v4560
        %v4575 = vsel %vm4571, %v4560, %v4562
        %v4576 = vsel %vm4571, %v4562, %v4564
        %v4577 = vsel %vm4571, %v4564, %v4566
        %v4578 = vsel %vm4571, %v4566, %v4568
        %v4579 = vsel %vm4571, %v4568, %v4570
        %v4581 = vsel %vm327, %v292, 0
        %v4584 = vsel %vm331, %v4572, 0
        %v4587 = vsel %vm331, %v4573, 0
        %v4590 = vsel %vm331, %v4574, 0
        %v4593 = vsel %vm331, %v4575, 0
        %v4596 = vsel %vm331, %v4576, 0
        %v4599 = vsel %vm331, %v4577, 0
        %v4602 = vsel %vm331, %v4578, 0
        %v4605 = vsel %vm331, %v4579, 0
        %4607 = vmatprep.subr.bf16.mxu0 0
        %4608 = vmatpush1.bf16.msra.mxu0 0
        %4609 = vmatprep.subr.bf16.mxu0 0
        %4610 = vmatpush1.bf16.msra.mxu0 0
        %4611 = vmatprep.subr.bf16.mxu0 0
        %4612 = vmatpush1.bf16.msra.mxu0 0
        %4613 = vmatprep.subr.bf16.mxu0 0
        %4614 = vmatpush1.bf16.msra.mxu0 0
        %4615 = vmatprep.subr.bf16.mxu0 0
        %4616 = vmatpush1.bf16.msra.mxu0 0
        %4617 = vmatprep.subr.bf16.mxu0 0
        %4618 = vmatpush1.bf16.msra.mxu0 0
        %4619 = vmatprep.subr.bf16.mxu0 0
        %4620 = vmatpush1.bf16.msra.mxu0 0
        %4621 = vmatprep.subr.bf16.mxu0 %v4587
        %4622 = vmatpush1.bf16.msra.mxu0 %v4584
        %4623 = vmatprep.subr.bf16.mxu0 0
        %4624 = vmatpush2.bf16.msra.mxu0 0
        %4625 = vmatprep.subr.bf16.mxu0 0
        %4626 = vmatpush2.bf16.msra.mxu0 0
        %4627 = vmatprep.subr.bf16.mxu0 0
        %4628 = vmatpush2.bf16.msra.mxu0 0
        %4629 = vmatprep.subr.bf16.mxu0 0
        %4630 = vmatpush2.bf16.msra.mxu0 0
        %4631 = vmatprep.subr.bf16.mxu0 0
        %4632 = vmatpush2.bf16.msra.mxu0 0
        %4633 = vmatprep.subr.bf16.mxu0 0
        %4634 = vmatpush2.bf16.msra.mxu0 0
        %4635 = vmatprep.subr.bf16.mxu0 0
        %4636 = vmatpush2.bf16.msra.mxu0 0
        %4637 = vmatprep.subr.bf16.mxu0 0
        %4638 = vmatpush2.bf16.msra.mxu0 0
        %4639 = vmatprep.mubr.bf16.mxu0 0
        %4640 = vmatmul.mubr.bf16.gmra.mxu0 %v4581
        %v4641 = vpop.f32.mrf.mxu0
        %v4642 = vadd.f32 0.0, %v4641
        %v4643 = vpop.f32.mrf.mxu0
        %v4644 = vadd.f32 0.0, %v4643
        %v4645 = vpop.f32.mrf.mxu0
        %v4646 = vpop.f32.mrf.mxu0
        %4647 = vdwg.mxu0
        %4648 = vmatprep.subr.bf16.mxu0 0
        %4649 = vmatpush1.bf16.msra.mxu0 0
        %4650 = vmatprep.subr.bf16.mxu0 0
        %4651 = vmatpush1.bf16.msra.mxu0 0
        %4652 = vmatprep.subr.bf16.mxu0 0
        %4653 = vmatpush1.bf16.msra.mxu0 0
        %4654 = vmatprep.subr.bf16.mxu0 0
        %4655 = vmatpush1.bf16.msra.mxu0 0
        %4656 = vmatprep.subr.bf16.mxu0 0
        %4657 = vmatpush1.bf16.msra.mxu0 0
        %4658 = vmatprep.subr.bf16.mxu0 0
        %4659 = vmatpush1.bf16.msra.mxu0 0
        %4660 = vmatprep.subr.bf16.mxu0 0
        %4661 = vmatpush1.bf16.msra.mxu0 0
        %4662 = vmatprep.subr.bf16.mxu0 %v4593
        %4663 = vmatpush1.bf16.msra.mxu0 %v4590
        %4664 = vmatprep.subr.bf16.mxu0 0
        %4665 = vmatpush2.bf16.msra.mxu0 0
        %4666 = vmatprep.subr.bf16.mxu0 0
        %4667 = vmatpush2.bf16.msra.mxu0 0
        %4668 = vmatprep.subr.bf16.mxu0 0
        %4669 = vmatpush2.bf16.msra.mxu0 0
        %4670 = vmatprep.subr.bf16.mxu0 0
        %4671 = vmatpush2.bf16.msra.mxu0 0
        %4672 = vmatprep.subr.bf16.mxu0 0
        %4673 = vmatpush2.bf16.msra.mxu0 0
        %4674 = vmatprep.subr.bf16.mxu0 0
        %4675 = vmatpush2.bf16.msra.mxu0 0
        %4676 = vmatprep.subr.bf16.mxu0 0
        %4677 = vmatpush2.bf16.msra.mxu0 0
        %4678 = vmatprep.subr.bf16.mxu0 0
        %4679 = vmatpush2.bf16.msra.mxu0 0
        %4680 = vmatprep.mubr.bf16.mxu0 0
        %4681 = vmatmul.mubr.bf16.gmra.mxu0 %v4581
        %v4682 = vpop.f32.mrf.mxu0
        %v4683 = vadd.f32 0.0, %v4682
        %v4684 = vpop.f32.mrf.mxu0
        %v4685 = vadd.f32 0.0, %v4684
        %v4686 = vpop.f32.mrf.mxu0
        %v4687 = vpop.f32.mrf.mxu0
        %4688 = vdwg.mxu0
        %4689 = vmatprep.subr.bf16.mxu0 0
        %4690 = vmatpush1.bf16.msra.mxu0 0
        %4691 = vmatprep.subr.bf16.mxu0 0
        %4692 = vmatpush1.bf16.msra.mxu0 0
        %4693 = vmatprep.subr.bf16.mxu0 0
        %4694 = vmatpush1.bf16.msra.mxu0 0
        %4695 = vmatprep.subr.bf16.mxu0 0
        %4696 = vmatpush1.bf16.msra.mxu0 0
        %4697 = vmatprep.subr.bf16.mxu0 0
        %4698 = vmatpush1.bf16.msra.mxu0 0
        %4699 = vmatprep.subr.bf16.mxu0 0
        %4700 = vmatpush1.bf16.msra.mxu0 0
        %4701 = vmatprep.subr.bf16.mxu0 0
        %4702 = vmatpush1.bf16.msra.mxu0 0
        %4703 = vmatprep.subr.bf16.mxu0 %v4599
        %4704 = vmatpush1.bf16.msra.mxu0 %v4596
        %4705 = vmatprep.subr.bf16.mxu0 0
        %4706 = vmatpush2.bf16.msra.mxu0 0
        %4707 = vmatprep.subr.bf16.mxu0 0
        %4708 = vmatpush2.bf16.msra.mxu0 0
        %4709 = vmatprep.subr.bf16.mxu0 0
        %4710 = vmatpush2.bf16.msra.mxu0 0
        %4711 = vmatprep.subr.bf16.mxu0 0
        %4712 = vmatpush2.bf16.msra.mxu0 0
        %4713 = vmatprep.subr.bf16.mxu0 0
        %4714 = vmatpush2.bf16.msra.mxu0 0
        %4715 = vmatprep.subr.bf16.mxu0 0
        %4716 = vmatpush2.bf16.msra.mxu0 0
        %4717 = vmatprep.subr.bf16.mxu0 0
        %4718 = vmatpush2.bf16.msra.mxu0 0
        %4719 = vmatprep.subr.bf16.mxu0 0
        %4720 = vmatpush2.bf16.msra.mxu0 0
        %4721 = vmatprep.mubr.bf16.mxu0 0
        %4722 = vmatmul.mubr.bf16.gmra.mxu0 %v4581
        %v4723 = vpop.f32.mrf.mxu0
        %v4724 = vadd.f32 0.0, %v4723
        %v4725 = vpop.f32.mrf.mxu0
        %v4726 = vadd.f32 0.0, %v4725
        %v4727 = vpop.f32.mrf.mxu0
        %v4728 = vpop.f32.mrf.mxu0
        %4729 = vdwg.mxu0
        %4730 = vmatprep.subr.bf16.mxu0 0
        %4731 = vmatpush1.bf16.msra.mxu0 0
        %4732 = vmatprep.subr.bf16.mxu0 0
        %4733 = vmatpush1.bf16.msra.mxu0 0
        %4734 = vmatprep.subr.bf16.mxu0 0
        %4735 = vmatpush1.bf16.msra.mxu0 0
        %4736 = vmatprep.subr.bf16.mxu0 0
        %4737 = vmatpush1.bf16.msra.mxu0 0
        %4738 = vmatprep.subr.bf16.mxu0 0
        %4739 = vmatpush1.bf16.msra.mxu0 0
        %4740 = vmatprep.subr.bf16.mxu0 0
        %4741 = vmatpush1.bf16.msra.mxu0 0
        %4742 = vmatprep.subr.bf16.mxu0 0
        %4743 = vmatpush1.bf16.msra.mxu0 0
        %4744 = vmatprep.subr.bf16.mxu0 %v4605
        %4745 = vmatpush1.bf16.msra.mxu0 %v4602
        %4746 = vmatprep.subr.bf16.mxu0 0
        %4747 = vmatpush2.bf16.msra.mxu0 0
        %4748 = vmatprep.subr.bf16.mxu0 0
        %4749 = vmatpush2.bf16.msra.mxu0 0
        %4750 = vmatprep.subr.bf16.mxu0 0
        %4751 = vmatpush2.bf16.msra.mxu0 0
        %4752 = vmatprep.subr.bf16.mxu0 0
        %4753 = vmatpush2.bf16.msra.mxu0 0
        %4754 = vmatprep.subr.bf16.mxu0 0
        %4755 = vmatpush2.bf16.msra.mxu0 0
        %4756 = vmatprep.subr.bf16.mxu0 0
        %4757 = vmatpush2.bf16.msra.mxu0 0
        %4758 = vmatprep.subr.bf16.mxu0 0
        %4759 = vmatpush2.bf16.msra.mxu0 0
        %4760 = vmatprep.subr.bf16.mxu0 0
        %4761 = vmatpush2.bf16.msra.mxu0 0
        %4762 = vmatprep.mubr.bf16.mxu0 0
        %4763 = vmatmul.mubr.bf16.gmra.mxu0 %v4581
        %v4764 = vpop.f32.mrf.mxu0
        %v4765 = vadd.f32 0.0, %v4764
        %v4766 = vpop.f32.mrf.mxu0
        %v4767 = vadd.f32 0.0, %v4766
        %v4768 = vpop.f32.mrf.mxu0
        %v4769 = vpop.f32.mrf.mxu0
        %4770 = vdwg.mxu0
        %v4771 = vadd.f32 %v4545, %v4642
        %v4772 = vadd.f32 %v4546, %v4644
        %v4773 = vadd.f32 %v4547, %v4683
        %v4774 = vadd.f32 %v4548, %v4685
        %v4775 = vadd.f32 %v4549, %v4724
        %v4776 = vadd.f32 %v4550, %v4726
        %v4777 = vadd.f32 %v4551, %v4765
        %v4778 = vadd.f32 %v4552, %v4767
        %4779 = vrot.lane.b32.xlu0 %v256, 60
        %v4780 = vpop.permute.xlu0 %4779
        %4781 = vrot.lane.b32.xlu0 %v257, 60
        %v4782 = vpop.permute.xlu0 %4781
        %4783 = vrot.lane.b32.xlu0 %v258, 60
        %v4784 = vpop.permute.xlu0 %4783
        %4785 = vrot.lane.b32.xlu0 %v259, 60
        %v4786 = vpop.permute.xlu0 %4785
        %4787 = vrot.lane.b32.xlu0 %v268, 60
        %v4788 = vpop.permute.xlu0 %4787
        %4789 = vrot.lane.b32.xlu0 %v269, 60
        %v4790 = vpop.permute.xlu0 %4789
        %4791 = vrot.lane.b32.xlu0 %v270, 60
        %v4792 = vpop.permute.xlu0 %4791
        %4793 = vrot.lane.b32.xlu0 %v271, 60
        %v4794 = vpop.permute.xlu0 %4793
        %4795 = vrot.lane.b32.xlu0 %v272, 60
        %v4796 = vpop.permute.xlu0 %4795
        %vm4797 = vcmask 490496
        %v4798 = vsel %vm4797, %v4780, %v4782
        %v4799 = vsel %vm4797, %v4782, %v4784
        %v4800 = vsel %vm4797, %v4784, %v4786
        %v4801 = vsel %vm4797, %v4786, %v4788
        %v4802 = vsel %vm4797, %v4788, %v4790
        %v4803 = vsel %vm4797, %v4790, %v4792
        %v4804 = vsel %vm4797, %v4792, %v4794
        %v4805 = vsel %vm4797, %v4794, %v4796
        %v4807 = vsel %vm327, %v293, 0
        %v4810 = vsel %vm331, %v4798, 0
        %v4813 = vsel %vm331, %v4799, 0
        %v4816 = vsel %vm331, %v4800, 0
        %v4819 = vsel %vm331, %v4801, 0
        %v4822 = vsel %vm331, %v4802, 0
        %v4825 = vsel %vm331, %v4803, 0
        %v4828 = vsel %vm331, %v4804, 0
        %v4831 = vsel %vm331, %v4805, 0
        %4833 = vmatprep.subr.bf16.mxu0 0
        %4834 = vmatpush1.bf16.msra.mxu0 0
        %4835 = vmatprep.subr.bf16.mxu0 0
        %4836 = vmatpush1.bf16.msra.mxu0 0
        %4837 = vmatprep.subr.bf16.mxu0 0
        %4838 = vmatpush1.bf16.msra.mxu0 0
        %4839 = vmatprep.subr.bf16.mxu0 0
        %4840 = vmatpush1.bf16.msra.mxu0 0
        %4841 = vmatprep.subr.bf16.mxu0 0
        %4842 = vmatpush1.bf16.msra.mxu0 0
        %4843 = vmatprep.subr.bf16.mxu0 0
        %4844 = vmatpush1.bf16.msra.mxu0 0
        %4845 = vmatprep.subr.bf16.mxu0 0
        %4846 = vmatpush1.bf16.msra.mxu0 0
        %4847 = vmatprep.subr.bf16.mxu0 %v4813
        %4848 = vmatpush1.bf16.msra.mxu0 %v4810
        %4849 = vmatprep.subr.bf16.mxu0 0
        %4850 = vmatpush2.bf16.msra.mxu0 0
        %4851 = vmatprep.subr.bf16.mxu0 0
        %4852 = vmatpush2.bf16.msra.mxu0 0
        %4853 = vmatprep.subr.bf16.mxu0 0
        %4854 = vmatpush2.bf16.msra.mxu0 0
        %4855 = vmatprep.subr.bf16.mxu0 0
        %4856 = vmatpush2.bf16.msra.mxu0 0
        %4857 = vmatprep.subr.bf16.mxu0 0
        %4858 = vmatpush2.bf16.msra.mxu0 0
        %4859 = vmatprep.subr.bf16.mxu0 0
        %4860 = vmatpush2.bf16.msra.mxu0 0
        %4861 = vmatprep.subr.bf16.mxu0 0
        %4862 = vmatpush2.bf16.msra.mxu0 0
        %4863 = vmatprep.subr.bf16.mxu0 0
        %4864 = vmatpush2.bf16.msra.mxu0 0
        %4865 = vmatprep.mubr.bf16.mxu0 0
        %4866 = vmatmul.mubr.bf16.gmra.mxu0 %v4807
        %v4867 = vpop.f32.mrf.mxu0
        %v4868 = vadd.f32 0.0, %v4867
        %v4869 = vpop.f32.mrf.mxu0
        %v4870 = vadd.f32 0.0, %v4869
        %v4871 = vpop.f32.mrf.mxu0
        %v4872 = vpop.f32.mrf.mxu0
        %4873 = vdwg.mxu0
        %4874 = vmatprep.subr.bf16.mxu0 0
        %4875 = vmatpush1.bf16.msra.mxu0 0
        %4876 = vmatprep.subr.bf16.mxu0 0
        %4877 = vmatpush1.bf16.msra.mxu0 0
        %4878 = vmatprep.subr.bf16.mxu0 0
        %4879 = vmatpush1.bf16.msra.mxu0 0
        %4880 = vmatprep.subr.bf16.mxu0 0
        %4881 = vmatpush1.bf16.msra.mxu0 0
        %4882 = vmatprep.subr.bf16.mxu0 0
        %4883 = vmatpush1.bf16.msra.mxu0 0
        %4884 = vmatprep.subr.bf16.mxu0 0
        %4885 = vmatpush1.bf16.msra.mxu0 0
        %4886 = vmatprep.subr.bf16.mxu0 0
        %4887 = vmatpush1.bf16.msra.mxu0 0
        %4888 = vmatprep.subr.bf16.mxu0 %v4819
        %4889 = vmatpush1.bf16.msra.mxu0 %v4816
        %4890 = vmatprep.subr.bf16.mxu0 0
        %4891 = vmatpush2.bf16.msra.mxu0 0
        %4892 = vmatprep.subr.bf16.mxu0 0
        %4893 = vmatpush2.bf16.msra.mxu0 0
        %4894 = vmatprep.subr.bf16.mxu0 0
        %4895 = vmatpush2.bf16.msra.mxu0 0
        %4896 = vmatprep.subr.bf16.mxu0 0
        %4897 = vmatpush2.bf16.msra.mxu0 0
        %4898 = vmatprep.subr.bf16.mxu0 0
        %4899 = vmatpush2.bf16.msra.mxu0 0
        %4900 = vmatprep.subr.bf16.mxu0 0
        %4901 = vmatpush2.bf16.msra.mxu0 0
        %4902 = vmatprep.subr.bf16.mxu0 0
        %4903 = vmatpush2.bf16.msra.mxu0 0
        %4904 = vmatprep.subr.bf16.mxu0 0
        %4905 = vmatpush2.bf16.msra.mxu0 0
        %4906 = vmatprep.mubr.bf16.mxu0 0
        %4907 = vmatmul.mubr.bf16.gmra.mxu0 %v4807
        %v4908 = vpop.f32.mrf.mxu0
        %v4909 = vadd.f32 0.0, %v4908
        %v4910 = vpop.f32.mrf.mxu0
        %v4911 = vadd.f32 0.0, %v4910
        %v4912 = vpop.f32.mrf.mxu0
        %v4913 = vpop.f32.mrf.mxu0
        %4914 = vdwg.mxu0
        %4915 = vmatprep.subr.bf16.mxu0 0
        %4916 = vmatpush1.bf16.msra.mxu0 0
        %4917 = vmatprep.subr.bf16.mxu0 0
        %4918 = vmatpush1.bf16.msra.mxu0 0
        %4919 = vmatprep.subr.bf16.mxu0 0
        %4920 = vmatpush1.bf16.msra.mxu0 0
        %4921 = vmatprep.subr.bf16.mxu0 0
        %4922 = vmatpush1.bf16.msra.mxu0 0
        %4923 = vmatprep.subr.bf16.mxu0 0
        %4924 = vmatpush1.bf16.msra.mxu0 0
        %4925 = vmatprep.subr.bf16.mxu0 0
        %4926 = vmatpush1.bf16.msra.mxu0 0
        %4927 = vmatprep.subr.bf16.mxu0 0
        %4928 = vmatpush1.bf16.msra.mxu0 0
        %4929 = vmatprep.subr.bf16.mxu0 %v4825
        %4930 = vmatpush1.bf16.msra.mxu0 %v4822
        %4931 = vmatprep.subr.bf16.mxu0 0
        %4932 = vmatpush2.bf16.msra.mxu0 0
        %4933 = vmatprep.subr.bf16.mxu0 0
        %4934 = vmatpush2.bf16.msra.mxu0 0
        %4935 = vmatprep.subr.bf16.mxu0 0
        %4936 = vmatpush2.bf16.msra.mxu0 0
        %4937 = vmatprep.subr.bf16.mxu0 0
        %4938 = vmatpush2.bf16.msra.mxu0 0
        %4939 = vmatprep.subr.bf16.mxu0 0
        %4940 = vmatpush2.bf16.msra.mxu0 0
        %4941 = vmatprep.subr.bf16.mxu0 0
        %4942 = vmatpush2.bf16.msra.mxu0 0
        %4943 = vmatprep.subr.bf16.mxu0 0
        %4944 = vmatpush2.bf16.msra.mxu0 0
        %4945 = vmatprep.subr.bf16.mxu0 0
        %4946 = vmatpush2.bf16.msra.mxu0 0
        %4947 = vmatprep.mubr.bf16.mxu0 0
        %4948 = vmatmul.mubr.bf16.gmra.mxu0 %v4807
        %v4949 = vpop.f32.mrf.mxu0
        %v4950 = vadd.f32 0.0, %v4949
        %v4951 = vpop.f32.mrf.mxu0
        %v4952 = vadd.f32 0.0, %v4951
        %v4953 = vpop.f32.mrf.mxu0
        %v4954 = vpop.f32.mrf.mxu0
        %4955 = vdwg.mxu0
        %4956 = vmatprep.subr.bf16.mxu0 0
        %4957 = vmatpush1.bf16.msra.mxu0 0
        %4958 = vmatprep.subr.bf16.mxu0 0
        %4959 = vmatpush1.bf16.msra.mxu0 0
        %4960 = vmatprep.subr.bf16.mxu0 0
        %4961 = vmatpush1.bf16.msra.mxu0 0
        %4962 = vmatprep.subr.bf16.mxu0 0
        %4963 = vmatpush1.bf16.msra.mxu0 0
        %4964 = vmatprep.subr.bf16.mxu0 0
        %4965 = vmatpush1.bf16.msra.mxu0 0
        %4966 = vmatprep.subr.bf16.mxu0 0
        %4967 = vmatpush1.bf16.msra.mxu0 0
        %4968 = vmatprep.subr.bf16.mxu0 0
        %4969 = vmatpush1.bf16.msra.mxu0 0
        %4970 = vmatprep.subr.bf16.mxu0 %v4831
        %4971 = vmatpush1.bf16.msra.mxu0 %v4828
        %4972 = vmatprep.subr.bf16.mxu0 0
        %4973 = vmatpush2.bf16.msra.mxu0 0
        %4974 = vmatprep.subr.bf16.mxu0 0
        %4975 = vmatpush2.bf16.msra.mxu0 0
        %4976 = vmatprep.subr.bf16.mxu0 0
        %4977 = vmatpush2.bf16.msra.mxu0 0
        %4978 = vmatprep.subr.bf16.mxu0 0
        %4979 = vmatpush2.bf16.msra.mxu0 0
        %4980 = vmatprep.subr.bf16.mxu0 0
        %4981 = vmatpush2.bf16.msra.mxu0 0
        %4982 = vmatprep.subr.bf16.mxu0 0
        %4983 = vmatpush2.bf16.msra.mxu0 0
        %4984 = vmatprep.subr.bf16.mxu0 0
        %4985 = vmatpush2.bf16.msra.mxu0 0
        %4986 = vmatprep.subr.bf16.mxu0 0
        %4987 = vmatpush2.bf16.msra.mxu0 0
        %4988 = vmatprep.mubr.bf16.mxu0 0
        %4989 = vmatmul.mubr.bf16.gmra.mxu0 %v4807
        %v4990 = vpop.f32.mrf.mxu0
        %v4991 = vadd.f32 0.0, %v4990
        %v4992 = vpop.f32.mrf.mxu0
        %v4993 = vadd.f32 0.0, %v4992
        %v4994 = vpop.f32.mrf.mxu0
        %v4995 = vpop.f32.mrf.mxu0
        %4996 = vdwg.mxu0
        %v4997 = vadd.f32 %v4771, %v4868
        %v4998 = vadd.f32 %v4772, %v4870
        %v4999 = vadd.f32 %v4773, %v4909
        %v5000 = vadd.f32 %v4774, %v4911
        %v5001 = vadd.f32 %v4775, %v4950
        %v5002 = vadd.f32 %v4776, %v4952
        %v5003 = vadd.f32 %v4777, %v4991
        %v5004 = vadd.f32 %v4778, %v4993
        %5005 = vrot.lane.b32.xlu0 %v256, 40
        %v5006 = vpop.permute.xlu0 %5005
        %5007 = vrot.lane.b32.xlu0 %v257, 40
        %v5008 = vpop.permute.xlu0 %5007
        %5009 = vrot.lane.b32.xlu0 %v258, 40
        %v5010 = vpop.permute.xlu0 %5009
        %5011 = vrot.lane.b32.xlu0 %v259, 40
        %v5012 = vpop.permute.xlu0 %5011
        %5013 = vrot.lane.b32.xlu0 %v268, 40
        %v5014 = vpop.permute.xlu0 %5013
        %5015 = vrot.lane.b32.xlu0 %v269, 40
        %v5016 = vpop.permute.xlu0 %5015
        %5017 = vrot.lane.b32.xlu0 %v270, 40
        %v5018 = vpop.permute.xlu0 %5017
        %5019 = vrot.lane.b32.xlu0 %v271, 40
        %v5020 = vpop.permute.xlu0 %5019
        %5021 = vrot.lane.b32.xlu0 %v272, 40
        %v5022 = vpop.permute.xlu0 %5021
        %vm5023 = vcmask 326656
        %v5024 = vsel %vm5023, %v5006, %v5008
        %v5025 = vsel %vm5023, %v5008, %v5010
        %v5026 = vsel %vm5023, %v5010, %v5012
        %v5027 = vsel %vm5023, %v5012, %v5014
        %v5028 = vsel %vm5023, %v5014, %v5016
        %v5029 = vsel %vm5023, %v5016, %v5018
        %v5030 = vsel %vm5023, %v5018, %v5020
        %v5031 = vsel %vm5023, %v5020, %v5022
        %v5033 = vsel %vm327, %v294, 0
        %v5036 = vsel %vm331, %v5024, 0
        %v5039 = vsel %vm331, %v5025, 0
        %v5042 = vsel %vm331, %v5026, 0
        %v5045 = vsel %vm331, %v5027, 0
        %v5048 = vsel %vm331, %v5028, 0
        %v5051 = vsel %vm331, %v5029, 0
        %v5054 = vsel %vm331, %v5030, 0
        %v5057 = vsel %vm331, %v5031, 0
        %5059 = vmatprep.subr.bf16.mxu0 0
        %5060 = vmatpush1.bf16.msra.mxu0 0
        %5061 = vmatprep.subr.bf16.mxu0 0
        %5062 = vmatpush1.bf16.msra.mxu0 0
        %5063 = vmatprep.subr.bf16.mxu0 0
        %5064 = vmatpush1.bf16.msra.mxu0 0
        %5065 = vmatprep.subr.bf16.mxu0 0
        %5066 = vmatpush1.bf16.msra.mxu0 0
        %5067 = vmatprep.subr.bf16.mxu0 0
        %5068 = vmatpush1.bf16.msra.mxu0 0
        %5069 = vmatprep.subr.bf16.mxu0 0
        %5070 = vmatpush1.bf16.msra.mxu0 0
        %5071 = vmatprep.subr.bf16.mxu0 0
        %5072 = vmatpush1.bf16.msra.mxu0 0
        %5073 = vmatprep.subr.bf16.mxu0 %v5039
        %5074 = vmatpush1.bf16.msra.mxu0 %v5036
        %5075 = vmatprep.subr.bf16.mxu0 0
        %5076 = vmatpush2.bf16.msra.mxu0 0
        %5077 = vmatprep.subr.bf16.mxu0 0
        %5078 = vmatpush2.bf16.msra.mxu0 0
        %5079 = vmatprep.subr.bf16.mxu0 0
        %5080 = vmatpush2.bf16.msra.mxu0 0
        %5081 = vmatprep.subr.bf16.mxu0 0
        %5082 = vmatpush2.bf16.msra.mxu0 0
        %5083 = vmatprep.subr.bf16.mxu0 0
        %5084 = vmatpush2.bf16.msra.mxu0 0
        %5085 = vmatprep.subr.bf16.mxu0 0
        %5086 = vmatpush2.bf16.msra.mxu0 0
        %5087 = vmatprep.subr.bf16.mxu0 0
        %5088 = vmatpush2.bf16.msra.mxu0 0
        %5089 = vmatprep.subr.bf16.mxu0 0
        %5090 = vmatpush2.bf16.msra.mxu0 0
        %5091 = vmatprep.mubr.bf16.mxu0 0
        %5092 = vmatmul.mubr.bf16.gmra.mxu0 %v5033
        %v5093 = vpop.f32.mrf.mxu0
        %v5094 = vadd.f32 0.0, %v5093
        %v5095 = vpop.f32.mrf.mxu0
        %v5096 = vadd.f32 0.0, %v5095
        %v5097 = vpop.f32.mrf.mxu0
        %v5098 = vpop.f32.mrf.mxu0
        %5099 = vdwg.mxu0
        %5100 = vmatprep.subr.bf16.mxu0 0
        %5101 = vmatpush1.bf16.msra.mxu0 0
        %5102 = vmatprep.subr.bf16.mxu0 0
        %5103 = vmatpush1.bf16.msra.mxu0 0
        %5104 = vmatprep.subr.bf16.mxu0 0
        %5105 = vmatpush1.bf16.msra.mxu0 0
        %5106 = vmatprep.subr.bf16.mxu0 0
        %5107 = vmatpush1.bf16.msra.mxu0 0
        %5108 = vmatprep.subr.bf16.mxu0 0
        %5109 = vmatpush1.bf16.msra.mxu0 0
        %5110 = vmatprep.subr.bf16.mxu0 0
        %5111 = vmatpush1.bf16.msra.mxu0 0
        %5112 = vmatprep.subr.bf16.mxu0 0
        %5113 = vmatpush1.bf16.msra.mxu0 0
        %5114 = vmatprep.subr.bf16.mxu0 %v5045
        %5115 = vmatpush1.bf16.msra.mxu0 %v5042
        %5116 = vmatprep.subr.bf16.mxu0 0
        %5117 = vmatpush2.bf16.msra.mxu0 0
        %5118 = vmatprep.subr.bf16.mxu0 0
        %5119 = vmatpush2.bf16.msra.mxu0 0
        %5120 = vmatprep.subr.bf16.mxu0 0
        %5121 = vmatpush2.bf16.msra.mxu0 0
        %5122 = vmatprep.subr.bf16.mxu0 0
        %5123 = vmatpush2.bf16.msra.mxu0 0
        %5124 = vmatprep.subr.bf16.mxu0 0
        %5125 = vmatpush2.bf16.msra.mxu0 0
        %5126 = vmatprep.subr.bf16.mxu0 0
        %5127 = vmatpush2.bf16.msra.mxu0 0
        %5128 = vmatprep.subr.bf16.mxu0 0
        %5129 = vmatpush2.bf16.msra.mxu0 0
        %5130 = vmatprep.subr.bf16.mxu0 0
        %5131 = vmatpush2.bf16.msra.mxu0 0
        %5132 = vmatprep.mubr.bf16.mxu0 0
        %5133 = vmatmul.mubr.bf16.gmra.mxu0 %v5033
        %v5134 = vpop.f32.mrf.mxu0
        %v5135 = vadd.f32 0.0, %v5134
        %v5136 = vpop.f32.mrf.mxu0
        %v5137 = vadd.f32 0.0, %v5136
        %v5138 = vpop.f32.mrf.mxu0
        %v5139 = vpop.f32.mrf.mxu0
        %5140 = vdwg.mxu0
        %5141 = vmatprep.subr.bf16.mxu0 0
        %5142 = vmatpush1.bf16.msra.mxu0 0
        %5143 = vmatprep.subr.bf16.mxu0 0
        %5144 = vmatpush1.bf16.msra.mxu0 0
        %5145 = vmatprep.subr.bf16.mxu0 0
        %5146 = vmatpush1.bf16.msra.mxu0 0
        %5147 = vmatprep.subr.bf16.mxu0 0
        %5148 = vmatpush1.bf16.msra.mxu0 0
        %5149 = vmatprep.subr.bf16.mxu0 0
        %5150 = vmatpush1.bf16.msra.mxu0 0
        %5151 = vmatprep.subr.bf16.mxu0 0
        %5152 = vmatpush1.bf16.msra.mxu0 0
        %5153 = vmatprep.subr.bf16.mxu0 0
        %5154 = vmatpush1.bf16.msra.mxu0 0
        %5155 = vmatprep.subr.bf16.mxu0 %v5051
        %5156 = vmatpush1.bf16.msra.mxu0 %v5048
        %5157 = vmatprep.subr.bf16.mxu0 0
        %5158 = vmatpush2.bf16.msra.mxu0 0
        %5159 = vmatprep.subr.bf16.mxu0 0
        %5160 = vmatpush2.bf16.msra.mxu0 0
        %5161 = vmatprep.subr.bf16.mxu0 0
        %5162 = vmatpush2.bf16.msra.mxu0 0
        %5163 = vmatprep.subr.bf16.mxu0 0
        %5164 = vmatpush2.bf16.msra.mxu0 0
        %5165 = vmatprep.subr.bf16.mxu0 0
        %5166 = vmatpush2.bf16.msra.mxu0 0
        %5167 = vmatprep.subr.bf16.mxu0 0
        %5168 = vmatpush2.bf16.msra.mxu0 0
        %5169 = vmatprep.subr.bf16.mxu0 0
        %5170 = vmatpush2.bf16.msra.mxu0 0
        %5171 = vmatprep.subr.bf16.mxu0 0
        %5172 = vmatpush2.bf16.msra.mxu0 0
        %5173 = vmatprep.mubr.bf16.mxu0 0
        %5174 = vmatmul.mubr.bf16.gmra.mxu0 %v5033
        %v5175 = vpop.f32.mrf.mxu0
        %v5176 = vadd.f32 0.0, %v5175
        %v5177 = vpop.f32.mrf.mxu0
        %v5178 = vadd.f32 0.0, %v5177
        %v5179 = vpop.f32.mrf.mxu0
        %v5180 = vpop.f32.mrf.mxu0
        %5181 = vdwg.mxu0
        %5182 = vmatprep.subr.bf16.mxu0 0
        %5183 = vmatpush1.bf16.msra.mxu0 0
        %5184 = vmatprep.subr.bf16.mxu0 0
        %5185 = vmatpush1.bf16.msra.mxu0 0
        %5186 = vmatprep.subr.bf16.mxu0 0
        %5187 = vmatpush1.bf16.msra.mxu0 0
        %5188 = vmatprep.subr.bf16.mxu0 0
        %5189 = vmatpush1.bf16.msra.mxu0 0
        %5190 = vmatprep.subr.bf16.mxu0 0
        %5191 = vmatpush1.bf16.msra.mxu0 0
        %5192 = vmatprep.subr.bf16.mxu0 0
        %5193 = vmatpush1.bf16.msra.mxu0 0
        %5194 = vmatprep.subr.bf16.mxu0 0
        %5195 = vmatpush1.bf16.msra.mxu0 0
        %5196 = vmatprep.subr.bf16.mxu0 %v5057
        %5197 = vmatpush1.bf16.msra.mxu0 %v5054
        %5198 = vmatprep.subr.bf16.mxu0 0
        %5199 = vmatpush2.bf16.msra.mxu0 0
        %5200 = vmatprep.subr.bf16.mxu0 0
        %5201 = vmatpush2.bf16.msra.mxu0 0
        %5202 = vmatprep.subr.bf16.mxu0 0
        %5203 = vmatpush2.bf16.msra.mxu0 0
        %5204 = vmatprep.subr.bf16.mxu0 0
        %5205 = vmatpush2.bf16.msra.mxu0 0
        %5206 = vmatprep.subr.bf16.mxu0 0
        %5207 = vmatpush2.bf16.msra.mxu0 0
        %5208 = vmatprep.subr.bf16.mxu0 0
        %5209 = vmatpush2.bf16.msra.mxu0 0
        %5210 = vmatprep.subr.bf16.mxu0 0
        %5211 = vmatpush2.bf16.msra.mxu0 0
        %5212 = vmatprep.subr.bf16.mxu0 0
        %5213 = vmatpush2.bf16.msra.mxu0 0
        %5214 = vmatprep.mubr.bf16.mxu0 0
        %5215 = vmatmul.mubr.bf16.gmra.mxu0 %v5033
        %v5216 = vpop.f32.mrf.mxu0
        %v5217 = vadd.f32 0.0, %v5216
        %v5218 = vpop.f32.mrf.mxu0
        %v5219 = vadd.f32 0.0, %v5218
        %v5220 = vpop.f32.mrf.mxu0
        %v5221 = vpop.f32.mrf.mxu0
        %5222 = vdwg.mxu0
        %v5223 = vadd.f32 %v4997, %v5094
        %v5224 = vadd.f32 %v4998, %v5096
        %v5225 = vadd.f32 %v4999, %v5135
        %v5226 = vadd.f32 %v5000, %v5137
        %v5227 = vadd.f32 %v5001, %v5176
        %v5228 = vadd.f32 %v5002, %v5178
        %v5229 = vadd.f32 %v5003, %v5217
        %v5230 = vadd.f32 %v5004, %v5219
        %5231 = vrot.lane.b32.xlu0 %v256, 38
        %v5232 = vpop.permute.xlu0 %5231
        %5233 = vrot.lane.b32.xlu0 %v257, 38
        %v5234 = vpop.permute.xlu0 %5233
        %5235 = vrot.lane.b32.xlu0 %v258, 38
        %v5236 = vpop.permute.xlu0 %5235
        %5237 = vrot.lane.b32.xlu0 %v259, 38
        %v5238 = vpop.permute.xlu0 %5237
        %5239 = vrot.lane.b32.xlu0 %v268, 38
        %v5240 = vpop.permute.xlu0 %5239
        %5241 = vrot.lane.b32.xlu0 %v269, 38
        %v5242 = vpop.permute.xlu0 %5241
        %5243 = vrot.lane.b32.xlu0 %v270, 38
        %v5244 = vpop.permute.xlu0 %5243
        %5245 = vrot.lane.b32.xlu0 %v271, 38
        %v5246 = vpop.permute.xlu0 %5245
        %5247 = vrot.lane.b32.xlu0 %v272, 38
        %v5248 = vpop.permute.xlu0 %5247
        %vm5249 = vcmask 310272
        %v5250 = vsel %vm5249, %v5232, %v5234
        %v5251 = vsel %vm5249, %v5234, %v5236
        %v5252 = vsel %vm5249, %v5236, %v5238
        %v5253 = vsel %vm5249, %v5238, %v5240
        %v5254 = vsel %vm5249, %v5240, %v5242
        %v5255 = vsel %vm5249, %v5242, %v5244
        %v5256 = vsel %vm5249, %v5244, %v5246
        %v5257 = vsel %vm5249, %v5246, %v5248
        %v5259 = vsel %vm327, %v295, 0
        %v5262 = vsel %vm331, %v5250, 0
        %v5265 = vsel %vm331, %v5251, 0
        %v5268 = vsel %vm331, %v5252, 0
        %v5271 = vsel %vm331, %v5253, 0
        %v5274 = vsel %vm331, %v5254, 0
        %v5277 = vsel %vm331, %v5255, 0
        %v5280 = vsel %vm331, %v5256, 0
        %v5283 = vsel %vm331, %v5257, 0
        %5285 = vmatprep.subr.bf16.mxu0 0
        %5286 = vmatpush1.bf16.msra.mxu0 0
        %5287 = vmatprep.subr.bf16.mxu0 0
        %5288 = vmatpush1.bf16.msra.mxu0 0
        %5289 = vmatprep.subr.bf16.mxu0 0
        %5290 = vmatpush1.bf16.msra.mxu0 0
        %5291 = vmatprep.subr.bf16.mxu0 0
        %5292 = vmatpush1.bf16.msra.mxu0 0
        %5293 = vmatprep.subr.bf16.mxu0 0
        %5294 = vmatpush1.bf16.msra.mxu0 0
        %5295 = vmatprep.subr.bf16.mxu0 0
        %5296 = vmatpush1.bf16.msra.mxu0 0
        %5297 = vmatprep.subr.bf16.mxu0 0
        %5298 = vmatpush1.bf16.msra.mxu0 0
        %5299 = vmatprep.subr.bf16.mxu0 %v5265
        %5300 = vmatpush1.bf16.msra.mxu0 %v5262
        %5301 = vmatprep.subr.bf16.mxu0 0
        %5302 = vmatpush2.bf16.msra.mxu0 0
        %5303 = vmatprep.subr.bf16.mxu0 0
        %5304 = vmatpush2.bf16.msra.mxu0 0
        %5305 = vmatprep.subr.bf16.mxu0 0
        %5306 = vmatpush2.bf16.msra.mxu0 0
        %5307 = vmatprep.subr.bf16.mxu0 0
        %5308 = vmatpush2.bf16.msra.mxu0 0
        %5309 = vmatprep.subr.bf16.mxu0 0
        %5310 = vmatpush2.bf16.msra.mxu0 0
        %5311 = vmatprep.subr.bf16.mxu0 0
        %5312 = vmatpush2.bf16.msra.mxu0 0
        %5313 = vmatprep.subr.bf16.mxu0 0
        %5314 = vmatpush2.bf16.msra.mxu0 0
        %5315 = vmatprep.subr.bf16.mxu0 0
        %5316 = vmatpush2.bf16.msra.mxu0 0
        %5317 = vmatprep.mubr.bf16.mxu0 0
        %5318 = vmatmul.mubr.bf16.gmra.mxu0 %v5259
        %v5319 = vpop.f32.mrf.mxu0
        %v5320 = vadd.f32 0.0, %v5319
        %v5321 = vpop.f32.mrf.mxu0
        %v5322 = vadd.f32 0.0, %v5321
        %v5323 = vpop.f32.mrf.mxu0
        %v5324 = vpop.f32.mrf.mxu0
        %5325 = vdwg.mxu0
        %5326 = vmatprep.subr.bf16.mxu0 0
        %5327 = vmatpush1.bf16.msra.mxu0 0
        %5328 = vmatprep.subr.bf16.mxu0 0
        %5329 = vmatpush1.bf16.msra.mxu0 0
        %5330 = vmatprep.subr.bf16.mxu0 0
        %5331 = vmatpush1.bf16.msra.mxu0 0
        %5332 = vmatprep.subr.bf16.mxu0 0
        %5333 = vmatpush1.bf16.msra.mxu0 0
        %5334 = vmatprep.subr.bf16.mxu0 0
        %5335 = vmatpush1.bf16.msra.mxu0 0
        %5336 = vmatprep.subr.bf16.mxu0 0
        %5337 = vmatpush1.bf16.msra.mxu0 0
        %5338 = vmatprep.subr.bf16.mxu0 0
        %5339 = vmatpush1.bf16.msra.mxu0 0
        %5340 = vmatprep.subr.bf16.mxu0 %v5271
        %5341 = vmatpush1.bf16.msra.mxu0 %v5268
        %5342 = vmatprep.subr.bf16.mxu0 0
        %5343 = vmatpush2.bf16.msra.mxu0 0
        %5344 = vmatprep.subr.bf16.mxu0 0
        %5345 = vmatpush2.bf16.msra.mxu0 0
        %5346 = vmatprep.subr.bf16.mxu0 0
        %5347 = vmatpush2.bf16.msra.mxu0 0
        %5348 = vmatprep.subr.bf16.mxu0 0
        %5349 = vmatpush2.bf16.msra.mxu0 0
        %5350 = vmatprep.subr.bf16.mxu0 0
        %5351 = vmatpush2.bf16.msra.mxu0 0
        %5352 = vmatprep.subr.bf16.mxu0 0
        %5353 = vmatpush2.bf16.msra.mxu0 0
        %5354 = vmatprep.subr.bf16.mxu0 0
        %5355 = vmatpush2.bf16.msra.mxu0 0
        %5356 = vmatprep.subr.bf16.mxu0 0
        %5357 = vmatpush2.bf16.msra.mxu0 0
        %5358 = vmatprep.mubr.bf16.mxu0 0
        %5359 = vmatmul.mubr.bf16.gmra.mxu0 %v5259
        %v5360 = vpop.f32.mrf.mxu0
        %v5361 = vadd.f32 0.0, %v5360
        %v5362 = vpop.f32.mrf.mxu0
        %v5363 = vadd.f32 0.0, %v5362
        %v5364 = vpop.f32.mrf.mxu0
        %v5365 = vpop.f32.mrf.mxu0
        %5366 = vdwg.mxu0
        %5367 = vmatprep.subr.bf16.mxu0 0
        %5368 = vmatpush1.bf16.msra.mxu0 0
        %5369 = vmatprep.subr.bf16.mxu0 0
        %5370 = vmatpush1.bf16.msra.mxu0 0
        %5371 = vmatprep.subr.bf16.mxu0 0
        %5372 = vmatpush1.bf16.msra.mxu0 0
        %5373 = vmatprep.subr.bf16.mxu0 0
        %5374 = vmatpush1.bf16.msra.mxu0 0
        %5375 = vmatprep.subr.bf16.mxu0 0
        %5376 = vmatpush1.bf16.msra.mxu0 0
        %5377 = vmatprep.subr.bf16.mxu0 0
        %5378 = vmatpush1.bf16.msra.mxu0 0
        %5379 = vmatprep.subr.bf16.mxu0 0
        %5380 = vmatpush1.bf16.msra.mxu0 0
        %5381 = vmatprep.subr.bf16.mxu0 %v5277
        %5382 = vmatpush1.bf16.msra.mxu0 %v5274
        %5383 = vmatprep.subr.bf16.mxu0 0
        %5384 = vmatpush2.bf16.msra.mxu0 0
        %5385 = vmatprep.subr.bf16.mxu0 0
        %5386 = vmatpush2.bf16.msra.mxu0 0
        %5387 = vmatprep.subr.bf16.mxu0 0
        %5388 = vmatpush2.bf16.msra.mxu0 0
        %5389 = vmatprep.subr.bf16.mxu0 0
        %5390 = vmatpush2.bf16.msra.mxu0 0
        %5391 = vmatprep.subr.bf16.mxu0 0
        %5392 = vmatpush2.bf16.msra.mxu0 0
        %5393 = vmatprep.subr.bf16.mxu0 0
        %5394 = vmatpush2.bf16.msra.mxu0 0
        %5395 = vmatprep.subr.bf16.mxu0 0
        %5396 = vmatpush2.bf16.msra.mxu0 0
        %5397 = vmatprep.subr.bf16.mxu0 0
        %5398 = vmatpush2.bf16.msra.mxu0 0
        %5399 = vmatprep.mubr.bf16.mxu0 0
        %5400 = vmatmul.mubr.bf16.gmra.mxu0 %v5259
        %v5401 = vpop.f32.mrf.mxu0
        %v5402 = vadd.f32 0.0, %v5401
        %v5403 = vpop.f32.mrf.mxu0
        %v5404 = vadd.f32 0.0, %v5403
        %v5405 = vpop.f32.mrf.mxu0
        %v5406 = vpop.f32.mrf.mxu0
        %5407 = vdwg.mxu0
        %5408 = vmatprep.subr.bf16.mxu0 0
        %5409 = vmatpush1.bf16.msra.mxu0 0
        %5410 = vmatprep.subr.bf16.mxu0 0
        %5411 = vmatpush1.bf16.msra.mxu0 0
        %5412 = vmatprep.subr.bf16.mxu0 0
        %5413 = vmatpush1.bf16.msra.mxu0 0
        %5414 = vmatprep.subr.bf16.mxu0 0
        %5415 = vmatpush1.bf16.msra.mxu0 0
        %5416 = vmatprep.subr.bf16.mxu0 0
        %5417 = vmatpush1.bf16.msra.mxu0 0
        %5418 = vmatprep.subr.bf16.mxu0 0
        %5419 = vmatpush1.bf16.msra.mxu0 0
        %5420 = vmatprep.subr.bf16.mxu0 0
        %5421 = vmatpush1.bf16.msra.mxu0 0
        %5422 = vmatprep.subr.bf16.mxu0 %v5283
        %5423 = vmatpush1.bf16.msra.mxu0 %v5280
        %5424 = vmatprep.subr.bf16.mxu0 0
        %5425 = vmatpush2.bf16.msra.mxu0 0
        %5426 = vmatprep.subr.bf16.mxu0 0
        %5427 = vmatpush2.bf16.msra.mxu0 0
        %5428 = vmatprep.subr.bf16.mxu0 0
        %5429 = vmatpush2.bf16.msra.mxu0 0
        %5430 = vmatprep.subr.bf16.mxu0 0
        %5431 = vmatpush2.bf16.msra.mxu0 0
        %5432 = vmatprep.subr.bf16.mxu0 0
        %5433 = vmatpush2.bf16.msra.mxu0 0
        %5434 = vmatprep.subr.bf16.mxu0 0
        %5435 = vmatpush2.bf16.msra.mxu0 0
        %5436 = vmatprep.subr.bf16.mxu0 0
        %5437 = vmatpush2.bf16.msra.mxu0 0
        %5438 = vmatprep.subr.bf16.mxu0 0
        %5439 = vmatpush2.bf16.msra.mxu0 0
        %5440 = vmatprep.mubr.bf16.mxu0 0
        %5441 = vmatmul.mubr.bf16.gmra.mxu0 %v5259
        %v5442 = vpop.f32.mrf.mxu0
        %v5443 = vadd.f32 0.0, %v5442
        %v5444 = vpop.f32.mrf.mxu0
        %v5445 = vadd.f32 0.0, %v5444
        %v5446 = vpop.f32.mrf.mxu0
        %v5447 = vpop.f32.mrf.mxu0
        %5448 = vdwg.mxu0
        %v5449 = vadd.f32 %v5223, %v5320
        %v5450 = vadd.f32 %v5224, %v5322
        %v5451 = vadd.f32 %v5225, %v5361
        %v5452 = vadd.f32 %v5226, %v5363
        %v5453 = vadd.f32 %v5227, %v5402
        %v5454 = vadd.f32 %v5228, %v5404
        %v5455 = vadd.f32 %v5229, %v5443
        %v5456 = vadd.f32 %v5230, %v5445
        %5457 = vrot.lane.b32.xlu0 %v256, 36
        %v5458 = vpop.permute.xlu0 %5457
        %5459 = vrot.lane.b32.xlu0 %v257, 36
        %v5460 = vpop.permute.xlu0 %5459
        %5461 = vrot.lane.b32.xlu0 %v258, 36
        %v5462 = vpop.permute.xlu0 %5461
        %5463 = vrot.lane.b32.xlu0 %v259, 36
        %v5464 = vpop.permute.xlu0 %5463
        %5465 = vrot.lane.b32.xlu0 %v268, 36
        %v5466 = vpop.permute.xlu0 %5465
        %5467 = vrot.lane.b32.xlu0 %v269, 36
        %v5468 = vpop.permute.xlu0 %5467
        %5469 = vrot.lane.b32.xlu0 %v270, 36
        %v5470 = vpop.permute.xlu0 %5469
        %5471 = vrot.lane.b32.xlu0 %v271, 36
        %v5472 = vpop.permute.xlu0 %5471
        %5473 = vrot.lane.b32.xlu0 %v272, 36
        %v5474 = vpop.permute.xlu0 %5473
        %vm5475 = vcmask 293888
        %v5476 = vsel %vm5475, %v5458, %v5460
        %v5477 = vsel %vm5475, %v5460, %v5462
        %v5478 = vsel %vm5475, %v5462, %v5464
        %v5479 = vsel %vm5475, %v5464, %v5466
        %v5480 = vsel %vm5475, %v5466, %v5468
        %v5481 = vsel %vm5475, %v5468, %v5470
        %v5482 = vsel %vm5475, %v5470, %v5472
        %v5483 = vsel %vm5475, %v5472, %v5474
        %v5485 = vsel %vm327, %v296, 0
        %v5488 = vsel %vm331, %v5476, 0
        %v5491 = vsel %vm331, %v5477, 0
        %v5494 = vsel %vm331, %v5478, 0
        %v5497 = vsel %vm331, %v5479, 0
        %v5500 = vsel %vm331, %v5480, 0
        %v5503 = vsel %vm331, %v5481, 0
        %v5506 = vsel %vm331, %v5482, 0
        %v5509 = vsel %vm331, %v5483, 0
        %5511 = vmatprep.subr.bf16.mxu0 0
        %5512 = vmatpush1.bf16.msra.mxu0 0
        %5513 = vmatprep.subr.bf16.mxu0 0
        %5514 = vmatpush1.bf16.msra.mxu0 0
        %5515 = vmatprep.subr.bf16.mxu0 0
        %5516 = vmatpush1.bf16.msra.mxu0 0
        %5517 = vmatprep.subr.bf16.mxu0 0
        %5518 = vmatpush1.bf16.msra.mxu0 0
        %5519 = vmatprep.subr.bf16.mxu0 0
        %5520 = vmatpush1.bf16.msra.mxu0 0
        %5521 = vmatprep.subr.bf16.mxu0 0
        %5522 = vmatpush1.bf16.msra.mxu0 0
        %5523 = vmatprep.subr.bf16.mxu0 0
        %5524 = vmatpush1.bf16.msra.mxu0 0
        %5525 = vmatprep.subr.bf16.mxu0 %v5491
        %5526 = vmatpush1.bf16.msra.mxu0 %v5488
        %5527 = vmatprep.subr.bf16.mxu0 0
        %5528 = vmatpush2.bf16.msra.mxu0 0
        %5529 = vmatprep.subr.bf16.mxu0 0
        %5530 = vmatpush2.bf16.msra.mxu0 0
        %5531 = vmatprep.subr.bf16.mxu0 0
        %5532 = vmatpush2.bf16.msra.mxu0 0
        %5533 = vmatprep.subr.bf16.mxu0 0
        %5534 = vmatpush2.bf16.msra.mxu0 0
        %5535 = vmatprep.subr.bf16.mxu0 0
        %5536 = vmatpush2.bf16.msra.mxu0 0
        %5537 = vmatprep.subr.bf16.mxu0 0
        %5538 = vmatpush2.bf16.msra.mxu0 0
        %5539 = vmatprep.subr.bf16.mxu0 0
        %5540 = vmatpush2.bf16.msra.mxu0 0
        %5541 = vmatprep.subr.bf16.mxu0 0
        %5542 = vmatpush2.bf16.msra.mxu0 0
        %5543 = vmatprep.mubr.bf16.mxu0 0
        %5544 = vmatmul.mubr.bf16.gmra.mxu0 %v5485
        %v5545 = vpop.f32.mrf.mxu0
        %v5546 = vadd.f32 0.0, %v5545
        %v5547 = vpop.f32.mrf.mxu0
        %v5548 = vadd.f32 0.0, %v5547
        %v5549 = vpop.f32.mrf.mxu0
        %v5550 = vpop.f32.mrf.mxu0
        %5551 = vdwg.mxu0
        %5552 = vmatprep.subr.bf16.mxu0 0
        %5553 = vmatpush1.bf16.msra.mxu0 0
        %5554 = vmatprep.subr.bf16.mxu0 0
        %5555 = vmatpush1.bf16.msra.mxu0 0
        %5556 = vmatprep.subr.bf16.mxu0 0
        %5557 = vmatpush1.bf16.msra.mxu0 0
        %5558 = vmatprep.subr.bf16.mxu0 0
        %5559 = vmatpush1.bf16.msra.mxu0 0
        %5560 = vmatprep.subr.bf16.mxu0 0
        %5561 = vmatpush1.bf16.msra.mxu0 0
        %5562 = vmatprep.subr.bf16.mxu0 0
        %5563 = vmatpush1.bf16.msra.mxu0 0
        %5564 = vmatprep.subr.bf16.mxu0 0
        %5565 = vmatpush1.bf16.msra.mxu0 0
        %5566 = vmatprep.subr.bf16.mxu0 %v5497
        %5567 = vmatpush1.bf16.msra.mxu0 %v5494
        %5568 = vmatprep.subr.bf16.mxu0 0
        %5569 = vmatpush2.bf16.msra.mxu0 0
        %5570 = vmatprep.subr.bf16.mxu0 0
        %5571 = vmatpush2.bf16.msra.mxu0 0
        %5572 = vmatprep.subr.bf16.mxu0 0
        %5573 = vmatpush2.bf16.msra.mxu0 0
        %5574 = vmatprep.subr.bf16.mxu0 0
        %5575 = vmatpush2.bf16.msra.mxu0 0
        %5576 = vmatprep.subr.bf16.mxu0 0
        %5577 = vmatpush2.bf16.msra.mxu0 0
        %5578 = vmatprep.subr.bf16.mxu0 0
        %5579 = vmatpush2.bf16.msra.mxu0 0
        %5580 = vmatprep.subr.bf16.mxu0 0
        %5581 = vmatpush2.bf16.msra.mxu0 0
        %5582 = vmatprep.subr.bf16.mxu0 0
        %5583 = vmatpush2.bf16.msra.mxu0 0
        %5584 = vmatprep.mubr.bf16.mxu0 0
        %5585 = vmatmul.mubr.bf16.gmra.mxu0 %v5485
        %v5586 = vpop.f32.mrf.mxu0
        %v5587 = vadd.f32 0.0, %v5586
        %v5588 = vpop.f32.mrf.mxu0
        %v5589 = vadd.f32 0.0, %v5588
        %v5590 = vpop.f32.mrf.mxu0
        %v5591 = vpop.f32.mrf.mxu0
        %5592 = vdwg.mxu0
        %5593 = vmatprep.subr.bf16.mxu0 0
        %5594 = vmatpush1.bf16.msra.mxu0 0
        %5595 = vmatprep.subr.bf16.mxu0 0
        %5596 = vmatpush1.bf16.msra.mxu0 0
        %5597 = vmatprep.subr.bf16.mxu0 0
        %5598 = vmatpush1.bf16.msra.mxu0 0
        %5599 = vmatprep.subr.bf16.mxu0 0
        %5600 = vmatpush1.bf16.msra.mxu0 0
        %5601 = vmatprep.subr.bf16.mxu0 0
        %5602 = vmatpush1.bf16.msra.mxu0 0
        %5603 = vmatprep.subr.bf16.mxu0 0
        %5604 = vmatpush1.bf16.msra.mxu0 0
        %5605 = vmatprep.subr.bf16.mxu0 0
        %5606 = vmatpush1.bf16.msra.mxu0 0
        %5607 = vmatprep.subr.bf16.mxu0 %v5503
        %5608 = vmatpush1.bf16.msra.mxu0 %v5500
        %5609 = vmatprep.subr.bf16.mxu0 0
        %5610 = vmatpush2.bf16.msra.mxu0 0
        %5611 = vmatprep.subr.bf16.mxu0 0
        %5612 = vmatpush2.bf16.msra.mxu0 0
        %5613 = vmatprep.subr.bf16.mxu0 0
        %5614 = vmatpush2.bf16.msra.mxu0 0
        %5615 = vmatprep.subr.bf16.mxu0 0
        %5616 = vmatpush2.bf16.msra.mxu0 0
        %5617 = vmatprep.subr.bf16.mxu0 0
        %5618 = vmatpush2.bf16.msra.mxu0 0
        %5619 = vmatprep.subr.bf16.mxu0 0
        %5620 = vmatpush2.bf16.msra.mxu0 0
        %5621 = vmatprep.subr.bf16.mxu0 0
        %5622 = vmatpush2.bf16.msra.mxu0 0
        %5623 = vmatprep.subr.bf16.mxu0 0
        %5624 = vmatpush2.bf16.msra.mxu0 0
        %5625 = vmatprep.mubr.bf16.mxu0 0
        %5626 = vmatmul.mubr.bf16.gmra.mxu0 %v5485
        %v5627 = vpop.f32.mrf.mxu0
        %v5628 = vadd.f32 0.0, %v5627
        %v5629 = vpop.f32.mrf.mxu0
        %v5630 = vadd.f32 0.0, %v5629
        %v5631 = vpop.f32.mrf.mxu0
        %v5632 = vpop.f32.mrf.mxu0
        %5633 = vdwg.mxu0
        %5634 = vmatprep.subr.bf16.mxu0 0
        %5635 = vmatpush1.bf16.msra.mxu0 0
        %5636 = vmatprep.subr.bf16.mxu0 0
        %5637 = vmatpush1.bf16.msra.mxu0 0
        %5638 = vmatprep.subr.bf16.mxu0 0
        %5639 = vmatpush1.bf16.msra.mxu0 0
        %5640 = vmatprep.subr.bf16.mxu0 0
        %5641 = vmatpush1.bf16.msra.mxu0 0
        %5642 = vmatprep.subr.bf16.mxu0 0
        %5643 = vmatpush1.bf16.msra.mxu0 0
        %5644 = vmatprep.subr.bf16.mxu0 0
        %5645 = vmatpush1.bf16.msra.mxu0 0
        %5646 = vmatprep.subr.bf16.mxu0 0
        %5647 = vmatpush1.bf16.msra.mxu0 0
        %5648 = vmatprep.subr.bf16.mxu0 %v5509
        %5649 = vmatpush1.bf16.msra.mxu0 %v5506
        %5650 = vmatprep.subr.bf16.mxu0 0
        %5651 = vmatpush2.bf16.msra.mxu0 0
        %5652 = vmatprep.subr.bf16.mxu0 0
        %5653 = vmatpush2.bf16.msra.mxu0 0
        %5654 = vmatprep.subr.bf16.mxu0 0
        %5655 = vmatpush2.bf16.msra.mxu0 0
        %5656 = vmatprep.subr.bf16.mxu0 0
        %5657 = vmatpush2.bf16.msra.mxu0 0
        %5658 = vmatprep.subr.bf16.mxu0 0
        %5659 = vmatpush2.bf16.msra.mxu0 0
        %5660 = vmatprep.subr.bf16.mxu0 0
        %5661 = vmatpush2.bf16.msra.mxu0 0
        %5662 = vmatprep.subr.bf16.mxu0 0
        %5663 = vmatpush2.bf16.msra.mxu0 0
        %5664 = vmatprep.subr.bf16.mxu0 0
        %5665 = vmatpush2.bf16.msra.mxu0 0
        %5666 = vmatprep.mubr.bf16.mxu0 0
        %5667 = vmatmul.mubr.bf16.gmra.mxu0 %v5485
        %v5668 = vpop.f32.mrf.mxu0
        %v5669 = vadd.f32 0.0, %v5668
        %v5670 = vpop.f32.mrf.mxu0
        %v5671 = vadd.f32 0.0, %v5670
        %v5672 = vpop.f32.mrf.mxu0
        %v5673 = vpop.f32.mrf.mxu0
        %5674 = vdwg.mxu0
        %v5675 = vadd.f32 %v5449, %v5546
        %v5676 = vadd.f32 %v5450, %v5548
        %v5677 = vadd.f32 %v5451, %v5587
        %v5678 = vadd.f32 %v5452, %v5589
        %v5679 = vadd.f32 %v5453, %v5628
        %v5680 = vadd.f32 %v5454, %v5630
        %v5681 = vadd.f32 %v5455, %v5669
        %v5682 = vadd.f32 %v5456, %v5671
        %5683 = vrot.lane.b32.xlu0 %v256, 16
        %v5684 = vpop.permute.xlu0 %5683
        %5685 = vrot.lane.b32.xlu0 %v257, 16
        %v5686 = vpop.permute.xlu0 %5685
        %5687 = vrot.lane.b32.xlu0 %v258, 16
        %v5688 = vpop.permute.xlu0 %5687
        %5689 = vrot.lane.b32.xlu0 %v259, 16
        %v5690 = vpop.permute.xlu0 %5689
        %5691 = vrot.lane.b32.xlu0 %v268, 16
        %v5692 = vpop.permute.xlu0 %5691
        %5693 = vrot.lane.b32.xlu0 %v269, 16
        %v5694 = vpop.permute.xlu0 %5693
        %5695 = vrot.lane.b32.xlu0 %v270, 16
        %v5696 = vpop.permute.xlu0 %5695
        %5697 = vrot.lane.b32.xlu0 %v271, 16
        %v5698 = vpop.permute.xlu0 %5697
        %5699 = vrot.lane.b32.xlu0 %v272, 16
        %v5700 = vpop.permute.xlu0 %5699
        %vm5701 = vcmask 130048
        %v5702 = vsel %vm5701, %v5684, %v5686
        %v5703 = vsel %vm5701, %v5686, %v5688
        %v5704 = vsel %vm5701, %v5688, %v5690
        %v5705 = vsel %vm5701, %v5690, %v5692
        %v5706 = vsel %vm5701, %v5692, %v5694
        %v5707 = vsel %vm5701, %v5694, %v5696
        %v5708 = vsel %vm5701, %v5696, %v5698
        %v5709 = vsel %vm5701, %v5698, %v5700
        %v5711 = vsel %vm327, %v297, 0
        %v5714 = vsel %vm331, %v5702, 0
        %v5717 = vsel %vm331, %v5703, 0
        %v5720 = vsel %vm331, %v5704, 0
        %v5723 = vsel %vm331, %v5705, 0
        %v5726 = vsel %vm331, %v5706, 0
        %v5729 = vsel %vm331, %v5707, 0
        %v5732 = vsel %vm331, %v5708, 0
        %v5735 = vsel %vm331, %v5709, 0
        %5737 = vmatprep.subr.bf16.mxu0 0
        %5738 = vmatpush1.bf16.msra.mxu0 0
        %5739 = vmatprep.subr.bf16.mxu0 0
        %5740 = vmatpush1.bf16.msra.mxu0 0
        %5741 = vmatprep.subr.bf16.mxu0 0
        %5742 = vmatpush1.bf16.msra.mxu0 0
        %5743 = vmatprep.subr.bf16.mxu0 0
        %5744 = vmatpush1.bf16.msra.mxu0 0
        %5745 = vmatprep.subr.bf16.mxu0 0
        %5746 = vmatpush1.bf16.msra.mxu0 0
        %5747 = vmatprep.subr.bf16.mxu0 0
        %5748 = vmatpush1.bf16.msra.mxu0 0
        %5749 = vmatprep.subr.bf16.mxu0 0
        %5750 = vmatpush1.bf16.msra.mxu0 0
        %5751 = vmatprep.subr.bf16.mxu0 %v5717
        %5752 = vmatpush1.bf16.msra.mxu0 %v5714
        %5753 = vmatprep.subr.bf16.mxu0 0
        %5754 = vmatpush2.bf16.msra.mxu0 0
        %5755 = vmatprep.subr.bf16.mxu0 0
        %5756 = vmatpush2.bf16.msra.mxu0 0
        %5757 = vmatprep.subr.bf16.mxu0 0
        %5758 = vmatpush2.bf16.msra.mxu0 0
        %5759 = vmatprep.subr.bf16.mxu0 0
        %5760 = vmatpush2.bf16.msra.mxu0 0
        %5761 = vmatprep.subr.bf16.mxu0 0
        %5762 = vmatpush2.bf16.msra.mxu0 0
        %5763 = vmatprep.subr.bf16.mxu0 0
        %5764 = vmatpush2.bf16.msra.mxu0 0
        %5765 = vmatprep.subr.bf16.mxu0 0
        %5766 = vmatpush2.bf16.msra.mxu0 0
        %5767 = vmatprep.subr.bf16.mxu0 0
        %5768 = vmatpush2.bf16.msra.mxu0 0
        %5769 = vmatprep.mubr.bf16.mxu0 0
        %5770 = vmatmul.mubr.bf16.gmra.mxu0 %v5711
        %v5771 = vpop.f32.mrf.mxu0
        %v5772 = vadd.f32 0.0, %v5771
        %v5773 = vpop.f32.mrf.mxu0
        %v5774 = vadd.f32 0.0, %v5773
        %v5775 = vpop.f32.mrf.mxu0
        %v5776 = vpop.f32.mrf.mxu0
        %5777 = vdwg.mxu0
        %5778 = vmatprep.subr.bf16.mxu0 0
        %5779 = vmatpush1.bf16.msra.mxu0 0
        %5780 = vmatprep.subr.bf16.mxu0 0
        %5781 = vmatpush1.bf16.msra.mxu0 0
        %5782 = vmatprep.subr.bf16.mxu0 0
        %5783 = vmatpush1.bf16.msra.mxu0 0
        %5784 = vmatprep.subr.bf16.mxu0 0
        %5785 = vmatpush1.bf16.msra.mxu0 0
        %5786 = vmatprep.subr.bf16.mxu0 0
        %5787 = vmatpush1.bf16.msra.mxu0 0
        %5788 = vmatprep.subr.bf16.mxu0 0
        %5789 = vmatpush1.bf16.msra.mxu0 0
        %5790 = vmatprep.subr.bf16.mxu0 0
        %5791 = vmatpush1.bf16.msra.mxu0 0
        %5792 = vmatprep.subr.bf16.mxu0 %v5723
        %5793 = vmatpush1.bf16.msra.mxu0 %v5720
        %5794 = vmatprep.subr.bf16.mxu0 0
        %5795 = vmatpush2.bf16.msra.mxu0 0
        %5796 = vmatprep.subr.bf16.mxu0 0
        %5797 = vmatpush2.bf16.msra.mxu0 0
        %5798 = vmatprep.subr.bf16.mxu0 0
        %5799 = vmatpush2.bf16.msra.mxu0 0
        %5800 = vmatprep.subr.bf16.mxu0 0
        %5801 = vmatpush2.bf16.msra.mxu0 0
        %5802 = vmatprep.subr.bf16.mxu0 0
        %5803 = vmatpush2.bf16.msra.mxu0 0
        %5804 = vmatprep.subr.bf16.mxu0 0
        %5805 = vmatpush2.bf16.msra.mxu0 0
        %5806 = vmatprep.subr.bf16.mxu0 0
        %5807 = vmatpush2.bf16.msra.mxu0 0
        %5808 = vmatprep.subr.bf16.mxu0 0
        %5809 = vmatpush2.bf16.msra.mxu0 0
        %5810 = vmatprep.mubr.bf16.mxu0 0
        %5811 = vmatmul.mubr.bf16.gmra.mxu0 %v5711
        %v5812 = vpop.f32.mrf.mxu0
        %v5813 = vadd.f32 0.0, %v5812
        %v5814 = vpop.f32.mrf.mxu0
        %v5815 = vadd.f32 0.0, %v5814
        %v5816 = vpop.f32.mrf.mxu0
        %v5817 = vpop.f32.mrf.mxu0
        %5818 = vdwg.mxu0
        %5819 = vmatprep.subr.bf16.mxu0 0
        %5820 = vmatpush1.bf16.msra.mxu0 0
        %5821 = vmatprep.subr.bf16.mxu0 0
        %5822 = vmatpush1.bf16.msra.mxu0 0
        %5823 = vmatprep.subr.bf16.mxu0 0
        %5824 = vmatpush1.bf16.msra.mxu0 0
        %5825 = vmatprep.subr.bf16.mxu0 0
        %5826 = vmatpush1.bf16.msra.mxu0 0
        %5827 = vmatprep.subr.bf16.mxu0 0
        %5828 = vmatpush1.bf16.msra.mxu0 0
        %5829 = vmatprep.subr.bf16.mxu0 0
        %5830 = vmatpush1.bf16.msra.mxu0 0
        %5831 = vmatprep.subr.bf16.mxu0 0
        %5832 = vmatpush1.bf16.msra.mxu0 0
        %5833 = vmatprep.subr.bf16.mxu0 %v5729
        %5834 = vmatpush1.bf16.msra.mxu0 %v5726
        %5835 = vmatprep.subr.bf16.mxu0 0
        %5836 = vmatpush2.bf16.msra.mxu0 0
        %5837 = vmatprep.subr.bf16.mxu0 0
        %5838 = vmatpush2.bf16.msra.mxu0 0
        %5839 = vmatprep.subr.bf16.mxu0 0
        %5840 = vmatpush2.bf16.msra.mxu0 0
        %5841 = vmatprep.subr.bf16.mxu0 0
        %5842 = vmatpush2.bf16.msra.mxu0 0
        %5843 = vmatprep.subr.bf16.mxu0 0
        %5844 = vmatpush2.bf16.msra.mxu0 0
        %5845 = vmatprep.subr.bf16.mxu0 0
        %5846 = vmatpush2.bf16.msra.mxu0 0
        %5847 = vmatprep.subr.bf16.mxu0 0
        %5848 = vmatpush2.bf16.msra.mxu0 0
        %5849 = vmatprep.subr.bf16.mxu0 0
        %5850 = vmatpush2.bf16.msra.mxu0 0
        %5851 = vmatprep.mubr.bf16.mxu0 0
        %5852 = vmatmul.mubr.bf16.gmra.mxu0 %v5711
        %v5853 = vpop.f32.mrf.mxu0
        %v5854 = vadd.f32 0.0, %v5853
        %v5855 = vpop.f32.mrf.mxu0
        %v5856 = vadd.f32 0.0, %v5855
        %v5857 = vpop.f32.mrf.mxu0
        %v5858 = vpop.f32.mrf.mxu0
        %5859 = vdwg.mxu0
        %5860 = vmatprep.subr.bf16.mxu0 0
        %5861 = vmatpush1.bf16.msra.mxu0 0
        %5862 = vmatprep.subr.bf16.mxu0 0
        %5863 = vmatpush1.bf16.msra.mxu0 0
        %5864 = vmatprep.subr.bf16.mxu0 0
        %5865 = vmatpush1.bf16.msra.mxu0 0
        %5866 = vmatprep.subr.bf16.mxu0 0
        %5867 = vmatpush1.bf16.msra.mxu0 0
        %5868 = vmatprep.subr.bf16.mxu0 0
        %5869 = vmatpush1.bf16.msra.mxu0 0
        %5870 = vmatprep.subr.bf16.mxu0 0
        %5871 = vmatpush1.bf16.msra.mxu0 0
        %5872 = vmatprep.subr.bf16.mxu0 0
        %5873 = vmatpush1.bf16.msra.mxu0 0
        %5874 = vmatprep.subr.bf16.mxu0 %v5735
        %5875 = vmatpush1.bf16.msra.mxu0 %v5732
        %5876 = vmatprep.subr.bf16.mxu0 0
        %5877 = vmatpush2.bf16.msra.mxu0 0
        %5878 = vmatprep.subr.bf16.mxu0 0
        %5879 = vmatpush2.bf16.msra.mxu0 0
        %5880 = vmatprep.subr.bf16.mxu0 0
        %5881 = vmatpush2.bf16.msra.mxu0 0
        %5882 = vmatprep.subr.bf16.mxu0 0
        %5883 = vmatpush2.bf16.msra.mxu0 0
        %5884 = vmatprep.subr.bf16.mxu0 0
        %5885 = vmatpush2.bf16.msra.mxu0 0
        %5886 = vmatprep.subr.bf16.mxu0 0
        %5887 = vmatpush2.bf16.msra.mxu0 0
        %5888 = vmatprep.subr.bf16.mxu0 0
        %5889 = vmatpush2.bf16.msra.mxu0 0
        %5890 = vmatprep.subr.bf16.mxu0 0
        %5891 = vmatpush2.bf16.msra.mxu0 0
        %5892 = vmatprep.mubr.bf16.mxu0 0
        %5893 = vmatmul.mubr.bf16.gmra.mxu0 %v5711
        %v5894 = vpop.f32.mrf.mxu0
        %v5895 = vadd.f32 0.0, %v5894
        %v5896 = vpop.f32.mrf.mxu0
        %v5897 = vadd.f32 0.0, %v5896
        %v5898 = vpop.f32.mrf.mxu0
        %v5899 = vpop.f32.mrf.mxu0
        %5900 = vdwg.mxu0
        %v5901 = vadd.f32 %v5675, %v5772
        %v5902 = vadd.f32 %v5676, %v5774
        %v5903 = vadd.f32 %v5677, %v5813
        %v5904 = vadd.f32 %v5678, %v5815
        %v5905 = vadd.f32 %v5679, %v5854
        %v5906 = vadd.f32 %v5680, %v5856
        %v5907 = vadd.f32 %v5681, %v5895
        %v5908 = vadd.f32 %v5682, %v5897
        %5909 = vrot.lane.b32.xlu0 %v256, 14
        %v5910 = vpop.permute.xlu0 %5909
        %5911 = vrot.lane.b32.xlu0 %v257, 14
        %v5912 = vpop.permute.xlu0 %5911
        %5913 = vrot.lane.b32.xlu0 %v258, 14
        %v5914 = vpop.permute.xlu0 %5913
        %5915 = vrot.lane.b32.xlu0 %v259, 14
        %v5916 = vpop.permute.xlu0 %5915
        %5917 = vrot.lane.b32.xlu0 %v268, 14
        %v5918 = vpop.permute.xlu0 %5917
        %5919 = vrot.lane.b32.xlu0 %v269, 14
        %v5920 = vpop.permute.xlu0 %5919
        %5921 = vrot.lane.b32.xlu0 %v270, 14
        %v5922 = vpop.permute.xlu0 %5921
        %5923 = vrot.lane.b32.xlu0 %v271, 14
        %v5924 = vpop.permute.xlu0 %5923
        %5925 = vrot.lane.b32.xlu0 %v272, 14
        %v5926 = vpop.permute.xlu0 %5925
        %vm5927 = vcmask 113664
        %v5928 = vsel %vm5927, %v5910, %v5912
        %v5929 = vsel %vm5927, %v5912, %v5914
        %v5930 = vsel %vm5927, %v5914, %v5916
        %v5931 = vsel %vm5927, %v5916, %v5918
        %v5932 = vsel %vm5927, %v5918, %v5920
        %v5933 = vsel %vm5927, %v5920, %v5922
        %v5934 = vsel %vm5927, %v5922, %v5924
        %v5935 = vsel %vm5927, %v5924, %v5926
        %v5937 = vsel %vm327, %v298, 0
        %v5940 = vsel %vm331, %v5928, 0
        %v5943 = vsel %vm331, %v5929, 0
        %v5946 = vsel %vm331, %v5930, 0
        %v5949 = vsel %vm331, %v5931, 0
        %v5952 = vsel %vm331, %v5932, 0
        %v5955 = vsel %vm331, %v5933, 0
        %v5958 = vsel %vm331, %v5934, 0
        %v5961 = vsel %vm331, %v5935, 0
        %5963 = vmatprep.subr.bf16.mxu0 0
        %5964 = vmatpush1.bf16.msra.mxu0 0
        %5965 = vmatprep.subr.bf16.mxu0 0
        %5966 = vmatpush1.bf16.msra.mxu0 0
        %5967 = vmatprep.subr.bf16.mxu0 0
        %5968 = vmatpush1.bf16.msra.mxu0 0
        %5969 = vmatprep.subr.bf16.mxu0 0
        %5970 = vmatpush1.bf16.msra.mxu0 0
        %5971 = vmatprep.subr.bf16.mxu0 0
        %5972 = vmatpush1.bf16.msra.mxu0 0
        %5973 = vmatprep.subr.bf16.mxu0 0
        %5974 = vmatpush1.bf16.msra.mxu0 0
        %5975 = vmatprep.subr.bf16.mxu0 0
        %5976 = vmatpush1.bf16.msra.mxu0 0
        %5977 = vmatprep.subr.bf16.mxu0 %v5943
        %5978 = vmatpush1.bf16.msra.mxu0 %v5940
        %5979 = vmatprep.subr.bf16.mxu0 0
        %5980 = vmatpush2.bf16.msra.mxu0 0
        %5981 = vmatprep.subr.bf16.mxu0 0
        %5982 = vmatpush2.bf16.msra.mxu0 0
        %5983 = vmatprep.subr.bf16.mxu0 0
        %5984 = vmatpush2.bf16.msra.mxu0 0
        %5985 = vmatprep.subr.bf16.mxu0 0
        %5986 = vmatpush2.bf16.msra.mxu0 0
        %5987 = vmatprep.subr.bf16.mxu0 0
        %5988 = vmatpush2.bf16.msra.mxu0 0
        %5989 = vmatprep.subr.bf16.mxu0 0
        %5990 = vmatpush2.bf16.msra.mxu0 0
        %5991 = vmatprep.subr.bf16.mxu0 0
        %5992 = vmatpush2.bf16.msra.mxu0 0
        %5993 = vmatprep.subr.bf16.mxu0 0
        %5994 = vmatpush2.bf16.msra.mxu0 0
        %5995 = vmatprep.mubr.bf16.mxu0 0
        %5996 = vmatmul.mubr.bf16.gmra.mxu0 %v5937
        %v5997 = vpop.f32.mrf.mxu0
        %v5998 = vadd.f32 0.0, %v5997
        %v5999 = vpop.f32.mrf.mxu0
        %v6000 = vadd.f32 0.0, %v5999
        %v6001 = vpop.f32.mrf.mxu0
        %v6002 = vpop.f32.mrf.mxu0
        %6003 = vdwg.mxu0
        %6004 = vmatprep.subr.bf16.mxu0 0
        %6005 = vmatpush1.bf16.msra.mxu0 0
        %6006 = vmatprep.subr.bf16.mxu0 0
        %6007 = vmatpush1.bf16.msra.mxu0 0
        %6008 = vmatprep.subr.bf16.mxu0 0
        %6009 = vmatpush1.bf16.msra.mxu0 0
        %6010 = vmatprep.subr.bf16.mxu0 0
        %6011 = vmatpush1.bf16.msra.mxu0 0
        %6012 = vmatprep.subr.bf16.mxu0 0
        %6013 = vmatpush1.bf16.msra.mxu0 0
        %6014 = vmatprep.subr.bf16.mxu0 0
        %6015 = vmatpush1.bf16.msra.mxu0 0
        %6016 = vmatprep.subr.bf16.mxu0 0
        %6017 = vmatpush1.bf16.msra.mxu0 0
        %6018 = vmatprep.subr.bf16.mxu0 %v5949
        %6019 = vmatpush1.bf16.msra.mxu0 %v5946
        %6020 = vmatprep.subr.bf16.mxu0 0
        %6021 = vmatpush2.bf16.msra.mxu0 0
        %6022 = vmatprep.subr.bf16.mxu0 0
        %6023 = vmatpush2.bf16.msra.mxu0 0
        %6024 = vmatprep.subr.bf16.mxu0 0
        %6025 = vmatpush2.bf16.msra.mxu0 0
        %6026 = vmatprep.subr.bf16.mxu0 0
        %6027 = vmatpush2.bf16.msra.mxu0 0
        %6028 = vmatprep.subr.bf16.mxu0 0
        %6029 = vmatpush2.bf16.msra.mxu0 0
        %6030 = vmatprep.subr.bf16.mxu0 0
        %6031 = vmatpush2.bf16.msra.mxu0 0
        %6032 = vmatprep.subr.bf16.mxu0 0
        %6033 = vmatpush2.bf16.msra.mxu0 0
        %6034 = vmatprep.subr.bf16.mxu0 0
        %6035 = vmatpush2.bf16.msra.mxu0 0
        %6036 = vmatprep.mubr.bf16.mxu0 0
        %6037 = vmatmul.mubr.bf16.gmra.mxu0 %v5937
        %v6038 = vpop.f32.mrf.mxu0
        %v6039 = vadd.f32 0.0, %v6038
        %v6040 = vpop.f32.mrf.mxu0
        %v6041 = vadd.f32 0.0, %v6040
        %v6042 = vpop.f32.mrf.mxu0
        %v6043 = vpop.f32.mrf.mxu0
        %6044 = vdwg.mxu0
        %6045 = vmatprep.subr.bf16.mxu0 0
        %6046 = vmatpush1.bf16.msra.mxu0 0
        %6047 = vmatprep.subr.bf16.mxu0 0
        %6048 = vmatpush1.bf16.msra.mxu0 0
        %6049 = vmatprep.subr.bf16.mxu0 0
        %6050 = vmatpush1.bf16.msra.mxu0 0
        %6051 = vmatprep.subr.bf16.mxu0 0
        %6052 = vmatpush1.bf16.msra.mxu0 0
        %6053 = vmatprep.subr.bf16.mxu0 0
        %6054 = vmatpush1.bf16.msra.mxu0 0
        %6055 = vmatprep.subr.bf16.mxu0 0
        %6056 = vmatpush1.bf16.msra.mxu0 0
        %6057 = vmatprep.subr.bf16.mxu0 0
        %6058 = vmatpush1.bf16.msra.mxu0 0
        %6059 = vmatprep.subr.bf16.mxu0 %v5955
        %6060 = vmatpush1.bf16.msra.mxu0 %v5952
        %6061 = vmatprep.subr.bf16.mxu0 0
        %6062 = vmatpush2.bf16.msra.mxu0 0
        %6063 = vmatprep.subr.bf16.mxu0 0
        %6064 = vmatpush2.bf16.msra.mxu0 0
        %6065 = vmatprep.subr.bf16.mxu0 0
        %6066 = vmatpush2.bf16.msra.mxu0 0
        %6067 = vmatprep.subr.bf16.mxu0 0
        %6068 = vmatpush2.bf16.msra.mxu0 0
        %6069 = vmatprep.subr.bf16.mxu0 0
        %6070 = vmatpush2.bf16.msra.mxu0 0
        %6071 = vmatprep.subr.bf16.mxu0 0
        %6072 = vmatpush2.bf16.msra.mxu0 0
        %6073 = vmatprep.subr.bf16.mxu0 0
        %6074 = vmatpush2.bf16.msra.mxu0 0
        %6075 = vmatprep.subr.bf16.mxu0 0
        %6076 = vmatpush2.bf16.msra.mxu0 0
        %6077 = vmatprep.mubr.bf16.mxu0 0
        %6078 = vmatmul.mubr.bf16.gmra.mxu0 %v5937
        %v6079 = vpop.f32.mrf.mxu0
        %v6080 = vadd.f32 0.0, %v6079
        %v6081 = vpop.f32.mrf.mxu0
        %v6082 = vadd.f32 0.0, %v6081
        %v6083 = vpop.f32.mrf.mxu0
        %v6084 = vpop.f32.mrf.mxu0
        %6085 = vdwg.mxu0
        %6086 = vmatprep.subr.bf16.mxu0 0
        %6087 = vmatpush1.bf16.msra.mxu0 0
        %6088 = vmatprep.subr.bf16.mxu0 0
        %6089 = vmatpush1.bf16.msra.mxu0 0
        %6090 = vmatprep.subr.bf16.mxu0 0
        %6091 = vmatpush1.bf16.msra.mxu0 0
        %6092 = vmatprep.subr.bf16.mxu0 0
        %6093 = vmatpush1.bf16.msra.mxu0 0
        %6094 = vmatprep.subr.bf16.mxu0 0
        %6095 = vmatpush1.bf16.msra.mxu0 0
        %6096 = vmatprep.subr.bf16.mxu0 0
        %6097 = vmatpush1.bf16.msra.mxu0 0
        %6098 = vmatprep.subr.bf16.mxu0 0
        %6099 = vmatpush1.bf16.msra.mxu0 0
        %6100 = vmatprep.subr.bf16.mxu0 %v5961
        %6101 = vmatpush1.bf16.msra.mxu0 %v5958
        %6102 = vmatprep.subr.bf16.mxu0 0
        %6103 = vmatpush2.bf16.msra.mxu0 0
        %6104 = vmatprep.subr.bf16.mxu0 0
        %6105 = vmatpush2.bf16.msra.mxu0 0
        %6106 = vmatprep.subr.bf16.mxu0 0
        %6107 = vmatpush2.bf16.msra.mxu0 0
        %6108 = vmatprep.subr.bf16.mxu0 0
        %6109 = vmatpush2.bf16.msra.mxu0 0
        %6110 = vmatprep.subr.bf16.mxu0 0
        %6111 = vmatpush2.bf16.msra.mxu0 0
        %6112 = vmatprep.subr.bf16.mxu0 0
        %6113 = vmatpush2.bf16.msra.mxu0 0
        %6114 = vmatprep.subr.bf16.mxu0 0
        %6115 = vmatpush2.bf16.msra.mxu0 0
        %6116 = vmatprep.subr.bf16.mxu0 0
        %6117 = vmatpush2.bf16.msra.mxu0 0
        %6118 = vmatprep.mubr.bf16.mxu0 0
        %6119 = vmatmul.mubr.bf16.gmra.mxu0 %v5937
        %v6120 = vpop.f32.mrf.mxu0
        %v6121 = vadd.f32 0.0, %v6120
        %v6122 = vpop.f32.mrf.mxu0
        %v6123 = vadd.f32 0.0, %v6122
        %v6124 = vpop.f32.mrf.mxu0
        %v6125 = vpop.f32.mrf.mxu0
        %6126 = vdwg.mxu0
        %v6127 = vadd.f32 %v5901, %v5998
        %v6128 = vadd.f32 %v5902, %v6000
        %v6129 = vadd.f32 %v5903, %v6039
        %v6130 = vadd.f32 %v5904, %v6041
        %v6131 = vadd.f32 %v5905, %v6080
        %v6132 = vadd.f32 %v5906, %v6082
        %v6133 = vadd.f32 %v5907, %v6121
        %v6134 = vadd.f32 %v5908, %v6123
        %6135 = vrot.lane.b32.xlu0 %v256, 12
        %v6136 = vpop.permute.xlu0 %6135
        %6137 = vrot.lane.b32.xlu0 %v257, 12
        %v6138 = vpop.permute.xlu0 %6137
        %6139 = vrot.lane.b32.xlu0 %v258, 12
        %v6140 = vpop.permute.xlu0 %6139
        %6141 = vrot.lane.b32.xlu0 %v259, 12
        %v6142 = vpop.permute.xlu0 %6141
        %6143 = vrot.lane.b32.xlu0 %v268, 12
        %v6144 = vpop.permute.xlu0 %6143
        %6145 = vrot.lane.b32.xlu0 %v269, 12
        %v6146 = vpop.permute.xlu0 %6145
        %6147 = vrot.lane.b32.xlu0 %v270, 12
        %v6148 = vpop.permute.xlu0 %6147
        %6149 = vrot.lane.b32.xlu0 %v271, 12
        %v6150 = vpop.permute.xlu0 %6149
        %6151 = vrot.lane.b32.xlu0 %v272, 12
        %v6152 = vpop.permute.xlu0 %6151
        %vm6153 = vcmask 97280
        %v6154 = vsel %vm6153, %v6136, %v6138
        %v6155 = vsel %vm6153, %v6138, %v6140
        %v6156 = vsel %vm6153, %v6140, %v6142
        %v6157 = vsel %vm6153, %v6142, %v6144
        %v6158 = vsel %vm6153, %v6144, %v6146
        %v6159 = vsel %vm6153, %v6146, %v6148
        %v6160 = vsel %vm6153, %v6148, %v6150
        %v6161 = vsel %vm6153, %v6150, %v6152
        %v6163 = vsel %vm327, %v299, 0
        %v6166 = vsel %vm331, %v6154, 0
        %v6169 = vsel %vm331, %v6155, 0
        %v6172 = vsel %vm331, %v6156, 0
        %v6175 = vsel %vm331, %v6157, 0
        %v6178 = vsel %vm331, %v6158, 0
        %v6181 = vsel %vm331, %v6159, 0
        %v6184 = vsel %vm331, %v6160, 0
        %v6187 = vsel %vm331, %v6161, 0
        %6189 = vmatprep.subr.bf16.mxu0 0
        %6190 = vmatpush1.bf16.msra.mxu0 0
        %6191 = vmatprep.subr.bf16.mxu0 0
        %6192 = vmatpush1.bf16.msra.mxu0 0
        %6193 = vmatprep.subr.bf16.mxu0 0
        %6194 = vmatpush1.bf16.msra.mxu0 0
        %6195 = vmatprep.subr.bf16.mxu0 0
        %6196 = vmatpush1.bf16.msra.mxu0 0
        %6197 = vmatprep.subr.bf16.mxu0 0
        %6198 = vmatpush1.bf16.msra.mxu0 0
        %6199 = vmatprep.subr.bf16.mxu0 0
        %6200 = vmatpush1.bf16.msra.mxu0 0
        %6201 = vmatprep.subr.bf16.mxu0 0
        %6202 = vmatpush1.bf16.msra.mxu0 0
        %6203 = vmatprep.subr.bf16.mxu0 %v6169
        %6204 = vmatpush1.bf16.msra.mxu0 %v6166
        %6205 = vmatprep.subr.bf16.mxu0 0
        %6206 = vmatpush2.bf16.msra.mxu0 0
        %6207 = vmatprep.subr.bf16.mxu0 0
        %6208 = vmatpush2.bf16.msra.mxu0 0
        %6209 = vmatprep.subr.bf16.mxu0 0
        %6210 = vmatpush2.bf16.msra.mxu0 0
        %6211 = vmatprep.subr.bf16.mxu0 0
        %6212 = vmatpush2.bf16.msra.mxu0 0
        %6213 = vmatprep.subr.bf16.mxu0 0
        %6214 = vmatpush2.bf16.msra.mxu0 0
        %6215 = vmatprep.subr.bf16.mxu0 0
        %6216 = vmatpush2.bf16.msra.mxu0 0
        %6217 = vmatprep.subr.bf16.mxu0 0
        %6218 = vmatpush2.bf16.msra.mxu0 0
        %6219 = vmatprep.subr.bf16.mxu0 0
        %6220 = vmatpush2.bf16.msra.mxu0 0
        %6221 = vmatprep.mubr.bf16.mxu0 0
        %6222 = vmatmul.mubr.bf16.gmra.mxu0 %v6163
        %v6223 = vpop.f32.mrf.mxu0
        %v6224 = vadd.f32 0.0, %v6223
        %v6225 = vpop.f32.mrf.mxu0
        %v6226 = vadd.f32 0.0, %v6225
        %v6227 = vpop.f32.mrf.mxu0
        %v6228 = vpop.f32.mrf.mxu0
        %6229 = vdwg.mxu0
        %6230 = vmatprep.subr.bf16.mxu0 0
        %6231 = vmatpush1.bf16.msra.mxu0 0
        %6232 = vmatprep.subr.bf16.mxu0 0
        %6233 = vmatpush1.bf16.msra.mxu0 0
        %6234 = vmatprep.subr.bf16.mxu0 0
        %6235 = vmatpush1.bf16.msra.mxu0 0
        %6236 = vmatprep.subr.bf16.mxu0 0
        %6237 = vmatpush1.bf16.msra.mxu0 0
        %6238 = vmatprep.subr.bf16.mxu0 0
        %6239 = vmatpush1.bf16.msra.mxu0 0
        %6240 = vmatprep.subr.bf16.mxu0 0
        %6241 = vmatpush1.bf16.msra.mxu0 0
        %6242 = vmatprep.subr.bf16.mxu0 0
        %6243 = vmatpush1.bf16.msra.mxu0 0
        %6244 = vmatprep.subr.bf16.mxu0 %v6175
        %6245 = vmatpush1.bf16.msra.mxu0 %v6172
        %6246 = vmatprep.subr.bf16.mxu0 0
        %6247 = vmatpush2.bf16.msra.mxu0 0
        %6248 = vmatprep.subr.bf16.mxu0 0
        %6249 = vmatpush2.bf16.msra.mxu0 0
        %6250 = vmatprep.subr.bf16.mxu0 0
        %6251 = vmatpush2.bf16.msra.mxu0 0
        %6252 = vmatprep.subr.bf16.mxu0 0
        %6253 = vmatpush2.bf16.msra.mxu0 0
        %6254 = vmatprep.subr.bf16.mxu0 0
        %6255 = vmatpush2.bf16.msra.mxu0 0
        %6256 = vmatprep.subr.bf16.mxu0 0
        %6257 = vmatpush2.bf16.msra.mxu0 0
        %6258 = vmatprep.subr.bf16.mxu0 0
        %6259 = vmatpush2.bf16.msra.mxu0 0
        %6260 = vmatprep.subr.bf16.mxu0 0
        %6261 = vmatpush2.bf16.msra.mxu0 0
        %6262 = vmatprep.mubr.bf16.mxu0 0
        %6263 = vmatmul.mubr.bf16.gmra.mxu0 %v6163
        %v6264 = vpop.f32.mrf.mxu0
        %v6265 = vadd.f32 0.0, %v6264
        %v6266 = vpop.f32.mrf.mxu0
        %v6267 = vadd.f32 0.0, %v6266
        %v6268 = vpop.f32.mrf.mxu0
        %v6269 = vpop.f32.mrf.mxu0
        %6270 = vdwg.mxu0
        %6271 = vmatprep.subr.bf16.mxu0 0
        %6272 = vmatpush1.bf16.msra.mxu0 0
        %6273 = vmatprep.subr.bf16.mxu0 0
        %6274 = vmatpush1.bf16.msra.mxu0 0
        %6275 = vmatprep.subr.bf16.mxu0 0
        %6276 = vmatpush1.bf16.msra.mxu0 0
        %6277 = vmatprep.subr.bf16.mxu0 0
        %6278 = vmatpush1.bf16.msra.mxu0 0
        %6279 = vmatprep.subr.bf16.mxu0 0
        %6280 = vmatpush1.bf16.msra.mxu0 0
        %6281 = vmatprep.subr.bf16.mxu0 0
        %6282 = vmatpush1.bf16.msra.mxu0 0
        %6283 = vmatprep.subr.bf16.mxu0 0
        %6284 = vmatpush1.bf16.msra.mxu0 0
        %6285 = vmatprep.subr.bf16.mxu0 %v6181
        %6286 = vmatpush1.bf16.msra.mxu0 %v6178
        %6287 = vmatprep.subr.bf16.mxu0 0
        %6288 = vmatpush2.bf16.msra.mxu0 0
        %6289 = vmatprep.subr.bf16.mxu0 0
        %6290 = vmatpush2.bf16.msra.mxu0 0
        %6291 = vmatprep.subr.bf16.mxu0 0
        %6292 = vmatpush2.bf16.msra.mxu0 0
        %6293 = vmatprep.subr.bf16.mxu0 0
        %6294 = vmatpush2.bf16.msra.mxu0 0
        %6295 = vmatprep.subr.bf16.mxu0 0
        %6296 = vmatpush2.bf16.msra.mxu0 0
        %6297 = vmatprep.subr.bf16.mxu0 0
        %6298 = vmatpush2.bf16.msra.mxu0 0
        %6299 = vmatprep.subr.bf16.mxu0 0
        %6300 = vmatpush2.bf16.msra.mxu0 0
        %6301 = vmatprep.subr.bf16.mxu0 0
        %6302 = vmatpush2.bf16.msra.mxu0 0
        %6303 = vmatprep.mubr.bf16.mxu0 0
        %6304 = vmatmul.mubr.bf16.gmra.mxu0 %v6163
        %v6305 = vpop.f32.mrf.mxu0
        %v6306 = vadd.f32 0.0, %v6305
        %v6307 = vpop.f32.mrf.mxu0
        %v6308 = vadd.f32 0.0, %v6307
        %v6309 = vpop.f32.mrf.mxu0
        %v6310 = vpop.f32.mrf.mxu0
        %6311 = vdwg.mxu0
        %6312 = vmatprep.subr.bf16.mxu0 0
        %6313 = vmatpush1.bf16.msra.mxu0 0
        %6314 = vmatprep.subr.bf16.mxu0 0
        %6315 = vmatpush1.bf16.msra.mxu0 0
        %6316 = vmatprep.subr.bf16.mxu0 0
        %6317 = vmatpush1.bf16.msra.mxu0 0
        %6318 = vmatprep.subr.bf16.mxu0 0
        %6319 = vmatpush1.bf16.msra.mxu0 0
        %6320 = vmatprep.subr.bf16.mxu0 0
        %6321 = vmatpush1.bf16.msra.mxu0 0
        %6322 = vmatprep.subr.bf16.mxu0 0
        %6323 = vmatpush1.bf16.msra.mxu0 0
        %6324 = vmatprep.subr.bf16.mxu0 0
        %6325 = vmatpush1.bf16.msra.mxu0 0
        %6326 = vmatprep.subr.bf16.mxu0 %v6187
        %6327 = vmatpush1.bf16.msra.mxu0 %v6184
        %6328 = vmatprep.subr.bf16.mxu0 0
        %6329 = vmatpush2.bf16.msra.mxu0 0
        %6330 = vmatprep.subr.bf16.mxu0 0
        %6331 = vmatpush2.bf16.msra.mxu0 0
        %6332 = vmatprep.subr.bf16.mxu0 0
        %6333 = vmatpush2.bf16.msra.mxu0 0
        %6334 = vmatprep.subr.bf16.mxu0 0
        %6335 = vmatpush2.bf16.msra.mxu0 0
        %6336 = vmatprep.subr.bf16.mxu0 0
        %6337 = vmatpush2.bf16.msra.mxu0 0
        %6338 = vmatprep.subr.bf16.mxu0 0
        %6339 = vmatpush2.bf16.msra.mxu0 0
        %6340 = vmatprep.subr.bf16.mxu0 0
        %6341 = vmatpush2.bf16.msra.mxu0 0
        %6342 = vmatprep.subr.bf16.mxu0 0
        %6343 = vmatpush2.bf16.msra.mxu0 0
        %6344 = vmatprep.mubr.bf16.mxu0 0
        %6345 = vmatmul.mubr.bf16.gmra.mxu0 %v6163
        %v6346 = vpop.f32.mrf.mxu0
        %v6347 = vadd.f32 0.0, %v6346
        %v6348 = vpop.f32.mrf.mxu0
        %v6349 = vadd.f32 0.0, %v6348
        %v6350 = vpop.f32.mrf.mxu0
        %v6351 = vpop.f32.mrf.mxu0
        %6352 = vdwg.mxu0
        %v6353 = vadd.f32 %v6127, %v6224
        %v6354 = vadd.f32 %v6128, %v6226
        %v6355 = vadd.f32 %v6129, %v6265
        %v6356 = vadd.f32 %v6130, %v6267
        %v6357 = vadd.f32 %v6131, %v6306
        %v6358 = vadd.f32 %v6132, %v6308
        %v6359 = vadd.f32 %v6133, %v6347
        %v6360 = vadd.f32 %v6134, %v6349
        %6361 = vst [vmem:[%s227] sm:$0xff] %v6353
        %6362 = vst [vmem:[%s227 + $0x8] sm:$0xff] %v6354
        %6363 = vst [vmem:[%s227 + $0x10] sm:$0xff] %v6355
        %6364 = vst [vmem:[%s227 + $0x18] sm:$0xff] %v6356
        %6365 = vst [vmem:[%s227 + $0x20] sm:$0xff] %v6357
        %6366 = vst [vmem:[%s227 + $0x28] sm:$0xff] %v6358
        %6367 = vst [vmem:[%s227 + $0x30] sm:$0xff] %v6359
        %6368 = vst [vmem:[%s227 + $0x38] sm:$0xff] %v6360
        %s6369 = sand.u32 %s106, 1
        %s6370 = scalar_lea.sflag [#allocation4], %s6369
        %s6371 = sand.u32 %s106, 1
        %s6372 = smul.addr %s6371, 64
        %s6373 = scalar_lea.vmem [#allocation7], %s6372
        // Predicated region
        $region41: #{tpu_custom_call.1} parent=31 // pred_check
          %p6374 = pneg %p116
        $region42: #{tpu_custom_call.1} parent=31 // pred_check_branch
          %6376 = sbr.rel (%p6374) target = $region44
        $region43: #{tpu_custom_call.1} parent=31 // pred_region
          %s6377 = smul.u32 8, %s23
          %s6379 = ssub.s32 1024, 1024
          %6380 = vsyncadd %s6370, %s6379
          %s6381 = smul.addr %s6377, 128
          %s6382 = scalar_lea.hbm %s3, %s6381
          %s6384 = sshll.u32 %s6373, 4
          %s6385 = int_to_ptr.vmem [resolvable:$true] %s6384
          %6387 = dma.vmem_to_hbm [thread:$0]  %s6385, 1024, %s6382, %s6370
        $region44: #{tpu_custom_call.1} parent=31 // pred_fallthru
          _
      $region32: #{tpu_custom_call.1} parent=5 // pred_fallthru
        _
      %p6388 = scmp.le.s32.totalorder 2, %s18
      // Predicated region
      $region45: #{tpu_custom_call.1} parent=5 // pred_check
        %p6389 = pneg %p6388
      $region46: #{tpu_custom_call.1} parent=5 // pred_check_branch
        %6391 = sbr.rel (%p6389) target = $region48
      $region47: #{tpu_custom_call.1} parent=5 // pred_region
        %s6392 = ssub.s32 %s18, 2
        // Predicated region
        $region49: #{tpu_custom_call.1} parent=47 // pred_check
          %p6393 = pneg %p122
        $region50: #{tpu_custom_call.1} parent=47 // pred_check_branch
          %6395 = sbr.rel (%p6393) target = $region52
        $region51: #{tpu_custom_call.1} parent=47 // pred_region
          %s6396 = sand.u32 %s107, 1
          %s6397 = scalar_lea.sflag [#allocation4], %s6396
          %s6398 = sand.u32 %s107, 1
          %s6399 = smul.addr %s6398, 64
          %s6400 = scalar_lea.vmem [#allocation7], %s6399
          %6401 = dma.done %s6397, 1024
        $region52: #{tpu_custom_call.1} parent=47 // pred_fallthru
          _
      $region48: #{tpu_custom_call.1} parent=5 // pred_fallthru
        _
    $region6: #{tpu_custom_call.1} parent=1 // loop_footer
      %s22 = sadd.s32 1, %s18
    $region7: #{tpu_custom_call.1} parent=1 // loop_footer_branch
      %17 = sbr.rel target = $region3
    $region8: #{tpu_custom_call.1} parent=1 // loop_exit
      _
    %6402 = vsyncpa [#allocation3], 1
    %s6403 = scalar_lea.sflag [#allocation3], 1
    %6404 = vsyncpa %s6403, 1
    %6405 = vsyncpa [#allocation6], 1
    %s6406 = scalar_lea.sflag [#allocation6], 1
    %6407 = vsyncpa %s6406, 1
    %6408 = vsyncpa [#allocation4], 1
    %s6409 = scalar_lea.sflag [#allocation4], 1
    %6410 = vsyncpa %s6409, 1

</llo_original>
